<compile_context>
chip_gen: v7x
topology: tpu7x:2x2x1
jax: 0.10.0
libtpu: 0.0.40
codegen_flags: <defaults>
</compile_context>

<pallas_src>
import numpy as np
import jax
import jax.numpy as jnp
from jax.experimental import pallas as pl
from jax.experimental.pallas import tpu as pltpu

EPS = 1e-5  # PyTorch BatchNorm1d default eps


# ---------------------------------------------------------------- helpers ---

def _full_spec(shape):
    nd = len(shape)
    return pl.BlockSpec(shape, lambda *_: (0,) * nd)


def _convt_into(y_ref, x, w_ref, n, lc):
    """ConvTranspose1d (no bias) in position-major row layout.

    x     : (l_in*n, c_in)  value; row = li*n + sample; channels on lanes.
    w_ref : (K, c_in, c_out) bf16 ref (compact weights, tap-major).
    y_ref : (l_out*n, c_out) f32 ref; row = lo*n + sample.
    """
    l_in, l_out = lc['l_in'], lc['l_out']
    c_out = lc['c_out']
    ksz, stride, pad = lc['k'], lc['stride'], lc['pad']

    xb = x.astype(jnp.bfloat16)
    # One compact matmul per kernel tap (f32 accumulation on the MXU).
    ps = [jnp.dot(xb, w_ref[k], preferred_element_type=jnp.float32)
          for k in range(ksz)]                       # each (l_in*n, c_out) f32

    if stride == 1:
        # Every tap shifts a whole contiguous row block -> K block RMWs.
        y_ref[...] = jnp.zeros((l_out * n, c_out), jnp.float32)
        for k in range(ksz):
            li0 = max(0, pad - k)
            li1 = min(l_in, l_out + pad - k)
            if li1 > li0:
                lo0 = li0 + k - pad
                cnt = li1 - li0
                y_ref[lo0 * n:(lo0 + cnt) * n, :] += ps[k][li0 * n:li1 * n, :]
    else:
        # Gather form: each output position block is written exactly once
        # from the (<= 2) contributing taps — contiguous rows only.
        for lo in range(l_out):
            acc = None
            for k in range(ksz):
                t = lo + pad - k
                if t % stride:
                    continue
                li = t // stride
                if 0 <= li < l_in:
                    c = ps[k][li * n:(li + 1) * n, :]
                    acc = c if acc is None else acc + c
            if acc is None:                          # never hit for this net
                acc = jnp.zeros((n, c_out), jnp.float32)
            y_ref[lo * n:(lo + 1) * n, :] = acc


def _bn_relu(y, g_ref, b_ref, count):
    """Train-mode BatchNorm1d + ReLU; channels on lanes, stats over all rows."""
    inv = 1.0 / float(count)
    mean = jnp.sum(y, axis=0, keepdims=True) * inv
    d = y - mean
    var = jnp.sum(d * d, axis=0, keepdims=True) * inv      # biased (train mode)
    scale = g_ref[...] * jax.lax.rsqrt(var + EPS)           # gamma / std
    shift = b_ref[...] - mean * scale                       # beta - mean*scale
    return jnp.maximum(y * scale + shift, 0.0)               # one full-slab pass


# ---------------------------------------------------------------- kernel ----

def _make_kernel(cfg, n):
    def kernel(*refs):
        it = iter(refs)
        x_ref = next(it)
        layer_refs = []
        for lc in cfg:
            if lc['last']:
                layer_refs.append((next(it), next(it)))            # w, bias
            else:
                layer_refs.append((next(it), next(it), next(it)))  # w, gamma, beta
        o_ref = next(it)
        scratch_refs = list(it)

        x = x_ref[...]                                  # (n, c_in0) f32
        si = 0
        for lc, lr in zip(cfg, layer_refs):
            if lc['last']:
                w_ref, bias_ref = lr
                _convt_into(o_ref, x, w_ref, n, lc)
                o_ref[...] = jnp.tanh(o_ref[...] + bias_ref[...])
            else:
                w_ref, g_ref, b_ref = lr
                y_ref = scratch_refs[si]; si += 1
                _convt_into(y_ref, x, w_ref, n, lc)     # conv bias cancelled by BN
                x = _bn_relu(y_ref[...], g_ref, b_ref, n * lc['l_out'])
    return kernel


def generator_forward(z, params):
    cfg = params['cfg']
    layers = params['layers']
    n = z.shape[0]
    # z: (N, C_in0, 1) -> rows = samples (L_in = 1), channels on lanes.
    x0 = z[:, :, 0].astype(jnp.float32)

    args = [x0]
    for lc, lp in zip(cfg, layers):
        if lc['last']:
            args += [lp['w'], lp['bias']]
        else:
            args += [lp['w'], lp['gamma'], lp['beta']]

    l_last = cfg[-1]['l_out']
    scratch = [pltpu.VMEM((lc['l_out'] * n, lc['c_out']), jnp.float32)
               for lc in cfg if not lc['last']]

    out = pl.pallas_call(
        _make_kernel(cfg, n),
        out_shape=jax.ShapeDtypeStruct((l_last * n, 1), jnp.float32),
        in_specs=[_full_spec(a.shape) for a in args],
        out_specs=_full_spec((l_last * n, 1)),
        scratch_shapes=scratch,
    )(*args)

    # kernel rows are position-major / sample-minor: row = lo*n + sample
    return out.reshape(l_last, n).T.reshape(n, 1, l_last)


# ------------------------------------------------------- parameter setup ----

def _quantize_bf16(x):
    """Round f32 -> bf16 -> f32 (kernel and reference use identical weights)."""
    return np.asarray(jnp.asarray(x).astype(jnp.bfloat16).astype(jnp.float32))


def init_params(key, z_dim=20, data_size=32):
    spec = [
        dict(c_in=z_dim,         c_out=data_size * 8, k=4, stride=1, pad=0),
        dict(c_in=data_size * 8, c_out=data_size * 4, k=4, stride=2, pad=1),
        dict(c_in=data_size * 4, c_out=data_size * 2, k=4, stride=2, pad=1),
        dict(c_in=data_size * 2, c_out=data_size,     k=3, stride=1, pad=2),
        dict(c_in=data_size,     c_out=1,             k=4, stride=2, pad=1),
    ]
    l_in = 1
    cfg, layers, raw = [], [], []
    for i, s in enumerate(spec):
        key, kw, kb = jax.random.split(key, 3)
        w = np.asarray(jax.random.normal(kw, (s['c_in'], s['c_out'], s['k'])),
                       np.float32) * 0.1
        b = np.asarray(jax.random.normal(kb, (s['c_out'],)), np.float32) * 0.1
        w_q = _quantize_bf16(w)                       # kernel weights are bf16
        l_out = (l_in - 1) * s['stride'] - 2 * s['pad'] + s['k']
        last = (i == len(spec) - 1)
        cfg.append(dict(l_in=l_in, l_out=l_out, last=last, **s))
        # compact tap-major weight stack shipped to the kernel: (K, Cin, Cout)
        w_stack = jnp.asarray(np.transpose(w_q, (2, 0, 1)), jnp.bfloat16)
        if last:
            layers.append(dict(w=w_stack,
                               bias=jnp.asarray(b.reshape(1, 1), jnp.float32)))
        else:
            layers.append(dict(w=w_stack,
                               gamma=jnp.ones((1, s['c_out']), jnp.float32),
                               beta=jnp.zeros((1, s['c_out']), jnp.float32)))
        raw.append(dict(w=w_q, b=b, stride=s['stride'], pad=s['pad'], last=last))
        l_in = l_out
    return dict(cfg=cfg, layers=layers), raw


# ----------------------------------------------------------- numpy reference

def _convT1d_ref(x, w, b, stride, pad):
    n, _, l_in = x.shape
    _, c_out, k = w.shape
    l_out = (l_in - 1) * stride - 2 * pad + k
    y = np.zeros((n, c_out, l_out), np.float32)
    for li in range(l_in):
        for kk in range(k):
            lo = li * stride + kk - pad
            if 0 <= lo < l_out:
                y[:, :, lo] += x[:, :, li] @ w[:, :, kk]
    return y + b[None, :, None]


def _bn_relu_ref(y):
    mean = y.mean(axis=(0, 2), keepdims=True)
    var = y.var(axis=(0, 2), keepdims=True)     # biased, train-mode
    return np.maximum((y - mean) / np.sqrt(var + EPS), 0.0)


def generator_ref(z, raw):
    x = np.asarray(z, np.float32)
    for r in raw:
        # kernel feeds activations to the MXU in bf16 -> emulate that rounding
        x = _quantize_bf16(x)
        # reference keeps the conv bias even for BN layers; it cancels exactly.
        x = _convT1d_ref(x, r['w'], r['b'], r['stride'], r['pad'])
        x = np.tanh(x) if r['last'] else _bn_relu_ref(x)
    return x


# ------------------------------------------------------------------- main ---

if __name__ == "__main__":
    n = 2
    z = jax.random.normal(jax.random.PRNGKey(0), (n, 20, 1), dtype=jnp.float32)
    params, raw = init_params(jax.random.PRNGKey(1))

    out = jax.block_until_ready(generator_forward(z, params))

    assert out.shape == (n, 1, 28), out.shape
    ref = generator_ref(np.asarray(z), raw)
    np.testing.assert_allclose(np.asarray(out), ref, rtol=2e-3, atol=2e-3)
    print("KERNEL_OK")
</pallas_src>

<mosaic_0001>
module attributes {stable_mosaic.version = 11 : i64} {
  func.func @kernel(%arg0: memref<2x20xf32, #tpu.memory_space<vmem>>, %arg1: memref<4x20x256xbf16, #tpu.memory_space<vmem>>, %arg2: memref<1x256xf32, #tpu.memory_space<vmem>>, %arg3: memref<1x256xf32, #tpu.memory_space<vmem>>, %arg4: memref<4x256x128xbf16, #tpu.memory_space<vmem>>, %arg5: memref<1x128xf32, #tpu.memory_space<vmem>>, %arg6: memref<1x128xf32, #tpu.memory_space<vmem>>, %arg7: memref<4x128x64xbf16, #tpu.memory_space<vmem>>, %arg8: memref<1x64xf32, #tpu.memory_space<vmem>>, %arg9: memref<1x64xf32, #tpu.memory_space<vmem>>, %arg10: memref<3x64x32xbf16, #tpu.memory_space<vmem>>, %arg11: memref<1x32xf32, #tpu.memory_space<vmem>>, %arg12: memref<1x32xf32, #tpu.memory_space<vmem>>, %arg13: memref<4x32x1xbf16, #tpu.memory_space<vmem>>, %arg14: memref<1x1xf32, #tpu.memory_space<vmem>>, %arg15: memref<56x1xf32, #tpu.memory_space<vmem>>, %arg16: memref<8x256xf32, #tpu.memory_space<vmem>>, %arg17: memref<16x128xf32, #tpu.memory_space<vmem>>, %arg18: memref<32x64xf32, #tpu.memory_space<vmem>>, %arg19: memref<28x32xf32, #tpu.memory_space<vmem>>) attributes {dimension_semantics = [], scalar_prefetch = 0 : i64, scratch_operands = 4 : i64, tpu.core_type = #tpu.core_type<tc>} {
    %c0 = arith.constant 0 : index
    %c0_0 = arith.constant 0 : index
    %0 = vector.load %arg0[%c0, %c0_0] : memref<2x20xf32, #tpu.memory_space<vmem>>, vector<2x20xf32>
    %1 = arith.truncf %0 : vector<2x20xf32> to vector<2x20xbf16>
    %c0_1 = arith.constant 0 : index
    %c0_2 = arith.constant 0 : index
    %c0_3 = arith.constant 0 : index
    %2 = vector.load %arg1[%c0_1, %c0_2, %c0_3] : memref<4x20x256xbf16, #tpu.memory_space<vmem>>, vector<1x20x256xbf16>
    %3 = vector.shape_cast %2 : vector<1x20x256xbf16> to vector<20x256xbf16>
    %cst = arith.constant dense<0.000000e+00> : vector<2x256xf32>
    %4 = tpu.matmul %1, %3, %cst {dimension_numbers = #tpu.dot_dimension_numbers<[1], [0], [0], [1], [0, 0, 1, 1], [], []>} : vector<2x20xbf16>, vector<20x256xbf16>, vector<2x256xf32> -> vector<2x256xf32>
    %c1 = arith.constant 1 : index
    %c0_4 = arith.constant 0 : index
    %c0_5 = arith.constant 0 : index
    %5 = vector.load %arg1[%c1, %c0_4, %c0_5] : memref<4x20x256xbf16, #tpu.memory_space<vmem>>, vector<1x20x256xbf16>
    %6 = vector.shape_cast %5 : vector<1x20x256xbf16> to vector<20x256xbf16>
    %cst_6 = arith.constant dense<0.000000e+00> : vector<2x256xf32>
    %7 = tpu.matmul %1, %6, %cst_6 {dimension_numbers = #tpu.dot_dimension_numbers<[1], [0], [0], [1], [0, 0, 1, 1], [], []>} : vector<2x20xbf16>, vector<20x256xbf16>, vector<2x256xf32> -> vector<2x256xf32>
    %c2 = arith.constant 2 : index
    %c0_7 = arith.constant 0 : index
    %c0_8 = arith.constant 0 : index
    %8 = vector.load %arg1[%c2, %c0_7, %c0_8] : memref<4x20x256xbf16, #tpu.memory_space<vmem>>, vector<1x20x256xbf16>
    %9 = vector.shape_cast %8 : vector<1x20x256xbf16> to vector<20x256xbf16>
    %cst_9 = arith.constant dense<0.000000e+00> : vector<2x256xf32>
    %10 = tpu.matmul %1, %9, %cst_9 {dimension_numbers = #tpu.dot_dimension_numbers<[1], [0], [0], [1], [0, 0, 1, 1], [], []>} : vector<2x20xbf16>, vector<20x256xbf16>, vector<2x256xf32> -> vector<2x256xf32>
    %c3 = arith.constant 3 : index
    %c0_10 = arith.constant 0 : index
    %c0_11 = arith.constant 0 : index
    %11 = vector.load %arg1[%c3, %c0_10, %c0_11] : memref<4x20x256xbf16, #tpu.memory_space<vmem>>, vector<1x20x256xbf16>
    %12 = vector.shape_cast %11 : vector<1x20x256xbf16> to vector<20x256xbf16>
    %cst_12 = arith.constant dense<0.000000e+00> : vector<2x256xf32>
    %13 = tpu.matmul %1, %12, %cst_12 {dimension_numbers = #tpu.dot_dimension_numbers<[1], [0], [0], [1], [0, 0, 1, 1], [], []>} : vector<2x20xbf16>, vector<20x256xbf16>, vector<2x256xf32> -> vector<2x256xf32>
    %cst_13 = arith.constant 0.000000e+00 : f32
    %14 = vector.broadcast %cst_13 : f32 to vector<8x256xf32>
    %c0_14 = arith.constant 0 : index
    %c0_15 = arith.constant 0 : index
    %15 = vector.load %arg16[%c0_14, %c0_15] : memref<8x256xf32, #tpu.memory_space<vmem>>, vector<8x256xf32>
    tpu.vector_store %arg16[%c0_14, %c0_15], %14 {strides = array<i32>} : memref<8x256xf32, #tpu.memory_space<vmem>>, vector<8x256xf32>,
    %c0_16 = arith.constant 0 : index
    %c0_17 = arith.constant 0 : index
    %16 = vector.load %arg16[%c0_16, %c0_17] : memref<8x256xf32, #tpu.memory_space<vmem>>, vector<2x256xf32>
    %17 = arith.addf %16, %4 : vector<2x256xf32>
    %c0_18 = arith.constant 0 : index
    %c0_19 = arith.constant 0 : index
    %18 = vector.load %arg16[%c0_18, %c0_19] : memref<8x256xf32, #tpu.memory_space<vmem>>, vector<2x256xf32>
    tpu.vector_store %arg16[%c0_18, %c0_19], %17 {strides = array<i32>} : memref<8x256xf32, #tpu.memory_space<vmem>>, vector<2x256xf32>,
    %c2_20 = arith.constant 2 : index
    %c0_21 = arith.constant 0 : index
    %19 = vector.load %arg16[%c2_20, %c0_21] : memref<8x256xf32, #tpu.memory_space<vmem>>, vector<2x256xf32>
    %20 = arith.addf %19, %7 : vector<2x256xf32>
    %c2_22 = arith.constant 2 : index
    %c0_23 = arith.constant 0 : index
    %21 = vector.load %arg16[%c2_22, %c0_23] : memref<8x256xf32, #tpu.memory_space<vmem>>, vector<2x256xf32>
    tpu.vector_store %arg16[%c2_22, %c0_23], %20 {strides = array<i32>} : memref<8x256xf32, #tpu.memory_space<vmem>>, vector<2x256xf32>,
    %c4 = arith.constant 4 : index
    %c0_24 = arith.constant 0 : index
    %22 = vector.load %arg16[%c4, %c0_24] : memref<8x256xf32, #tpu.memory_space<vmem>>, vector<2x256xf32>
    %23 = arith.addf %22, %10 : vector<2x256xf32>
    %c4_25 = arith.constant 4 : index
    %c0_26 = arith.constant 0 : index
    %24 = vector.load %arg16[%c4_25, %c0_26] : memref<8x256xf32, #tpu.memory_space<vmem>>, vector<2x256xf32>
    tpu.vector_store %arg16[%c4_25, %c0_26], %23 {strides = array<i32>} : memref<8x256xf32, #tpu.memory_space<vmem>>, vector<2x256xf32>,
    %c6 = arith.constant 6 : index
    %c0_27 = arith.constant 0 : index
    %25 = vector.load %arg16[%c6, %c0_27] : memref<8x256xf32, #tpu.memory_space<vmem>>, vector<2x256xf32>
    %26 = arith.addf %25, %13 : vector<2x256xf32>
    %c6_28 = arith.constant 6 : index
    %c0_29 = arith.constant 0 : index
    %27 = vector.load %arg16[%c6_28, %c0_29] : memref<8x256xf32, #tpu.memory_space<vmem>>, vector<2x256xf32>
    tpu.vector_store %arg16[%c6_28, %c0_29], %26 {strides = array<i32>} : memref<8x256xf32, #tpu.memory_space<vmem>>, vector<2x256xf32>,
    %c0_30 = arith.constant 0 : index
    %c0_31 = arith.constant 0 : index
    %28 = vector.load %arg16[%c0_30, %c0_31] : memref<8x256xf32, #tpu.memory_space<vmem>>, vector<8x256xf32>
    %cst_32 = arith.constant dense<0.000000e+00> : vector<256xf32>
    %29 = vector.multi_reduction <add>, %28, %cst_32 [0] : vector<8x256xf32> to vector<256xf32>
    %30 = vector.shape_cast %29 : vector<256xf32> to vector<1x256xf32>
    %cst_33 = arith.constant 1.250000e-01 : f32
    %31 = vector.broadcast %cst_33 : f32 to vector<1x256xf32>
    %32 = arith.mulf %30, %31 : vector<1x256xf32>
    %33 = vector.broadcast %32 : vector<1x256xf32> to vector<8x256xf32>
    %34 = arith.subf %28, %33 : vector<8x256xf32>
    %35 = arith.mulf %34, %34 : vector<8x256xf32>
    %cst_34 = arith.constant dense<0.000000e+00> : vector<256xf32>
    %36 = vector.multi_reduction <add>, %35, %cst_34 [0] : vector<8x256xf32> to vector<256xf32>
    %37 = vector.shape_cast %36 : vector<256xf32> to vector<1x256xf32>
    %cst_35 = arith.constant 1.250000e-01 : f32
    %38 = vector.broadcast %cst_35 : f32 to vector<1x256xf32>
    %39 = arith.mulf %37, %38 : vector<1x256xf32>
    %c0_36 = arith.constant 0 : index
    %c0_37 = arith.constant 0 : index
    %40 = vector.load %arg2[%c0_36, %c0_37] : memref<1x256xf32, #tpu.memory_space<vmem>>, vector<1x256xf32>
    %cst_38 = arith.constant 9.99999974E-6 : f32
    %41 = vector.broadcast %cst_38 : f32 to vector<1x256xf32>
    %42 = arith.addf %39, %41 : vector<1x256xf32>
    %43 = math.rsqrt %42 : vector<1x256xf32>
    %44 = arith.mulf %40, %43 : vector<1x256xf32>
    %c0_39 = arith.constant 0 : index
    %c0_40 = arith.constant 0 : index
    %45 = vector.load %arg3[%c0_39, %c0_40] : memref<1x256xf32, #tpu.memory_space<vmem>>, vector<1x256xf32>
    %46 = arith.mulf %32, %44 : vector<1x256xf32>
    %47 = arith.subf %45, %46 : vector<1x256xf32>
    %48 = vector.broadcast %44 : vector<1x256xf32> to vector<8x256xf32>
    %49 = arith.mulf %28, %48 : vector<8x256xf32>
    %50 = vector.broadcast %47 : vector<1x256xf32> to vector<8x256xf32>
    %51 = arith.addf %49, %50 : vector<8x256xf32>
    %cst_41 = arith.constant 0.000000e+00 : f32
    %52 = vector.broadcast %cst_41 : f32 to vector<8x256xf32>
    %53 = arith.maximumf %51, %52 : vector<8x256xf32>
    %54 = arith.truncf %53 : vector<8x256xf32> to vector<8x256xbf16>
    %c0_42 = arith.constant 0 : index
    %c0_43 = arith.constant 0 : index
    %c0_44 = arith.constant 0 : index
    %55 = vector.load %arg4[%c0_42, %c0_43, %c0_44] : memref<4x256x128xbf16, #tpu.memory_space<vmem>>, vector<1x256x128xbf16>
    %56 = vector.shape_cast %55 : vector<1x256x128xbf16> to vector<256x128xbf16>
    %cst_45 = arith.constant dense<0.000000e+00> : vector<8x128xf32>
    %57 = tpu.matmul %54, %56, %cst_45 {dimension_numbers = #tpu.dot_dimension_numbers<[1], [0], [0], [1], [0, 0, 1, 1], [], []>} : vector<8x256xbf16>, vector<256x128xbf16>, vector<8x128xf32> -> vector<8x128xf32>
    %c1_46 = arith.constant 1 : index
    %c0_47 = arith.constant 0 : index
    %c0_48 = arith.constant 0 : index
    %58 = vector.load %arg4[%c1_46, %c0_47, %c0_48] : memref<4x256x128xbf16, #tpu.memory_space<vmem>>, vector<1x256x128xbf16>
    %59 = vector.shape_cast %58 : vector<1x256x128xbf16> to vector<256x128xbf16>
    %cst_49 = arith.constant dense<0.000000e+00> : vector<8x128xf32>
    %60 = tpu.matmul %54, %59, %cst_49 {dimension_numbers = #tpu.dot_dimension_numbers<[1], [0], [0], [1], [0, 0, 1, 1], [], []>} : vector<8x256xbf16>, vector<256x128xbf16>, vector<8x128xf32> -> vector<8x128xf32>
    %c2_50 = arith.constant 2 : index
    %c0_51 = arith.constant 0 : index
    %c0_52 = arith.constant 0 : index
    %61 = vector.load %arg4[%c2_50, %c0_51, %c0_52] : memref<4x256x128xbf16, #tpu.memory_space<vmem>>, vector<1x256x128xbf16>
    %62 = vector.shape_cast %61 : vector<1x256x128xbf16> to vector<256x128xbf16>
    %cst_53 = arith.constant dense<0.000000e+00> : vector<8x128xf32>
    %63 = tpu.matmul %54, %62, %cst_53 {dimension_numbers = #tpu.dot_dimension_numbers<[1], [0], [0], [1], [0, 0, 1, 1], [], []>} : vector<8x256xbf16>, vector<256x128xbf16>, vector<8x128xf32> -> vector<8x128xf32>
    %c3_54 = arith.constant 3 : index
    %c0_55 = arith.constant 0 : index
    %c0_56 = arith.constant 0 : index
    %64 = vector.load %arg4[%c3_54, %c0_55, %c0_56] : memref<4x256x128xbf16, #tpu.memory_space<vmem>>, vector<1x256x128xbf16>
    %65 = vector.shape_cast %64 : vector<1x256x128xbf16> to vector<256x128xbf16>
    %cst_57 = arith.constant dense<0.000000e+00> : vector<8x128xf32>
    %66 = tpu.matmul %54, %65, %cst_57 {dimension_numbers = #tpu.dot_dimension_numbers<[1], [0], [0], [1], [0, 0, 1, 1], [], []>} : vector<8x256xbf16>, vector<256x128xbf16>, vector<8x128xf32> -> vector<8x128xf32>
    %67 = vector.extract_strided_slice %60 {offsets = [0, 0], sizes = [2, 128], strides = [1, 1]} : vector<8x128xf32> to vector<2x128xf32>
    %c0_58 = arith.constant 0 : index
    %c0_59 = arith.constant 0 : index
    %68 = vector.load %arg17[%c0_58, %c0_59] : memref<16x128xf32, #tpu.memory_space<vmem>>, vector<2x128xf32>
    tpu.vector_store %arg17[%c0_58, %c0_59], %67 {strides = array<i32>} : memref<16x128xf32, #tpu.memory_space<vmem>>, vector<2x128xf32>,
    %69 = vector.extract_strided_slice %57 {offsets = [2, 0], sizes = [2, 128], strides = [1, 1]} : vector<8x128xf32> to vector<2x128xf32>
    %70 = vector.extract_strided_slice %63 {offsets = [0, 0], sizes = [2, 128], strides = [1, 1]} : vector<8x128xf32> to vector<2x128xf32>
    %71 = arith.addf %69, %70 : vector<2x128xf32>
    %c2_60 = arith.constant 2 : index
    %c0_61 = arith.constant 0 : index
    %72 = vector.load %arg17[%c2_60, %c0_61] : memref<16x128xf32, #tpu.memory_space<vmem>>, vector<2x128xf32>
    tpu.vector_store %arg17[%c2_60, %c0_61], %71 {strides = array<i32>} : memref<16x128xf32, #tpu.memory_space<vmem>>, vector<2x128xf32>,
    %73 = vector.extract_strided_slice %60 {offsets = [2, 0], sizes = [2, 128], strides = [1, 1]} : vector<8x128xf32> to vector<2x128xf32>
    %74 = vector.extract_strided_slice %66 {offsets = [0, 0], sizes = [2, 128], strides = [1, 1]} : vector<8x128xf32> to vector<2x128xf32>
    %75 = arith.addf %73, %74 : vector<2x128xf32>
    %c4_62 = arith.constant 4 : index
    %c0_63 = arith.constant 0 : index
    %76 = vector.load %arg17[%c4_62, %c0_63] : memref<16x128xf32, #tpu.memory_space<vmem>>, vector<2x128xf32>
    tpu.vector_store %arg17[%c4_62, %c0_63], %75 {strides = array<i32>} : memref<16x128xf32, #tpu.memory_space<vmem>>, vector<2x128xf32>,
    %77 = vector.extract_strided_slice %57 {offsets = [4, 0], sizes = [2, 128], strides = [1, 1]} : vector<8x128xf32> to vector<2x128xf32>
    %78 = vector.extract_strided_slice %63 {offsets = [2, 0], sizes = [2, 128], strides = [1, 1]} : vector<8x128xf32> to vector<2x128xf32>
    %79 = arith.addf %77, %78 : vector<2x128xf32>
    %c6_64 = arith.constant 6 : index
    %c0_65 = arith.constant 0 : index
    %80 = vector.load %arg17[%c6_64, %c0_65] : memref<16x128xf32, #tpu.memory_space<vmem>>, vector<2x128xf32>
    tpu.vector_store %arg17[%c6_64, %c0_65], %79 {strides = array<i32>} : memref<16x128xf32, #tpu.memory_space<vmem>>, vector<2x128xf32>,
    %81 = vector.extract_strided_slice %60 {offsets = [4, 0], sizes = [2, 128], strides = [1, 1]} : vector<8x128xf32> to vector<2x128xf32>
    %82 = vector.extract_strided_slice %66 {offsets = [2, 0], sizes = [2, 128], strides = [1, 1]} : vector<8x128xf32> to vector<2x128xf32>
    %83 = arith.addf %81, %82 : vector<2x128xf32>
    %c8 = arith.constant 8 : index
    %c0_66 = arith.constant 0 : index
    %84 = vector.load %arg17[%c8, %c0_66] : memref<16x128xf32, #tpu.memory_space<vmem>>, vector<2x128xf32>
    tpu.vector_store %arg17[%c8, %c0_66], %83 {strides = array<i32>} : memref<16x128xf32, #tpu.memory_space<vmem>>, vector<2x128xf32>,
    %85 = vector.extract_strided_slice %57 {offsets = [6, 0], sizes = [2, 128], strides = [1, 1]} : vector<8x128xf32> to vector<2x128xf32>
    %86 = vector.extract_strided_slice %63 {offsets = [4, 0], sizes = [2, 128], strides = [1, 1]} : vector<8x128xf32> to vector<2x128xf32>
    %87 = arith.addf %85, %86 : vector<2x128xf32>
    %c10 = arith.constant 10 : index
    %c0_67 = arith.constant 0 : index
    %88 = vector.load %arg17[%c10, %c0_67] : memref<16x128xf32, #tpu.memory_space<vmem>>, vector<2x128xf32>
    tpu.vector_store %arg17[%c10, %c0_67], %87 {strides = array<i32>} : memref<16x128xf32, #tpu.memory_space<vmem>>, vector<2x128xf32>,
    %89 = vector.extract_strided_slice %60 {offsets = [6, 0], sizes = [2, 128], strides = [1, 1]} : vector<8x128xf32> to vector<2x128xf32>
    %90 = vector.extract_strided_slice %66 {offsets = [4, 0], sizes = [2, 128], strides = [1, 1]} : vector<8x128xf32> to vector<2x128xf32>
    %91 = arith.addf %89, %90 : vector<2x128xf32>
    %c12 = arith.constant 12 : index
    %c0_68 = arith.constant 0 : index
    %92 = vector.load %arg17[%c12, %c0_68] : memref<16x128xf32, #tpu.memory_space<vmem>>, vector<2x128xf32>
    tpu.vector_store %arg17[%c12, %c0_68], %91 {strides = array<i32>} : memref<16x128xf32, #tpu.memory_space<vmem>>, vector<2x128xf32>,
    %93 = vector.extract_strided_slice %63 {offsets = [6, 0], sizes = [2, 128], strides = [1, 1]} : vector<8x128xf32> to vector<2x128xf32>
    %c14 = arith.constant 14 : index
    %c0_69 = arith.constant 0 : index
    %94 = vector.load %arg17[%c14, %c0_69] : memref<16x128xf32, #tpu.memory_space<vmem>>, vector<2x128xf32>
    tpu.vector_store %arg17[%c14, %c0_69], %93 {strides = array<i32>} : memref<16x128xf32, #tpu.memory_space<vmem>>, vector<2x128xf32>,
    %c0_70 = arith.constant 0 : index
    %c0_71 = arith.constant 0 : index
    %95 = vector.load %arg17[%c0_70, %c0_71] : memref<16x128xf32, #tpu.memory_space<vmem>>, vector<16x128xf32>
    %cst_72 = arith.constant dense<0.000000e+00> : vector<128xf32>
    %96 = vector.multi_reduction <add>, %95, %cst_72 [0] : vector<16x128xf32> to vector<128xf32>
    %97 = vector.shape_cast %96 : vector<128xf32> to vector<1x128xf32>
    %cst_73 = arith.constant 6.250000e-02 : f32
    %98 = vector.broadcast %cst_73 : f32 to vector<1x128xf32>
    %99 = arith.mulf %97, %98 : vector<1x128xf32>
    %100 = vector.broadcast %99 : vector<1x128xf32> to vector<16x128xf32>
    %101 = arith.subf %95, %100 : vector<16x128xf32>
    %102 = arith.mulf %101, %101 : vector<16x128xf32>
    %cst_74 = arith.constant dense<0.000000e+00> : vector<128xf32>
    %103 = vector.multi_reduction <add>, %102, %cst_74 [0] : vector<16x128xf32> to vector<128xf32>
    %104 = vector.shape_cast %103 : vector<128xf32> to vector<1x128xf32>
    %cst_75 = arith.constant 6.250000e-02 : f32
    %105 = vector.broadcast %cst_75 : f32 to vector<1x128xf32>
    %106 = arith.mulf %104, %105 : vector<1x128xf32>
    %c0_76 = arith.constant 0 : index
    %c0_77 = arith.constant 0 : index
    %107 = vector.load %arg5[%c0_76, %c0_77] : memref<1x128xf32, #tpu.memory_space<vmem>>, vector<1x128xf32>
    %cst_78 = arith.constant 9.99999974E-6 : f32
    %108 = vector.broadcast %cst_78 : f32 to vector<1x128xf32>
    %109 = arith.addf %106, %108 : vector<1x128xf32>
    %110 = math.rsqrt %109 : vector<1x128xf32>
    %111 = arith.mulf %107, %110 : vector<1x128xf32>
    %c0_79 = arith.constant 0 : index
    %c0_80 = arith.constant 0 : index
    %112 = vector.load %arg6[%c0_79, %c0_80] : memref<1x128xf32, #tpu.memory_space<vmem>>, vector<1x128xf32>
    %113 = arith.mulf %99, %111 : vector<1x128xf32>
    %114 = arith.subf %112, %113 : vector<1x128xf32>
    %115 = vector.broadcast %111 : vector<1x128xf32> to vector<16x128xf32>
    %116 = arith.mulf %95, %115 : vector<16x128xf32>
    %117 = vector.broadcast %114 : vector<1x128xf32> to vector<16x128xf32>
    %118 = arith.addf %116, %117 : vector<16x128xf32>
    %cst_81 = arith.constant 0.000000e+00 : f32
    %119 = vector.broadcast %cst_81 : f32 to vector<16x128xf32>
    %120 = arith.maximumf %118, %119 : vector<16x128xf32>
    %121 = arith.truncf %120 : vector<16x128xf32> to vector<16x128xbf16>
    %c0_82 = arith.constant 0 : index
    %c0_83 = arith.constant 0 : index
    %c0_84 = arith.constant 0 : index
    %122 = vector.load %arg7[%c0_82, %c0_83, %c0_84] : memref<4x128x64xbf16, #tpu.memory_space<vmem>>, vector<1x128x64xbf16>
    %123 = vector.shape_cast %122 : vector<1x128x64xbf16> to vector<128x64xbf16>
    %cst_85 = arith.constant dense<0.000000e+00> : vector<16x64xf32>
    %124 = tpu.matmul %121, %123, %cst_85 {dimension_numbers = #tpu.dot_dimension_numbers<[1], [0], [0], [1], [0, 0, 1, 1], [], []>} : vector<16x128xbf16>, vector<128x64xbf16>, vector<16x64xf32> -> vector<16x64xf32>
    %c1_86 = arith.constant 1 : index
    %c0_87 = arith.constant 0 : index
    %c0_88 = arith.constant 0 : index
    %125 = vector.load %arg7[%c1_86, %c0_87, %c0_88] : memref<4x128x64xbf16, #tpu.memory_space<vmem>>, vector<1x128x64xbf16>
    %126 = vector.shape_cast %125 : vector<1x128x64xbf16> to vector<128x64xbf16>
    %cst_89 = arith.constant dense<0.000000e+00> : vector<16x64xf32>
    %127 = tpu.matmul %121, %126, %cst_89 {dimension_numbers = #tpu.dot_dimension_numbers<[1], [0], [0], [1], [0, 0, 1, 1], [], []>} : vector<16x128xbf16>, vector<128x64xbf16>, vector<16x64xf32> -> vector<16x64xf32>
    %c2_90 = arith.constant 2 : index
    %c0_91 = arith.constant 0 : index
    %c0_92 = arith.constant 0 : index
    %128 = vector.load %arg7[%c2_90, %c0_91, %c0_92] : memref<4x128x64xbf16, #tpu.memory_space<vmem>>, vector<1x128x64xbf16>
    %129 = vector.shape_cast %128 : vector<1x128x64xbf16> to vector<128x64xbf16>
    %cst_93 = arith.constant dense<0.000000e+00> : vector<16x64xf32>
    %130 = tpu.matmul %121, %129, %cst_93 {dimension_numbers = #tpu.dot_dimension_numbers<[1], [0], [0], [1], [0, 0, 1, 1], [], []>} : vector<16x128xbf16>, vector<128x64xbf16>, vector<16x64xf32> -> vector<16x64xf32>
    %c3_94 = arith.constant 3 : index
    %c0_95 = arith.constant 0 : index
    %c0_96 = arith.constant 0 : index
    %131 = vector.load %arg7[%c3_94, %c0_95, %c0_96] : memref<4x128x64xbf16, #tpu.memory_space<vmem>>, vector<1x128x64xbf16>
    %132 = vector.shape_cast %131 : vector<1x128x64xbf16> to vector<128x64xbf16>
    %cst_97 = arith.constant dense<0.000000e+00> : vector<16x64xf32>
    %133 = tpu.matmul %121, %132, %cst_97 {dimension_numbers = #tpu.dot_dimension_numbers<[1], [0], [0], [1], [0, 0, 1, 1], [], []>} : vector<16x128xbf16>, vector<128x64xbf16>, vector<16x64xf32> -> vector<16x64xf32>
    %134 = vector.extract_strided_slice %127 {offsets = [0, 0], sizes = [2, 64], strides = [1, 1]} : vector<16x64xf32> to vector<2x64xf32>
    %c0_98 = arith.constant 0 : index
    %c0_99 = arith.constant 0 : index
    %135 = vector.load %arg18[%c0_98, %c0_99] : memref<32x64xf32, #tpu.memory_space<vmem>>, vector<2x64xf32>
    tpu.vector_store %arg18[%c0_98, %c0_99], %134 {strides = array<i32>} : memref<32x64xf32, #tpu.memory_space<vmem>>, vector<2x64xf32>,
    %136 = vector.extract_strided_slice %124 {offsets = [2, 0], sizes = [2, 64], strides = [1, 1]} : vector<16x64xf32> to vector<2x64xf32>
    %137 = vector.extract_strided_slice %130 {offsets = [0, 0], sizes = [2, 64], strides = [1, 1]} : vector<16x64xf32> to vector<2x64xf32>
    %138 = arith.addf %136, %137 : vector<2x64xf32>
    %c2_100 = arith.constant 2 : index
    %c0_101 = arith.constant 0 : index
    %139 = vector.load %arg18[%c2_100, %c0_101] : memref<32x64xf32, #tpu.memory_space<vmem>>, vector<2x64xf32>
    tpu.vector_store %arg18[%c2_100, %c0_101], %138 {strides = array<i32>} : memref<32x64xf32, #tpu.memory_space<vmem>>, vector<2x64xf32>,
    %140 = vector.extract_strided_slice %127 {offsets = [2, 0], sizes = [2, 64], strides = [1, 1]} : vector<16x64xf32> to vector<2x64xf32>
    %141 = vector.extract_strided_slice %133 {offsets = [0, 0], sizes = [2, 64], strides = [1, 1]} : vector<16x64xf32> to vector<2x64xf32>
    %142 = arith.addf %140, %141 : vector<2x64xf32>
    %c4_102 = arith.constant 4 : index
    %c0_103 = arith.constant 0 : index
    %143 = vector.load %arg18[%c4_102, %c0_103] : memref<32x64xf32, #tpu.memory_space<vmem>>, vector<2x64xf32>
    tpu.vector_store %arg18[%c4_102, %c0_103], %142 {strides = array<i32>} : memref<32x64xf32, #tpu.memory_space<vmem>>, vector<2x64xf32>,
    %144 = vector.extract_strided_slice %124 {offsets = [4, 0], sizes = [2, 64], strides = [1, 1]} : vector<16x64xf32> to vector<2x64xf32>
    %145 = vector.extract_strided_slice %130 {offsets = [2, 0], sizes = [2, 64], strides = [1, 1]} : vector<16x64xf32> to vector<2x64xf32>
    %146 = arith.addf %144, %145 : vector<2x64xf32>
    %c6_104 = arith.constant 6 : index
    %c0_105 = arith.constant 0 : index
    %147 = vector.load %arg18[%c6_104, %c0_105] : memref<32x64xf32, #tpu.memory_space<vmem>>, vector<2x64xf32>
    tpu.vector_store %arg18[%c6_104, %c0_105], %146 {strides = array<i32>} : memref<32x64xf32, #tpu.memory_space<vmem>>, vector<2x64xf32>,
    %148 = vector.extract_strided_slice %127 {offsets = [4, 0], sizes = [2, 64], strides = [1, 1]} : vector<16x64xf32> to vector<2x64xf32>
    %149 = vector.extract_strided_slice %133 {offsets = [2, 0], sizes = [2, 64], strides = [1, 1]} : vector<16x64xf32> to vector<2x64xf32>
    %150 = arith.addf %148, %149 : vector<2x64xf32>
    %c8_106 = arith.constant 8 : index
    %c0_107 = arith.constant 0 : index
    %151 = vector.load %arg18[%c8_106, %c0_107] : memref<32x64xf32, #tpu.memory_space<vmem>>, vector<2x64xf32>
    tpu.vector_store %arg18[%c8_106, %c0_107], %150 {strides = array<i32>} : memref<32x64xf32, #tpu.memory_space<vmem>>, vector<2x64xf32>,
    %152 = vector.extract_strided_slice %124 {offsets = [6, 0], sizes = [2, 64], strides = [1, 1]} : vector<16x64xf32> to vector<2x64xf32>
    %153 = vector.extract_strided_slice %130 {offsets = [4, 0], sizes = [2, 64], strides = [1, 1]} : vector<16x64xf32> to vector<2x64xf32>
    %154 = arith.addf %152, %153 : vector<2x64xf32>
    %c10_108 = arith.constant 10 : index
    %c0_109 = arith.constant 0 : index
    %155 = vector.load %arg18[%c10_108, %c0_109] : memref<32x64xf32, #tpu.memory_space<vmem>>, vector<2x64xf32>
    tpu.vector_store %arg18[%c10_108, %c0_109], %154 {strides = array<i32>} : memref<32x64xf32, #tpu.memory_space<vmem>>, vector<2x64xf32>,
    %156 = vector.extract_strided_slice %127 {offsets = [6, 0], sizes = [2, 64], strides = [1, 1]} : vector<16x64xf32> to vector<2x64xf32>
    %157 = vector.extract_strided_slice %133 {offsets = [4, 0], sizes = [2, 64], strides = [1, 1]} : vector<16x64xf32> to vector<2x64xf32>
    %158 = arith.addf %156, %157 : vector<2x64xf32>
    %c12_110 = arith.constant 12 : index
    %c0_111 = arith.constant 0 : index
    %159 = vector.load %arg18[%c12_110, %c0_111] : memref<32x64xf32, #tpu.memory_space<vmem>>, vector<2x64xf32>
    tpu.vector_store %arg18[%c12_110, %c0_111], %158 {strides = array<i32>} : memref<32x64xf32, #tpu.memory_space<vmem>>, vector<2x64xf32>,
    %160 = vector.extract_strided_slice %124 {offsets = [8, 0], sizes = [2, 64], strides = [1, 1]} : vector<16x64xf32> to vector<2x64xf32>
    %161 = vector.extract_strided_slice %130 {offsets = [6, 0], sizes = [2, 64], strides = [1, 1]} : vector<16x64xf32> to vector<2x64xf32>
    %162 = arith.addf %160, %161 : vector<2x64xf32>
    %c14_112 = arith.constant 14 : index
    %c0_113 = arith.constant 0 : index
    %163 = vector.load %arg18[%c14_112, %c0_113] : memref<32x64xf32, #tpu.memory_space<vmem>>, vector<2x64xf32>
    tpu.vector_store %arg18[%c14_112, %c0_113], %162 {strides = array<i32>} : memref<32x64xf32, #tpu.memory_space<vmem>>, vector<2x64xf32>,
    %164 = vector.extract_strided_slice %127 {offsets = [8, 0], sizes = [2, 64], strides = [1, 1]} : vector<16x64xf32> to vector<2x64xf32>
    %165 = vector.extract_strided_slice %133 {offsets = [6, 0], sizes = [2, 64], strides = [1, 1]} : vector<16x64xf32> to vector<2x64xf32>
    %166 = arith.addf %164, %165 : vector<2x64xf32>
    %c16 = arith.constant 16 : index
    %c0_114 = arith.constant 0 : index
    %167 = vector.load %arg18[%c16, %c0_114] : memref<32x64xf32, #tpu.memory_space<vmem>>, vector<2x64xf32>
    tpu.vector_store %arg18[%c16, %c0_114], %166 {strides = array<i32>} : memref<32x64xf32, #tpu.memory_space<vmem>>, vector<2x64xf32>,
    %168 = vector.extract_strided_slice %124 {offsets = [10, 0], sizes = [2, 64], strides = [1, 1]} : vector<16x64xf32> to vector<2x64xf32>
    %169 = vector.extract_strided_slice %130 {offsets = [8, 0], sizes = [2, 64], strides = [1, 1]} : vector<16x64xf32> to vector<2x64xf32>
    %170 = arith.addf %168, %169 : vector<2x64xf32>
    %c18 = arith.constant 18 : index
    %c0_115 = arith.constant 0 : index
    %171 = vector.load %arg18[%c18, %c0_115] : memref<32x64xf32, #tpu.memory_space<vmem>>, vector<2x64xf32>
    tpu.vector_store %arg18[%c18, %c0_115], %170 {strides = array<i32>} : memref<32x64xf32, #tpu.memory_space<vmem>>, vector<2x64xf32>,
    %172 = vector.extract_strided_slice %127 {offsets = [10, 0], sizes = [2, 64], strides = [1, 1]} : vector<16x64xf32> to vector<2x64xf32>
    %173 = vector.extract_strided_slice %133 {offsets = [8, 0], sizes = [2, 64], strides = [1, 1]} : vector<16x64xf32> to vector<2x64xf32>
    %174 = arith.addf %172, %173 : vector<2x64xf32>
    %c20 = arith.constant 20 : index
    %c0_116 = arith.constant 0 : index
    %175 = vector.load %arg18[%c20, %c0_116] : memref<32x64xf32, #tpu.memory_space<vmem>>, vector<2x64xf32>
    tpu.vector_store %arg18[%c20, %c0_116], %174 {strides = array<i32>} : memref<32x64xf32, #tpu.memory_space<vmem>>, vector<2x64xf32>,
    %176 = vector.extract_strided_slice %124 {offsets = [12, 0], sizes = [2, 64], strides = [1, 1]} : vector<16x64xf32> to vector<2x64xf32>
    %177 = vector.extract_strided_slice %130 {offsets = [10, 0], sizes = [2, 64], strides = [1, 1]} : vector<16x64xf32> to vector<2x64xf32>
    %178 = arith.addf %176, %177 : vector<2x64xf32>
    %c22 = arith.constant 22 : index
    %c0_117 = arith.constant 0 : index
    %179 = vector.load %arg18[%c22, %c0_117] : memref<32x64xf32, #tpu.memory_space<vmem>>, vector<2x64xf32>
    tpu.vector_store %arg18[%c22, %c0_117], %178 {strides = array<i32>} : memref<32x64xf32, #tpu.memory_space<vmem>>, vector<2x64xf32>,
    %180 = vector.extract_strided_slice %127 {offsets = [12, 0], sizes = [2, 64], strides = [1, 1]} : vector<16x64xf32> to vector<2x64xf32>
    %181 = vector.extract_strided_slice %133 {offsets = [10, 0], sizes = [2, 64], strides = [1, 1]} : vector<16x64xf32> to vector<2x64xf32>
    %182 = arith.addf %180, %181 : vector<2x64xf32>
    %c24 = arith.constant 24 : index
    %c0_118 = arith.constant 0 : index
    %183 = vector.load %arg18[%c24, %c0_118] : memref<32x64xf32, #tpu.memory_space<vmem>>, vector<2x64xf32>
    tpu.vector_store %arg18[%c24, %c0_118], %182 {strides = array<i32>} : memref<32x64xf32, #tpu.memory_space<vmem>>, vector<2x64xf32>,
    %184 = vector.extract_strided_slice %124 {offsets = [14, 0], sizes = [2, 64], strides = [1, 1]} : vector<16x64xf32> to vector<2x64xf32>
    %185 = vector.extract_strided_slice %130 {offsets = [12, 0], sizes = [2, 64], strides = [1, 1]} : vector<16x64xf32> to vector<2x64xf32>
    %186 = arith.addf %184, %185 : vector<2x64xf32>
    %c26 = arith.constant 26 : index
    %c0_119 = arith.constant 0 : index
    %187 = vector.load %arg18[%c26, %c0_119] : memref<32x64xf32, #tpu.memory_space<vmem>>, vector<2x64xf32>
    tpu.vector_store %arg18[%c26, %c0_119], %186 {strides = array<i32>} : memref<32x64xf32, #tpu.memory_space<vmem>>, vector<2x64xf32>,
    %188 = vector.extract_strided_slice %127 {offsets = [14, 0], sizes = [2, 64], strides = [1, 1]} : vector<16x64xf32> to vector<2x64xf32>
    %189 = vector.extract_strided_slice %133 {offsets = [12, 0], sizes = [2, 64], strides = [1, 1]} : vector<16x64xf32> to vector<2x64xf32>
    %190 = arith.addf %188, %189 : vector<2x64xf32>
    %c28 = arith.constant 28 : index
    %c0_120 = arith.constant 0 : index
    %191 = vector.load %arg18[%c28, %c0_120] : memref<32x64xf32, #tpu.memory_space<vmem>>, vector<2x64xf32>
    tpu.vector_store %arg18[%c28, %c0_120], %190 {strides = array<i32>} : memref<32x64xf32, #tpu.memory_space<vmem>>, vector<2x64xf32>,
    %192 = vector.extract_strided_slice %130 {offsets = [14, 0], sizes = [2, 64], strides = [1, 1]} : vector<16x64xf32> to vector<2x64xf32>
    %c30 = arith.constant 30 : index
    %c0_121 = arith.constant 0 : index
    %193 = vector.load %arg18[%c30, %c0_121] : memref<32x64xf32, #tpu.memory_space<vmem>>, vector<2x64xf32>
    tpu.vector_store %arg18[%c30, %c0_121], %192 {strides = array<i32>} : memref<32x64xf32, #tpu.memory_space<vmem>>, vector<2x64xf32>,
    %c0_122 = arith.constant 0 : index
    %c0_123 = arith.constant 0 : index
    %194 = vector.load %arg18[%c0_122, %c0_123] : memref<32x64xf32, #tpu.memory_space<vmem>>, vector<32x64xf32>
    %cst_124 = arith.constant dense<0.000000e+00> : vector<64xf32>
    %195 = vector.multi_reduction <add>, %194, %cst_124 [0] : vector<32x64xf32> to vector<64xf32>
    %196 = vector.shape_cast %195 : vector<64xf32> to vector<1x64xf32>
    %cst_125 = arith.constant 3.125000e-02 : f32
    %197 = vector.broadcast %cst_125 : f32 to vector<1x64xf32>
    %198 = arith.mulf %196, %197 : vector<1x64xf32>
    %199 = vector.broadcast %198 : vector<1x64xf32> to vector<32x64xf32>
    %200 = arith.subf %194, %199 : vector<32x64xf32>
    %201 = arith.mulf %200, %200 : vector<32x64xf32>
    %cst_126 = arith.constant dense<0.000000e+00> : vector<64xf32>
    %202 = vector.multi_reduction <add>, %201, %cst_126 [0] : vector<32x64xf32> to vector<64xf32>
    %203 = vector.shape_cast %202 : vector<64xf32> to vector<1x64xf32>
    %cst_127 = arith.constant 3.125000e-02 : f32
    %204 = vector.broadcast %cst_127 : f32 to vector<1x64xf32>
    %205 = arith.mulf %203, %204 : vector<1x64xf32>
    %c0_128 = arith.constant 0 : index
    %c0_129 = arith.constant 0 : index
    %206 = vector.load %arg8[%c0_128, %c0_129] : memref<1x64xf32, #tpu.memory_space<vmem>>, vector<1x64xf32>
    %cst_130 = arith.constant 9.99999974E-6 : f32
    %207 = vector.broadcast %cst_130 : f32 to vector<1x64xf32>
    %208 = arith.addf %205, %207 : vector<1x64xf32>
    %209 = math.rsqrt %208 : vector<1x64xf32>
    %210 = arith.mulf %206, %209 : vector<1x64xf32>
    %c0_131 = arith.constant 0 : index
    %c0_132 = arith.constant 0 : index
    %211 = vector.load %arg9[%c0_131, %c0_132] : memref<1x64xf32, #tpu.memory_space<vmem>>, vector<1x64xf32>
    %212 = arith.mulf %198, %210 : vector<1x64xf32>
    %213 = arith.subf %211, %212 : vector<1x64xf32>
    %214 = vector.broadcast %210 : vector<1x64xf32> to vector<32x64xf32>
    %215 = arith.mulf %194, %214 : vector<32x64xf32>
    %216 = vector.broadcast %213 : vector<1x64xf32> to vector<32x64xf32>
    %217 = arith.addf %215, %216 : vector<32x64xf32>
    %cst_133 = arith.constant 0.000000e+00 : f32
    %218 = vector.broadcast %cst_133 : f32 to vector<32x64xf32>
    %219 = arith.maximumf %217, %218 : vector<32x64xf32>
    %220 = arith.truncf %219 : vector<32x64xf32> to vector<32x64xbf16>
    %c0_134 = arith.constant 0 : index
    %c0_135 = arith.constant 0 : index
    %c0_136 = arith.constant 0 : index
    %221 = vector.load %arg10[%c0_134, %c0_135, %c0_136] : memref<3x64x32xbf16, #tpu.memory_space<vmem>>, vector<1x64x32xbf16>
    %222 = vector.shape_cast %221 : vector<1x64x32xbf16> to vector<64x32xbf16>
    %cst_137 = arith.constant dense<0.000000e+00> : vector<32x32xf32>
    %223 = tpu.matmul %220, %222, %cst_137 {dimension_numbers = #tpu.dot_dimension_numbers<[1], [0], [0], [1], [0, 0, 1, 1], [], []>} : vector<32x64xbf16>, vector<64x32xbf16>, vector<32x32xf32> -> vector<32x32xf32>
    %c1_138 = arith.constant 1 : index
    %c0_139 = arith.constant 0 : index
    %c0_140 = arith.constant 0 : index
    %224 = vector.load %arg10[%c1_138, %c0_139, %c0_140] : memref<3x64x32xbf16, #tpu.memory_space<vmem>>, vector<1x64x32xbf16>
    %225 = vector.shape_cast %224 : vector<1x64x32xbf16> to vector<64x32xbf16>
    %cst_141 = arith.constant dense<0.000000e+00> : vector<32x32xf32>
    %226 = tpu.matmul %220, %225, %cst_141 {dimension_numbers = #tpu.dot_dimension_numbers<[1], [0], [0], [1], [0, 0, 1, 1], [], []>} : vector<32x64xbf16>, vector<64x32xbf16>, vector<32x32xf32> -> vector<32x32xf32>
    %c2_142 = arith.constant 2 : index
    %c0_143 = arith.constant 0 : index
    %c0_144 = arith.constant 0 : index
    %227 = vector.load %arg10[%c2_142, %c0_143, %c0_144] : memref<3x64x32xbf16, #tpu.memory_space<vmem>>, vector<1x64x32xbf16>
    %228 = vector.shape_cast %227 : vector<1x64x32xbf16> to vector<64x32xbf16>
    %cst_145 = arith.constant dense<0.000000e+00> : vector<32x32xf32>
    %229 = tpu.matmul %220, %228, %cst_145 {dimension_numbers = #tpu.dot_dimension_numbers<[1], [0], [0], [1], [0, 0, 1, 1], [], []>} : vector<32x64xbf16>, vector<64x32xbf16>, vector<32x32xf32> -> vector<32x32xf32>
    %cst_146 = arith.constant 0.000000e+00 : f32
    %230 = vector.broadcast %cst_146 : f32 to vector<28x32xf32>
    %c0_147 = arith.constant 0 : index
    %c0_148 = arith.constant 0 : index
    %231 = vector.load %arg19[%c0_147, %c0_148] : memref<28x32xf32, #tpu.memory_space<vmem>>, vector<28x32xf32>
    tpu.vector_store %arg19[%c0_147, %c0_148], %230 {strides = array<i32>} : memref<28x32xf32, #tpu.memory_space<vmem>>, vector<28x32xf32>,
    %c0_149 = arith.constant 0 : index
    %c0_150 = arith.constant 0 : index
    %232 = vector.load %arg19[%c0_149, %c0_150] : memref<28x32xf32, #tpu.memory_space<vmem>>, vector<28x32xf32>
    %233 = vector.extract_strided_slice %223 {offsets = [4, 0], sizes = [28, 32], strides = [1, 1]} : vector<32x32xf32> to vector<28x32xf32>
    %234 = arith.addf %232, %233 : vector<28x32xf32>
    %c0_151 = arith.constant 0 : index
    %c0_152 = arith.constant 0 : index
    %235 = vector.load %arg19[%c0_151, %c0_152] : memref<28x32xf32, #tpu.memory_space<vmem>>, vector<28x32xf32>
    tpu.vector_store %arg19[%c0_151, %c0_152], %234 {strides = array<i32>} : memref<28x32xf32, #tpu.memory_space<vmem>>, vector<28x32xf32>,
    %c0_153 = arith.constant 0 : index
    %c0_154 = arith.constant 0 : index
    %236 = vector.load %arg19[%c0_153, %c0_154] : memref<28x32xf32, #tpu.memory_space<vmem>>, vector<28x32xf32>
    %237 = vector.extract_strided_slice %226 {offsets = [2, 0], sizes = [28, 32], strides = [1, 1]} : vector<32x32xf32> to vector<28x32xf32>
    %238 = arith.addf %236, %237 : vector<28x32xf32>
    %c0_155 = arith.constant 0 : index
    %c0_156 = arith.constant 0 : index
    %239 = vector.load %arg19[%c0_155, %c0_156] : memref<28x32xf32, #tpu.memory_space<vmem>>, vector<28x32xf32>
    tpu.vector_store %arg19[%c0_155, %c0_156], %238 {strides = array<i32>} : memref<28x32xf32, #tpu.memory_space<vmem>>, vector<28x32xf32>,
    %c0_157 = arith.constant 0 : index
    %c0_158 = arith.constant 0 : index
    %240 = vector.load %arg19[%c0_157, %c0_158] : memref<28x32xf32, #tpu.memory_space<vmem>>, vector<28x32xf32>
    %241 = vector.extract_strided_slice %229 {offsets = [0, 0], sizes = [28, 32], strides = [1, 1]} : vector<32x32xf32> to vector<28x32xf32>
    %242 = arith.addf %240, %241 : vector<28x32xf32>
    %c0_159 = arith.constant 0 : index
    %c0_160 = arith.constant 0 : index
    %243 = vector.load %arg19[%c0_159, %c0_160] : memref<28x32xf32, #tpu.memory_space<vmem>>, vector<28x32xf32>
    tpu.vector_store %arg19[%c0_159, %c0_160], %242 {strides = array<i32>} : memref<28x32xf32, #tpu.memory_space<vmem>>, vector<28x32xf32>,
    %c0_161 = arith.constant 0 : index
    %c0_162 = arith.constant 0 : index
    %244 = vector.load %arg19[%c0_161, %c0_162] : memref<28x32xf32, #tpu.memory_space<vmem>>, vector<28x32xf32>
    %cst_163 = arith.constant dense<0.000000e+00> : vector<32xf32>
    %245 = vector.multi_reduction <add>, %244, %cst_163 [0] : vector<28x32xf32> to vector<32xf32>
    %246 = vector.shape_cast %245 : vector<32xf32> to vector<1x32xf32>
    %cst_164 = arith.constant 0.0357142873 : f32
    %247 = vector.broadcast %cst_164 : f32 to vector<1x32xf32>
    %248 = arith.mulf %246, %247 : vector<1x32xf32>
    %249 = vector.broadcast %248 : vector<1x32xf32> to vector<28x32xf32>
    %250 = arith.subf %244, %249 : vector<28x32xf32>
    %251 = arith.mulf %250, %250 : vector<28x32xf32>
    %cst_165 = arith.constant dense<0.000000e+00> : vector<32xf32>
    %252 = vector.multi_reduction <add>, %251, %cst_165 [0] : vector<28x32xf32> to vector<32xf32>
    %253 = vector.shape_cast %252 : vector<32xf32> to vector<1x32xf32>
    %cst_166 = arith.constant 0.0357142873 : f32
    %254 = vector.broadcast %cst_166 : f32 to vector<1x32xf32>
    %255 = arith.mulf %253, %254 : vector<1x32xf32>
    %c0_167 = arith.constant 0 : index
    %c0_168 = arith.constant 0 : index
    %256 = vector.load %arg11[%c0_167, %c0_168] : memref<1x32xf32, #tpu.memory_space<vmem>>, vector<1x32xf32>
    %cst_169 = arith.constant 9.99999974E-6 : f32
    %257 = vector.broadcast %cst_169 : f32 to vector<1x32xf32>
    %258 = arith.addf %255, %257 : vector<1x32xf32>
    %259 = math.rsqrt %258 : vector<1x32xf32>
    %260 = arith.mulf %256, %259 : vector<1x32xf32>
    %c0_170 = arith.constant 0 : index
    %c0_171 = arith.constant 0 : index
    %261 = vector.load %arg12[%c0_170, %c0_171] : memref<1x32xf32, #tpu.memory_space<vmem>>, vector<1x32xf32>
    %262 = arith.mulf %248, %260 : vector<1x32xf32>
    %263 = arith.subf %261, %262 : vector<1x32xf32>
    %264 = vector.broadcast %260 : vector<1x32xf32> to vector<28x32xf32>
    %265 = arith.mulf %244, %264 : vector<28x32xf32>
    %266 = vector.broadcast %263 : vector<1x32xf32> to vector<28x32xf32>
    %267 = arith.addf %265, %266 : vector<28x32xf32>
    %cst_172 = arith.constant 0.000000e+00 : f32
    %268 = vector.broadcast %cst_172 : f32 to vector<28x32xf32>
    %269 = arith.maximumf %267, %268 : vector<28x32xf32>
    %270 = arith.truncf %269 : vector<28x32xf32> to vector<28x32xbf16>
    %c0_173 = arith.constant 0 : index
    %c0_174 = arith.constant 0 : index
    %c0_175 = arith.constant 0 : index
    %271 = vector.load %arg13[%c0_173, %c0_174, %c0_175] : memref<4x32x1xbf16, #tpu.memory_space<vmem>>, vector<1x32x1xbf16>
    %272 = vector.shape_cast %271 : vector<1x32x1xbf16> to vector<32x1xbf16>
    %cst_176 = arith.constant dense<0.000000e+00> : vector<28x1xf32>
    %273 = tpu.matmul %270, %272, %cst_176 {dimension_numbers = #tpu.dot_dimension_numbers<[1], [0], [0], [1], [0, 0, 1, 1], [], []>} : vector<28x32xbf16>, vector<32x1xbf16>, vector<28x1xf32> -> vector<28x1xf32>
    %c1_177 = arith.constant 1 : index
    %c0_178 = arith.constant 0 : index
    %c0_179 = arith.constant 0 : index
    %274 = vector.load %arg13[%c1_177, %c0_178, %c0_179] : memref<4x32x1xbf16, #tpu.memory_space<vmem>>, vector<1x32x1xbf16>
    %275 = vector.shape_cast %274 : vector<1x32x1xbf16> to vector<32x1xbf16>
    %cst_180 = arith.constant dense<0.000000e+00> : vector<28x1xf32>
    %276 = tpu.matmul %270, %275, %cst_180 {dimension_numbers = #tpu.dot_dimension_numbers<[1], [0], [0], [1], [0, 0, 1, 1], [], []>} : vector<28x32xbf16>, vector<32x1xbf16>, vector<28x1xf32> -> vector<28x1xf32>
    %c2_181 = arith.constant 2 : index
    %c0_182 = arith.constant 0 : index
    %c0_183 = arith.constant 0 : index
    %277 = vector.load %arg13[%c2_181, %c0_182, %c0_183] : memref<4x32x1xbf16, #tpu.memory_space<vmem>>, vector<1x32x1xbf16>
    %278 = vector.shape_cast %277 : vector<1x32x1xbf16> to vector<32x1xbf16>
    %cst_184 = arith.constant dense<0.000000e+00> : vector<28x1xf32>
    %279 = tpu.matmul %270, %278, %cst_184 {dimension_numbers = #tpu.dot_dimension_numbers<[1], [0], [0], [1], [0, 0, 1, 1], [], []>} : vector<28x32xbf16>, vector<32x1xbf16>, vector<28x1xf32> -> vector<28x1xf32>
    %c3_185 = arith.constant 3 : index
    %c0_186 = arith.constant 0 : index
    %c0_187 = arith.constant 0 : index
    %280 = vector.load %arg13[%c3_185, %c0_186, %c0_187] : memref<4x32x1xbf16, #tpu.memory_space<vmem>>, vector<1x32x1xbf16>
    %281 = vector.shape_cast %280 : vector<1x32x1xbf16> to vector<32x1xbf16>
    %cst_188 = arith.constant dense<0.000000e+00> : vector<28x1xf32>
    %282 = tpu.matmul %270, %281, %cst_188 {dimension_numbers = #tpu.dot_dimension_numbers<[1], [0], [0], [1], [0, 0, 1, 1], [], []>} : vector<28x32xbf16>, vector<32x1xbf16>, vector<28x1xf32> -> vector<28x1xf32>
    %283 = vector.extract_strided_slice %276 {offsets = [0, 0], sizes = [2, 1], strides = [1, 1]} : vector<28x1xf32> to vector<2x1xf32>
    %c0_189 = arith.constant 0 : index
    %c0_190 = arith.constant 0 : index
    %284 = vector.load %arg15[%c0_189, %c0_190] : memref<56x1xf32, #tpu.memory_space<vmem>>, vector<2x1xf32>
    tpu.vector_store %arg15[%c0_189, %c0_190], %283 {strides = array<i32>} : memref<56x1xf32, #tpu.memory_space<vmem>>, vector<2x1xf32>,
    %285 = vector.extract_strided_slice %273 {offsets = [2, 0], sizes = [2, 1], strides = [1, 1]} : vector<28x1xf32> to vector<2x1xf32>
    %286 = vector.extract_strided_slice %279 {offsets = [0, 0], sizes = [2, 1], strides = [1, 1]} : vector<28x1xf32> to vector<2x1xf32>
    %287 = arith.addf %285, %286 : vector<2x1xf32>
    %c2_191 = arith.constant 2 : index
    %c0_192 = arith.constant 0 : index
    %288 = vector.load %arg15[%c2_191, %c0_192] : memref<56x1xf32, #tpu.memory_space<vmem>>, vector<2x1xf32>
    tpu.vector_store %arg15[%c2_191, %c0_192], %287 {strides = array<i32>} : memref<56x1xf32, #tpu.memory_space<vmem>>, vector<2x1xf32>,
    %289 = vector.extract_strided_slice %276 {offsets = [2, 0], sizes = [2, 1], strides = [1, 1]} : vector<28x1xf32> to vector<2x1xf32>
    %290 = vector.extract_strided_slice %282 {offsets = [0, 0], sizes = [2, 1], strides = [1, 1]} : vector<28x1xf32> to vector<2x1xf32>
    %291 = arith.addf %289, %290 : vector<2x1xf32>
    %c4_193 = arith.constant 4 : index
    %c0_194 = arith.constant 0 : index
    %292 = vector.load %arg15[%c4_193, %c0_194] : memref<56x1xf32, #tpu.memory_space<vmem>>, vector<2x1xf32>
    tpu.vector_store %arg15[%c4_193, %c0_194], %291 {strides = array<i32>} : memref<56x1xf32, #tpu.memory_space<vmem>>, vector<2x1xf32>,
    %293 = vector.extract_strided_slice %273 {offsets = [4, 0], sizes = [2, 1], strides = [1, 1]} : vector<28x1xf32> to vector<2x1xf32>
    %294 = vector.extract_strided_slice %279 {offsets = [2, 0], sizes = [2, 1], strides = [1, 1]} : vector<28x1xf32> to vector<2x1xf32>
    %295 = arith.addf %293, %294 : vector<2x1xf32>
    %c6_195 = arith.constant 6 : index
    %c0_196 = arith.constant 0 : index
    %296 = vector.load %arg15[%c6_195, %c0_196] : memref<56x1xf32, #tpu.memory_space<vmem>>, vector<2x1xf32>
    tpu.vector_store %arg15[%c6_195, %c0_196], %295 {strides = array<i32>} : memref<56x1xf32, #tpu.memory_space<vmem>>, vector<2x1xf32>,
    %297 = vector.extract_strided_slice %276 {offsets = [4, 0], sizes = [2, 1], strides = [1, 1]} : vector<28x1xf32> to vector<2x1xf32>
    %298 = vector.extract_strided_slice %282 {offsets = [2, 0], sizes = [2, 1], strides = [1, 1]} : vector<28x1xf32> to vector<2x1xf32>
    %299 = arith.addf %297, %298 : vector<2x1xf32>
    %c8_197 = arith.constant 8 : index
    %c0_198 = arith.constant 0 : index
    %300 = vector.load %arg15[%c8_197, %c0_198] : memref<56x1xf32, #tpu.memory_space<vmem>>, vector<2x1xf32>
    tpu.vector_store %arg15[%c8_197, %c0_198], %299 {strides = array<i32>} : memref<56x1xf32, #tpu.memory_space<vmem>>, vector<2x1xf32>,
    %301 = vector.extract_strided_slice %273 {offsets = [6, 0], sizes = [2, 1], strides = [1, 1]} : vector<28x1xf32> to vector<2x1xf32>
    %302 = vector.extract_strided_slice %279 {offsets = [4, 0], sizes = [2, 1], strides = [1, 1]} : vector<28x1xf32> to vector<2x1xf32>
    %303 = arith.addf %301, %302 : vector<2x1xf32>
    %c10_199 = arith.constant 10 : index
    %c0_200 = arith.constant 0 : index
    %304 = vector.load %arg15[%c10_199, %c0_200] : memref<56x1xf32, #tpu.memory_space<vmem>>, vector<2x1xf32>
    tpu.vector_store %arg15[%c10_199, %c0_200], %303 {strides = array<i32>} : memref<56x1xf32, #tpu.memory_space<vmem>>, vector<2x1xf32>,
    %305 = vector.extract_strided_slice %276 {offsets = [6, 0], sizes = [2, 1], strides = [1, 1]} : vector<28x1xf32> to vector<2x1xf32>
    %306 = vector.extract_strided_slice %282 {offsets = [4, 0], sizes = [2, 1], strides = [1, 1]} : vector<28x1xf32> to vector<2x1xf32>
    %307 = arith.addf %305, %306 : vector<2x1xf32>
    %c12_201 = arith.constant 12 : index
    %c0_202 = arith.constant 0 : index
    %308 = vector.load %arg15[%c12_201, %c0_202] : memref<56x1xf32, #tpu.memory_space<vmem>>, vector<2x1xf32>
    tpu.vector_store %arg15[%c12_201, %c0_202], %307 {strides = array<i32>} : memref<56x1xf32, #tpu.memory_space<vmem>>, vector<2x1xf32>,
    %309 = vector.extract_strided_slice %273 {offsets = [8, 0], sizes = [2, 1], strides = [1, 1]} : vector<28x1xf32> to vector<2x1xf32>
    %310 = vector.extract_strided_slice %279 {offsets = [6, 0], sizes = [2, 1], strides = [1, 1]} : vector<28x1xf32> to vector<2x1xf32>
    %311 = arith.addf %309, %310 : vector<2x1xf32>
    %c14_203 = arith.constant 14 : index
    %c0_204 = arith.constant 0 : index
    %312 = vector.load %arg15[%c14_203, %c0_204] : memref<56x1xf32, #tpu.memory_space<vmem>>, vector<2x1xf32>
    tpu.vector_store %arg15[%c14_203, %c0_204], %311 {strides = array<i32>} : memref<56x1xf32, #tpu.memory_space<vmem>>, vector<2x1xf32>,
    %313 = vector.extract_strided_slice %276 {offsets = [8, 0], sizes = [2, 1], strides = [1, 1]} : vector<28x1xf32> to vector<2x1xf32>
    %314 = vector.extract_strided_slice %282 {offsets = [6, 0], sizes = [2, 1], strides = [1, 1]} : vector<28x1xf32> to vector<2x1xf32>
    %315 = arith.addf %313, %314 : vector<2x1xf32>
    %c16_205 = arith.constant 16 : index
    %c0_206 = arith.constant 0 : index
    %316 = vector.load %arg15[%c16_205, %c0_206] : memref<56x1xf32, #tpu.memory_space<vmem>>, vector<2x1xf32>
    tpu.vector_store %arg15[%c16_205, %c0_206], %315 {strides = array<i32>} : memref<56x1xf32, #tpu.memory_space<vmem>>, vector<2x1xf32>,
    %317 = vector.extract_strided_slice %273 {offsets = [10, 0], sizes = [2, 1], strides = [1, 1]} : vector<28x1xf32> to vector<2x1xf32>
    %318 = vector.extract_strided_slice %279 {offsets = [8, 0], sizes = [2, 1], strides = [1, 1]} : vector<28x1xf32> to vector<2x1xf32>
    %319 = arith.addf %317, %318 : vector<2x1xf32>
    %c18_207 = arith.constant 18 : index
    %c0_208 = arith.constant 0 : index
    %320 = vector.load %arg15[%c18_207, %c0_208] : memref<56x1xf32, #tpu.memory_space<vmem>>, vector<2x1xf32>
    tpu.vector_store %arg15[%c18_207, %c0_208], %319 {strides = array<i32>} : memref<56x1xf32, #tpu.memory_space<vmem>>, vector<2x1xf32>,
    %321 = vector.extract_strided_slice %276 {offsets = [10, 0], sizes = [2, 1], strides = [1, 1]} : vector<28x1xf32> to vector<2x1xf32>
    %322 = vector.extract_strided_slice %282 {offsets = [8, 0], sizes = [2, 1], strides = [1, 1]} : vector<28x1xf32> to vector<2x1xf32>
    %323 = arith.addf %321, %322 : vector<2x1xf32>
    %c20_209 = arith.constant 20 : index
    %c0_210 = arith.constant 0 : index
    %324 = vector.load %arg15[%c20_209, %c0_210] : memref<56x1xf32, #tpu.memory_space<vmem>>, vector<2x1xf32>
    tpu.vector_store %arg15[%c20_209, %c0_210], %323 {strides = array<i32>} : memref<56x1xf32, #tpu.memory_space<vmem>>, vector<2x1xf32>,
    %325 = vector.extract_strided_slice %273 {offsets = [12, 0], sizes = [2, 1], strides = [1, 1]} : vector<28x1xf32> to vector<2x1xf32>
    %326 = vector.extract_strided_slice %279 {offsets = [10, 0], sizes = [2, 1], strides = [1, 1]} : vector<28x1xf32> to vector<2x1xf32>
    %327 = arith.addf %325, %326 : vector<2x1xf32>
    %c22_211 = arith.constant 22 : index
    %c0_212 = arith.constant 0 : index
    %328 = vector.load %arg15[%c22_211, %c0_212] : memref<56x1xf32, #tpu.memory_space<vmem>>, vector<2x1xf32>
    tpu.vector_store %arg15[%c22_211, %c0_212], %327 {strides = array<i32>} : memref<56x1xf32, #tpu.memory_space<vmem>>, vector<2x1xf32>,
    %329 = vector.extract_strided_slice %276 {offsets = [12, 0], sizes = [2, 1], strides = [1, 1]} : vector<28x1xf32> to vector<2x1xf32>
    %330 = vector.extract_strided_slice %282 {offsets = [10, 0], sizes = [2, 1], strides = [1, 1]} : vector<28x1xf32> to vector<2x1xf32>
    %331 = arith.addf %329, %330 : vector<2x1xf32>
    %c24_213 = arith.constant 24 : index
    %c0_214 = arith.constant 0 : index
    %332 = vector.load %arg15[%c24_213, %c0_214] : memref<56x1xf32, #tpu.memory_space<vmem>>, vector<2x1xf32>
    tpu.vector_store %arg15[%c24_213, %c0_214], %331 {strides = array<i32>} : memref<56x1xf32, #tpu.memory_space<vmem>>, vector<2x1xf32>,
    %333 = vector.extract_strided_slice %273 {offsets = [14, 0], sizes = [2, 1], strides = [1, 1]} : vector<28x1xf32> to vector<2x1xf32>
    %334 = vector.extract_strided_slice %279 {offsets = [12, 0], sizes = [2, 1], strides = [1, 1]} : vector<28x1xf32> to vector<2x1xf32>
    %335 = arith.addf %333, %334 : vector<2x1xf32>
    %c26_215 = arith.constant 26 : index
    %c0_216 = arith.constant 0 : index
    %336 = vector.load %arg15[%c26_215, %c0_216] : memref<56x1xf32, #tpu.memory_space<vmem>>, vector<2x1xf32>
    tpu.vector_store %arg15[%c26_215, %c0_216], %335 {strides = array<i32>} : memref<56x1xf32, #tpu.memory_space<vmem>>, vector<2x1xf32>,
    %337 = vector.extract_strided_slice %276 {offsets = [14, 0], sizes = [2, 1], strides = [1, 1]} : vector<28x1xf32> to vector<2x1xf32>
    %338 = vector.extract_strided_slice %282 {offsets = [12, 0], sizes = [2, 1], strides = [1, 1]} : vector<28x1xf32> to vector<2x1xf32>
    %339 = arith.addf %337, %338 : vector<2x1xf32>
    %c28_217 = arith.constant 28 : index
    %c0_218 = arith.constant 0 : index
    %340 = vector.load %arg15[%c28_217, %c0_218] : memref<56x1xf32, #tpu.memory_space<vmem>>, vector<2x1xf32>
    tpu.vector_store %arg15[%c28_217, %c0_218], %339 {strides = array<i32>} : memref<56x1xf32, #tpu.memory_space<vmem>>, vector<2x1xf32>,
    %341 = vector.extract_strided_slice %273 {offsets = [16, 0], sizes = [2, 1], strides = [1, 1]} : vector<28x1xf32> to vector<2x1xf32>
    %342 = vector.extract_strided_slice %279 {offsets = [14, 0], sizes = [2, 1], strides = [1, 1]} : vector<28x1xf32> to vector<2x1xf32>
    %343 = arith.addf %341, %342 : vector<2x1xf32>
    %c30_219 = arith.constant 30 : index
    %c0_220 = arith.constant 0 : index
    %344 = vector.load %arg15[%c30_219, %c0_220] : memref<56x1xf32, #tpu.memory_space<vmem>>, vector<2x1xf32>
    tpu.vector_store %arg15[%c30_219, %c0_220], %343 {strides = array<i32>} : memref<56x1xf32, #tpu.memory_space<vmem>>, vector<2x1xf32>,
    %345 = vector.extract_strided_slice %276 {offsets = [16, 0], sizes = [2, 1], strides = [1, 1]} : vector<28x1xf32> to vector<2x1xf32>
    %346 = vector.extract_strided_slice %282 {offsets = [14, 0], sizes = [2, 1], strides = [1, 1]} : vector<28x1xf32> to vector<2x1xf32>
    %347 = arith.addf %345, %346 : vector<2x1xf32>
    %c32 = arith.constant 32 : index
    %c0_221 = arith.constant 0 : index
    %348 = vector.load %arg15[%c32, %c0_221] : memref<56x1xf32, #tpu.memory_space<vmem>>, vector<2x1xf32>
    tpu.vector_store %arg15[%c32, %c0_221], %347 {strides = array<i32>} : memref<56x1xf32, #tpu.memory_space<vmem>>, vector<2x1xf32>,
    %349 = vector.extract_strided_slice %273 {offsets = [18, 0], sizes = [2, 1], strides = [1, 1]} : vector<28x1xf32> to vector<2x1xf32>
    %350 = vector.extract_strided_slice %279 {offsets = [16, 0], sizes = [2, 1], strides = [1, 1]} : vector<28x1xf32> to vector<2x1xf32>
    %351 = arith.addf %349, %350 : vector<2x1xf32>
    %c34 = arith.constant 34 : index
    %c0_222 = arith.constant 0 : index
    %352 = vector.load %arg15[%c34, %c0_222] : memref<56x1xf32, #tpu.memory_space<vmem>>, vector<2x1xf32>
    tpu.vector_store %arg15[%c34, %c0_222], %351 {strides = array<i32>} : memref<56x1xf32, #tpu.memory_space<vmem>>, vector<2x1xf32>,
    %353 = vector.extract_strided_slice %276 {offsets = [18, 0], sizes = [2, 1], strides = [1, 1]} : vector<28x1xf32> to vector<2x1xf32>
    %354 = vector.extract_strided_slice %282 {offsets = [16, 0], sizes = [2, 1], strides = [1, 1]} : vector<28x1xf32> to vector<2x1xf32>
    %355 = arith.addf %353, %354 : vector<2x1xf32>
    %c36 = arith.constant 36 : index
    %c0_223 = arith.constant 0 : index
    %356 = vector.load %arg15[%c36, %c0_223] : memref<56x1xf32, #tpu.memory_space<vmem>>, vector<2x1xf32>
    tpu.vector_store %arg15[%c36, %c0_223], %355 {strides = array<i32>} : memref<56x1xf32, #tpu.memory_space<vmem>>, vector<2x1xf32>,
    %357 = vector.extract_strided_slice %273 {offsets = [20, 0], sizes = [2, 1], strides = [1, 1]} : vector<28x1xf32> to vector<2x1xf32>
    %358 = vector.extract_strided_slice %279 {offsets = [18, 0], sizes = [2, 1], strides = [1, 1]} : vector<28x1xf32> to vector<2x1xf32>
    %359 = arith.addf %357, %358 : vector<2x1xf32>
    %c38 = arith.constant 38 : index
    %c0_224 = arith.constant 0 : index
    %360 = vector.load %arg15[%c38, %c0_224] : memref<56x1xf32, #tpu.memory_space<vmem>>, vector<2x1xf32>
    tpu.vector_store %arg15[%c38, %c0_224], %359 {strides = array<i32>} : memref<56x1xf32, #tpu.memory_space<vmem>>, vector<2x1xf32>,
    %361 = vector.extract_strided_slice %276 {offsets = [20, 0], sizes = [2, 1], strides = [1, 1]} : vector<28x1xf32> to vector<2x1xf32>
    %362 = vector.extract_strided_slice %282 {offsets = [18, 0], sizes = [2, 1], strides = [1, 1]} : vector<28x1xf32> to vector<2x1xf32>
    %363 = arith.addf %361, %362 : vector<2x1xf32>
    %c40 = arith.constant 40 : index
    %c0_225 = arith.constant 0 : index
    %364 = vector.load %arg15[%c40, %c0_225] : memref<56x1xf32, #tpu.memory_space<vmem>>, vector<2x1xf32>
    tpu.vector_store %arg15[%c40, %c0_225], %363 {strides = array<i32>} : memref<56x1xf32, #tpu.memory_space<vmem>>, vector<2x1xf32>,
    %365 = vector.extract_strided_slice %273 {offsets = [22, 0], sizes = [2, 1], strides = [1, 1]} : vector<28x1xf32> to vector<2x1xf32>
    %366 = vector.extract_strided_slice %279 {offsets = [20, 0], sizes = [2, 1], strides = [1, 1]} : vector<28x1xf32> to vector<2x1xf32>
    %367 = arith.addf %365, %366 : vector<2x1xf32>
    %c42 = arith.constant 42 : index
    %c0_226 = arith.constant 0 : index
    %368 = vector.load %arg15[%c42, %c0_226] : memref<56x1xf32, #tpu.memory_space<vmem>>, vector<2x1xf32>
    tpu.vector_store %arg15[%c42, %c0_226], %367 {strides = array<i32>} : memref<56x1xf32, #tpu.memory_space<vmem>>, vector<2x1xf32>,
    %369 = vector.extract_strided_slice %276 {offsets = [22, 0], sizes = [2, 1], strides = [1, 1]} : vector<28x1xf32> to vector<2x1xf32>
    %370 = vector.extract_strided_slice %282 {offsets = [20, 0], sizes = [2, 1], strides = [1, 1]} : vector<28x1xf32> to vector<2x1xf32>
    %371 = arith.addf %369, %370 : vector<2x1xf32>
    %c44 = arith.constant 44 : index
    %c0_227 = arith.constant 0 : index
    %372 = vector.load %arg15[%c44, %c0_227] : memref<56x1xf32, #tpu.memory_space<vmem>>, vector<2x1xf32>
    tpu.vector_store %arg15[%c44, %c0_227], %371 {strides = array<i32>} : memref<56x1xf32, #tpu.memory_space<vmem>>, vector<2x1xf32>,
    %373 = vector.extract_strided_slice %273 {offsets = [24, 0], sizes = [2, 1], strides = [1, 1]} : vector<28x1xf32> to vector<2x1xf32>
    %374 = vector.extract_strided_slice %279 {offsets = [22, 0], sizes = [2, 1], strides = [1, 1]} : vector<28x1xf32> to vector<2x1xf32>
    %375 = arith.addf %373, %374 : vector<2x1xf32>
    %c46 = arith.constant 46 : index
    %c0_228 = arith.constant 0 : index
    %376 = vector.load %arg15[%c46, %c0_228] : memref<56x1xf32, #tpu.memory_space<vmem>>, vector<2x1xf32>
    tpu.vector_store %arg15[%c46, %c0_228], %375 {strides = array<i32>} : memref<56x1xf32, #tpu.memory_space<vmem>>, vector<2x1xf32>,
    %377 = vector.extract_strided_slice %276 {offsets = [24, 0], sizes = [2, 1], strides = [1, 1]} : vector<28x1xf32> to vector<2x1xf32>
    %378 = vector.extract_strided_slice %282 {offsets = [22, 0], sizes = [2, 1], strides = [1, 1]} : vector<28x1xf32> to vector<2x1xf32>
    %379 = arith.addf %377, %378 : vector<2x1xf32>
    %c48 = arith.constant 48 : index
    %c0_229 = arith.constant 0 : index
    %380 = vector.load %arg15[%c48, %c0_229] : memref<56x1xf32, #tpu.memory_space<vmem>>, vector<2x1xf32>
    tpu.vector_store %arg15[%c48, %c0_229], %379 {strides = array<i32>} : memref<56x1xf32, #tpu.memory_space<vmem>>, vector<2x1xf32>,
    %381 = vector.extract_strided_slice %273 {offsets = [26, 0], sizes = [2, 1], strides = [1, 1]} : vector<28x1xf32> to vector<2x1xf32>
    %382 = vector.extract_strided_slice %279 {offsets = [24, 0], sizes = [2, 1], strides = [1, 1]} : vector<28x1xf32> to vector<2x1xf32>
    %383 = arith.addf %381, %382 : vector<2x1xf32>
    %c50 = arith.constant 50 : index
    %c0_230 = arith.constant 0 : index
    %384 = vector.load %arg15[%c50, %c0_230] : memref<56x1xf32, #tpu.memory_space<vmem>>, vector<2x1xf32>
    tpu.vector_store %arg15[%c50, %c0_230], %383 {strides = array<i32>} : memref<56x1xf32, #tpu.memory_space<vmem>>, vector<2x1xf32>,
    %385 = vector.extract_strided_slice %276 {offsets = [26, 0], sizes = [2, 1], strides = [1, 1]} : vector<28x1xf32> to vector<2x1xf32>
    %386 = vector.extract_strided_slice %282 {offsets = [24, 0], sizes = [2, 1], strides = [1, 1]} : vector<28x1xf32> to vector<2x1xf32>
    %387 = arith.addf %385, %386 : vector<2x1xf32>
    %c52 = arith.constant 52 : index
    %c0_231 = arith.constant 0 : index
    %388 = vector.load %arg15[%c52, %c0_231] : memref<56x1xf32, #tpu.memory_space<vmem>>, vector<2x1xf32>
    tpu.vector_store %arg15[%c52, %c0_231], %387 {strides = array<i32>} : memref<56x1xf32, #tpu.memory_space<vmem>>, vector<2x1xf32>,
    %389 = vector.extract_strided_slice %279 {offsets = [26, 0], sizes = [2, 1], strides = [1, 1]} : vector<28x1xf32> to vector<2x1xf32>
    %c54 = arith.constant 54 : index
    %c0_232 = arith.constant 0 : index
    %390 = vector.load %arg15[%c54, %c0_232] : memref<56x1xf32, #tpu.memory_space<vmem>>, vector<2x1xf32>
    tpu.vector_store %arg15[%c54, %c0_232], %389 {strides = array<i32>} : memref<56x1xf32, #tpu.memory_space<vmem>>, vector<2x1xf32>,
    %c0_233 = arith.constant 0 : index
    %c0_234 = arith.constant 0 : index
    %391 = vector.load %arg15[%c0_233, %c0_234] : memref<56x1xf32, #tpu.memory_space<vmem>>, vector<56x1xf32>
    %c0_235 = arith.constant 0 : index
    %c0_236 = arith.constant 0 : index
    %392 = vector.load %arg14[%c0_235, %c0_236] : memref<1x1xf32, #tpu.memory_space<vmem>>, vector<1x1xf32>
    %393 = vector.broadcast %392 : vector<1x1xf32> to vector<56x1xf32>
    %394 = arith.addf %391, %393 : vector<56x1xf32>
    %395 = math.tanh %394 : vector<56x1xf32>
    %c0_237 = arith.constant 0 : index
    %c0_238 = arith.constant 0 : index
    %396 = vector.load %arg15[%c0_237, %c0_238] : memref<56x1xf32, #tpu.memory_space<vmem>>, vector<56x1xf32>
    tpu.vector_store %arg15[%c0_237, %c0_238], %395 {strides = array<i32>} : memref<56x1xf32, #tpu.memory_space<vmem>>, vector<56x1xf32>,
    return
  }
}

</mosaic_0001>

<llo_original>
// kernel: tpu_custom_call.1
$region0: #{tpu_custom_call.1}
  #allocation0 [shape = 'u32[]', space=smem, size = 0x4, offset = 0x4, fixed_abs, tag = 'smem constant byte address 0x4 - core index']
  #allocation1 [shape = 'u32[144,128]{1,0:T(1,128)}', space=vmem, size = 0x12000, scoped, tag = 'internal scratch']
  #allocation2 [shape = 'f32[8,256]{1,0:T(8,128)}', space=vmem, size = 0x2000, scoped, tag = 'scratch operand']
  #allocation3 [shape = 'f32[16,128]{1,0:T(8,128)}', space=vmem, size = 0x2000, scoped, tag = 'scratch operand']
  #allocation4 [shape = 'f32[32,64]{1,0:T(8,128)}', space=vmem, size = 0x4000, scoped, tag = 'scratch operand']
  #allocation5 [shape = 'f32[28,32]{1,0:T(8,128)}', space=vmem, size = 0x4000, scoped, tag = 'scratch operand']
  #allocation6 [shape = 'f32[1,1]{1,0:T(1,128)S(1)}', space=vmem, size = 0x200, scoped, tag = 'scoped memory for tpu_custom_call.1']
  %s0 = inlined_call_operand.vmem [shape: f32[2,20], index: 0, kind: input, shape index: {}]
  %s1 = inlined_call_operand.vmem [shape: bf16[4,20,256], index: 1, kind: input, shape index: {}]
  %s2 = inlined_call_operand.vmem [shape: f32[1,256], index: 2, kind: input, shape index: {}]
  %s3 = inlined_call_operand.vmem [shape: f32[1,256], index: 3, kind: input, shape index: {}]
  %s4 = inlined_call_operand.vmem [shape: bf16[4,256,128], index: 4, kind: input, shape index: {}]
  %s5 = inlined_call_operand.vmem [shape: f32[1,128], index: 5, kind: input, shape index: {}]
  %s6 = inlined_call_operand.vmem [shape: f32[1,128], index: 6, kind: input, shape index: {}]
  %s7 = inlined_call_operand.vmem [shape: bf16[4,128,64], index: 7, kind: input, shape index: {}]
  %s8 = inlined_call_operand.vmem [shape: f32[1,64], index: 8, kind: input, shape index: {}]
  %s9 = inlined_call_operand.vmem [shape: f32[1,64], index: 9, kind: input, shape index: {}]
  %s10 = inlined_call_operand.vmem [shape: bf16[3,64,32], index: 10, kind: input, shape index: {}]
  %s11 = inlined_call_operand.vmem [shape: f32[1,32], index: 11, kind: input, shape index: {}]
  %s12 = inlined_call_operand.vmem [shape: f32[1,32], index: 12, kind: input, shape index: {}]
  %s13 = inlined_call_operand.vmem [shape: bf16[4,32,1], index: 13, kind: input, shape index: {}]
  %s14 = inlined_call_operand.<no memory space> [shape: f32[1,1], index: 14, kind: input, shape index: {}]
  %s15 = inlined_call_operand.vmem [shape: f32[56,1], index: 15, kind: output, shape index: {}]
  %s16 = sld [smem:[#allocation0]]
  $region70: #{tpu_custom_call.1} parent=0
    _
  %s18 = ssub.s32 1, %s16
  %s19 = scalar_select 0, %s18, %s16
  %v20 = vstv %s14
  %21 = vst [vmem:[#allocation6] sm:$0x1] %v20
  // Predicated region
  $region2: #{tpu_custom_call.1} parent=0 // pred_check
    _
  $region3: #{tpu_custom_call.1} parent=0 // pred_check_branch
    %23 = sbr.rel (0) target = $region5
  $region4: #{tpu_custom_call.1} parent=0 // pred_region
    _
  $region5: #{tpu_custom_call.1} parent=0 // pred_fallthru
    _
  // Predicated region
  $region6: #{tpu_custom_call.1} parent=0 // pred_check
    _
  $region7: #{tpu_custom_call.1} parent=0 // pred_check_branch
    %25 = sbr.rel (0) target = $region9
  $region8: #{tpu_custom_call.1} parent=0 // pred_region
    _
  $region9: #{tpu_custom_call.1} parent=0 // pred_fallthru
    _
  // Predicated region
  $region10: #{tpu_custom_call.1} parent=0 // pred_check
    _
  $region11: #{tpu_custom_call.1} parent=0 // pred_check_branch
    %27 = sbr.rel (0) target = $region13
  $region12: #{tpu_custom_call.1} parent=0 // pred_region
    _
  $region13: #{tpu_custom_call.1} parent=0 // pred_fallthru
    _
  // Predicated region
  $region14: #{tpu_custom_call.1} parent=0 // pred_check
    _
  $region15: #{tpu_custom_call.1} parent=0 // pred_check_branch
    %29 = sbr.rel (0) target = $region17
  $region16: #{tpu_custom_call.1} parent=0 // pred_region
    _
  $region17: #{tpu_custom_call.1} parent=0 // pred_fallthru
    _
  // Predicated region
  $region18: #{tpu_custom_call.1} parent=0 // pred_check
    _
  $region19: #{tpu_custom_call.1} parent=0 // pred_check_branch
    %31 = sbr.rel (0) target = $region21
  $region20: #{tpu_custom_call.1} parent=0 // pred_region
    _
  $region21: #{tpu_custom_call.1} parent=0 // pred_fallthru
    _
  // Predicated region
  $region22: #{tpu_custom_call.1} parent=0 // pred_check
    _
  $region23: #{tpu_custom_call.1} parent=0 // pred_check_branch
    %33 = sbr.rel (0) target = $region25
  $region24: #{tpu_custom_call.1} parent=0 // pred_region
    _
  $region25: #{tpu_custom_call.1} parent=0 // pred_fallthru
    _
  // Predicated region
  $region26: #{tpu_custom_call.1} parent=0 // pred_check
    _
  $region27: #{tpu_custom_call.1} parent=0 // pred_check_branch
    %35 = sbr.rel (0) target = $region29
  $region28: #{tpu_custom_call.1} parent=0 // pred_region
    _
  $region29: #{tpu_custom_call.1} parent=0 // pred_fallthru
    _
  // Predicated region
  $region30: #{tpu_custom_call.1} parent=0 // pred_check
    _
  $region31: #{tpu_custom_call.1} parent=0 // pred_check_branch
    %37 = sbr.rel (0) target = $region33
  $region32: #{tpu_custom_call.1} parent=0 // pred_region
    _
  $region33: #{tpu_custom_call.1} parent=0 // pred_fallthru
    _
  // Predicated region
  $region34: #{tpu_custom_call.1} parent=0 // pred_check
    _
  $region35: #{tpu_custom_call.1} parent=0 // pred_check_branch
    %39 = sbr.rel (0) target = $region37
  $region36: #{tpu_custom_call.1} parent=0 // pred_region
    _
  $region37: #{tpu_custom_call.1} parent=0 // pred_fallthru
    _
  // Predicated region
  $region38: #{tpu_custom_call.1} parent=0 // pred_check
    _
  $region39: #{tpu_custom_call.1} parent=0 // pred_check_branch
    %41 = sbr.rel (0) target = $region41
  $region40: #{tpu_custom_call.1} parent=0 // pred_region
    _
  $region41: #{tpu_custom_call.1} parent=0 // pred_fallthru
    _
  // Predicated region
  $region42: #{tpu_custom_call.1} parent=0 // pred_check
    _
  $region43: #{tpu_custom_call.1} parent=0 // pred_check_branch
    %43 = sbr.rel (0) target = $region45
  $region44: #{tpu_custom_call.1} parent=0 // pred_region
    _
  $region45: #{tpu_custom_call.1} parent=0 // pred_fallthru
    _
  // Predicated region
  $region46: #{tpu_custom_call.1} parent=0 // pred_check
    _
  $region47: #{tpu_custom_call.1} parent=0 // pred_check_branch
    %45 = sbr.rel (0) target = $region49
  $region48: #{tpu_custom_call.1} parent=0 // pred_region
    _
  $region49: #{tpu_custom_call.1} parent=0 // pred_fallthru
    _
  // Predicated region
  $region50: #{tpu_custom_call.1} parent=0 // pred_check
    _
  $region51: #{tpu_custom_call.1} parent=0 // pred_check_branch
    %47 = sbr.rel (0) target = $region53
  $region52: #{tpu_custom_call.1} parent=0 // pred_region
    _
  $region53: #{tpu_custom_call.1} parent=0 // pred_fallthru
    _
  // Predicated region
  $region54: #{tpu_custom_call.1} parent=0 // pred_check
    _
  $region55: #{tpu_custom_call.1} parent=0 // pred_check_branch
    %49 = sbr.rel (0) target = $region57
  $region56: #{tpu_custom_call.1} parent=0 // pred_region
    _
  $region57: #{tpu_custom_call.1} parent=0 // pred_fallthru
    _
  // Predicated region
  $region58: #{tpu_custom_call.1} parent=0 // pred_check
    _
  $region59: #{tpu_custom_call.1} parent=0 // pred_check_branch
    %51 = sbr.rel (0) target = $region61
  $region60: #{tpu_custom_call.1} parent=0 // pred_region
    _
  $region61: #{tpu_custom_call.1} parent=0 // pred_fallthru
    _
  %v53 = vld [vmem:[%s0] sm:$0x3]
  %v54 = vpack.c.bf16 %v53, %v53
  %v55 = vld [vmem:[%s1] sm:$0xff]
  %v56 = vld [vmem:[%s1 + $0x8] sm:$0xff]
  %v57 = vld [vmem:[%s1 + $0x10] sm:$0x33]
  %v61 = vunpack.c.l.b16 %v55
  %v62 = vunpack.c.h.b16 %v55
  %v63 = vunpack.c.l.b16 %v56
  %v64 = vunpack.c.h.b16 %v56
  %v65 = vunpack.c.l.b16 %v57
  %v66 = vunpack.c.h.b16 %v57
  %v67 = vpack.c.b16 %v63, %v61
  %v68 = vpack.c.b16 %v64, %v62
  %v69 = vpack.c.b16 %v65, %v65
  %v70 = vpack.c.b16 %v66, %v66
  %vm73 = vcmask 162816
  %v75 = vsel %vm73, %v54, 0
  %vm77 = vcmask 1041408
  %v79 = vsel %vm77, %v69, 0
  %v82 = vsel %vm77, %v70, 0
  %84 = vmatprep.subr.bf16.mxu0 %v68
  %85 = vmatpush1.bf16.msra.mxu0 %v67
  %86 = vmatprep.subr.bf16.mxu0 %v82
  %87 = vmatpush1.bf16.msra.mxu0 %v79
  %88 = vmatprep.subr.bf16.mxu0 0
  %89 = vmatpush1.bf16.msra.mxu0 0
  %90 = vmatprep.subr.bf16.mxu0 0
  %91 = vmatpush1.bf16.msra.mxu0 0
  %92 = vmatprep.subr.bf16.mxu0 0
  %93 = vmatpush1.bf16.msra.mxu0 0
  %94 = vmatprep.subr.bf16.mxu0 0
  %95 = vmatpush1.bf16.msra.mxu0 0
  %96 = vmatprep.subr.bf16.mxu0 0
  %97 = vmatpush1.bf16.msra.mxu0 0
  %98 = vmatprep.subr.bf16.mxu0 0
  %99 = vmatpush1.bf16.msra.mxu0 0
  %100 = vmatprep.subr.bf16.mxu0 0
  %101 = vmatpush1.bf16.msra.mxu0 0
  %102 = vmatprep.subr.bf16.mxu0 0
  %103 = vmatpush1.bf16.msra.mxu0 0
  %104 = vmatprep.subr.bf16.mxu0 0
  %105 = vmatpush1.bf16.msra.mxu0 0
  %106 = vmatprep.subr.bf16.mxu0 0
  %107 = vmatpush1.bf16.msra.mxu0 0
  %108 = vmatprep.subr.bf16.mxu0 0
  %109 = vmatpush1.bf16.msra.mxu0 0
  %110 = vmatprep.subr.bf16.mxu0 0
  %111 = vmatpush1.bf16.msra.mxu0 0
  %112 = vmatprep.subr.bf16.mxu0 0
  %113 = vmatpush1.bf16.msra.mxu0 0
  %114 = vmatprep.subr.bf16.mxu0 0
  %115 = vmatpush1.bf16.msra.mxu0 0
  %116 = vmatprep.mubr.bf16.mxu0 0
  %117 = vmatmul.mubr.bf16.gmra.mrb[0].mxu0 %v75
  %v118 = vpop.f32.mrb[0].mxu0
  %v119 = vadd.f32 0.0, %v118
  %v120 = vpop.f32.mrb[0].mxu0
  %v121 = vadd.f32 0.0, %v120
  %v122 = vpop.f32.mrb[0].mxu0
  %v123 = vpop.f32.mrb[0].mxu0
  %124 = vdwg.mxu0
  %s125 = scalar_lea.vmem %s1, 24
  %v126 = vld [vmem:[%s125] sm:$0xff]
  %v127 = vld [vmem:[%s125 + $0x8] sm:$0xff]
  %v128 = vld [vmem:[%s125 + $0x10] sm:$0x33]
  %v132 = vunpack.c.l.b16 %v126
  %v133 = vunpack.c.h.b16 %v126
  %v134 = vunpack.c.l.b16 %v127
  %v135 = vunpack.c.h.b16 %v127
  %v136 = vunpack.c.l.b16 %v128
  %v137 = vunpack.c.h.b16 %v128
  %v138 = vpack.c.b16 %v134, %v132
  %v139 = vpack.c.b16 %v135, %v133
  %v140 = vpack.c.b16 %v136, %v136
  %v141 = vpack.c.b16 %v137, %v137
  %v145 = vsel %vm77, %v140, 0
  %v148 = vsel %vm77, %v141, 0
  %150 = vmatprep.subr.bf16.mxu0 %v139
  %151 = vmatpush1.bf16.msra.mxu0 %v138
  %152 = vmatprep.subr.bf16.mxu0 %v148
  %153 = vmatpush1.bf16.msra.mxu0 %v145
  %154 = vmatprep.subr.bf16.mxu0 0
  %155 = vmatpush1.bf16.msra.mxu0 0
  %156 = vmatprep.subr.bf16.mxu0 0
  %157 = vmatpush1.bf16.msra.mxu0 0
  %158 = vmatprep.subr.bf16.mxu0 0
  %159 = vmatpush1.bf16.msra.mxu0 0
  %160 = vmatprep.subr.bf16.mxu0 0
  %161 = vmatpush1.bf16.msra.mxu0 0
  %162 = vmatprep.subr.bf16.mxu0 0
  %163 = vmatpush1.bf16.msra.mxu0 0
  %164 = vmatprep.subr.bf16.mxu0 0
  %165 = vmatpush1.bf16.msra.mxu0 0
  %166 = vmatprep.subr.bf16.mxu0 0
  %167 = vmatpush1.bf16.msra.mxu0 0
  %168 = vmatprep.subr.bf16.mxu0 0
  %169 = vmatpush1.bf16.msra.mxu0 0
  %170 = vmatprep.subr.bf16.mxu0 0
  %171 = vmatpush1.bf16.msra.mxu0 0
  %172 = vmatprep.subr.bf16.mxu0 0
  %173 = vmatpush1.bf16.msra.mxu0 0
  %174 = vmatprep.subr.bf16.mxu0 0
  %175 = vmatpush1.bf16.msra.mxu0 0
  %176 = vmatprep.subr.bf16.mxu0 0
  %177 = vmatpush1.bf16.msra.mxu0 0
  %178 = vmatprep.subr.bf16.mxu0 0
  %179 = vmatpush1.bf16.msra.mxu0 0
  %180 = vmatprep.subr.bf16.mxu0 0
  %181 = vmatpush1.bf16.msra.mxu0 0
  %182 = vmatprep.mubr.bf16.mxu0 0
  %183 = vmatmul.mubr.bf16.gmra.mrb[0].mxu0 %v75
  %v184 = vpop.f32.mrb[0].mxu0
  %v185 = vadd.f32 0.0, %v184
  %v186 = vpop.f32.mrb[0].mxu0
  %v187 = vadd.f32 0.0, %v186
  %v188 = vpop.f32.mrb[0].mxu0
  %v189 = vpop.f32.mrb[0].mxu0
  %190 = vdwg.mxu0
  %s191 = scalar_lea.vmem %s1, 48
  %v192 = vld [vmem:[%s191] sm:$0xff]
  %v193 = vld [vmem:[%s191 + $0x8] sm:$0xff]
  %v194 = vld [vmem:[%s191 + $0x10] sm:$0x33]
  %v198 = vunpack.c.l.b16 %v192
  %v199 = vunpack.c.h.b16 %v192
  %v200 = vunpack.c.l.b16 %v193
  %v201 = vunpack.c.h.b16 %v193
  %v202 = vunpack.c.l.b16 %v194
  %v203 = vunpack.c.h.b16 %v194
  %v204 = vpack.c.b16 %v200, %v198
  %v205 = vpack.c.b16 %v201, %v199
  %v206 = vpack.c.b16 %v202, %v202
  %v207 = vpack.c.b16 %v203, %v203
  %v211 = vsel %vm77, %v206, 0
  %v214 = vsel %vm77, %v207, 0
  %216 = vmatprep.subr.bf16.mxu0 %v205
  %217 = vmatpush1.bf16.msra.mxu0 %v204
  %218 = vmatprep.subr.bf16.mxu0 %v214
  %219 = vmatpush1.bf16.msra.mxu0 %v211
  %220 = vmatprep.subr.bf16.mxu0 0
  %221 = vmatpush1.bf16.msra.mxu0 0
  %222 = vmatprep.subr.bf16.mxu0 0
  %223 = vmatpush1.bf16.msra.mxu0 0
  %224 = vmatprep.subr.bf16.mxu0 0
  %225 = vmatpush1.bf16.msra.mxu0 0
  %226 = vmatprep.subr.bf16.mxu0 0
  %227 = vmatpush1.bf16.msra.mxu0 0
  %228 = vmatprep.subr.bf16.mxu0 0
  %229 = vmatpush1.bf16.msra.mxu0 0
  %230 = vmatprep.subr.bf16.mxu0 0
  %231 = vmatpush1.bf16.msra.mxu0 0
  %232 = vmatprep.subr.bf16.mxu0 0
  %233 = vmatpush1.bf16.msra.mxu0 0
  %234 = vmatprep.subr.bf16.mxu0 0
  %235 = vmatpush1.bf16.msra.mxu0 0
  %236 = vmatprep.subr.bf16.mxu0 0
  %237 = vmatpush1.bf16.msra.mxu0 0
  %238 = vmatprep.subr.bf16.mxu0 0
  %239 = vmatpush1.bf16.msra.mxu0 0
  %240 = vmatprep.subr.bf16.mxu0 0
  %241 = vmatpush1.bf16.msra.mxu0 0
  %242 = vmatprep.subr.bf16.mxu0 0
  %243 = vmatpush1.bf16.msra.mxu0 0
  %244 = vmatprep.subr.bf16.mxu0 0
  %245 = vmatpush1.bf16.msra.mxu0 0
  %246 = vmatprep.subr.bf16.mxu0 0
  %247 = vmatpush1.bf16.msra.mxu0 0
  %248 = vmatprep.mubr.bf16.mxu0 0
  %249 = vmatmul.mubr.bf16.gmra.mrb[0].mxu0 %v75
  %v250 = vpop.f32.mrb[0].mxu0
  %v251 = vadd.f32 0.0, %v250
  %v252 = vpop.f32.mrb[0].mxu0
  %v253 = vadd.f32 0.0, %v252
  %v254 = vpop.f32.mrb[0].mxu0
  %v255 = vpop.f32.mrb[0].mxu0
  %256 = vdwg.mxu0
  %s257 = scalar_lea.vmem %s1, 72
  %v258 = vld [vmem:[%s257] sm:$0xff]
  %v259 = vld [vmem:[%s257 + $0x8] sm:$0xff]
  %v260 = vld [vmem:[%s257 + $0x10] sm:$0x33]
  %v264 = vunpack.c.l.b16 %v258
  %v265 = vunpack.c.h.b16 %v258
  %v266 = vunpack.c.l.b16 %v259
  %v267 = vunpack.c.h.b16 %v259
  %v268 = vunpack.c.l.b16 %v260
  %v269 = vunpack.c.h.b16 %v260
  %v270 = vpack.c.b16 %v266, %v264
  %v271 = vpack.c.b16 %v267, %v265
  %v272 = vpack.c.b16 %v268, %v268
  %v273 = vpack.c.b16 %v269, %v269
  %v277 = vsel %vm77, %v272, 0
  %v280 = vsel %vm77, %v273, 0
  %282 = vmatprep.subr.bf16.mxu0 %v271
  %283 = vmatpush1.bf16.msra.mxu0 %v270
  %284 = vmatprep.subr.bf16.mxu0 %v280
  %285 = vmatpush1.bf16.msra.mxu0 %v277
  %286 = vmatprep.subr.bf16.mxu0 0
  %287 = vmatpush1.bf16.msra.mxu0 0
  %288 = vmatprep.subr.bf16.mxu0 0
  %289 = vmatpush1.bf16.msra.mxu0 0
  %290 = vmatprep.subr.bf16.mxu0 0
  %291 = vmatpush1.bf16.msra.mxu0 0
  %292 = vmatprep.subr.bf16.mxu0 0
  %293 = vmatpush1.bf16.msra.mxu0 0
  %294 = vmatprep.subr.bf16.mxu0 0
  %295 = vmatpush1.bf16.msra.mxu0 0
  %296 = vmatprep.subr.bf16.mxu0 0
  %297 = vmatpush1.bf16.msra.mxu0 0
  %298 = vmatprep.subr.bf16.mxu0 0
  %299 = vmatpush1.bf16.msra.mxu0 0
  %300 = vmatprep.subr.bf16.mxu0 0
  %301 = vmatpush1.bf16.msra.mxu0 0
  %302 = vmatprep.subr.bf16.mxu0 0
  %303 = vmatpush1.bf16.msra.mxu0 0
  %304 = vmatprep.subr.bf16.mxu0 0
  %305 = vmatpush1.bf16.msra.mxu0 0
  %306 = vmatprep.subr.bf16.mxu0 0
  %307 = vmatpush1.bf16.msra.mxu0 0
  %308 = vmatprep.subr.bf16.mxu0 0
  %309 = vmatpush1.bf16.msra.mxu0 0
  %310 = vmatprep.subr.bf16.mxu0 0
  %311 = vmatpush1.bf16.msra.mxu0 0
  %312 = vmatprep.subr.bf16.mxu0 0
  %313 = vmatpush1.bf16.msra.mxu0 0
  %314 = vmatprep.mubr.bf16.mxu0 0
  %315 = vmatmul.mubr.bf16.gmra.mrb[0].mxu0 %v75
  %v316 = vpop.f32.mrb[0].mxu0
  %v317 = vadd.f32 0.0, %v316
  %v318 = vpop.f32.mrb[0].mxu0
  %v319 = vadd.f32 0.0, %v318
  %v320 = vpop.f32.mrb[0].mxu0
  %v321 = vpop.f32.mrb[0].mxu0
  %322 = vdwg.mxu0
  %323 = vst [vmem:[#allocation2] sm:$0xff] 0.0
  %324 = vst [vmem:[#allocation2 + $0x8] sm:$0xff] 0.0
  %v325 = vld [vmem:[#allocation2] sm:$0x3]
  %v326 = vld [vmem:[#allocation2 + $0x8] sm:$0x3]
  %v327 = vadd.f32 %v325, %v119
  %v328 = vadd.f32 %v326, %v121
  %329 = vst [vmem:[#allocation2] sm:$0x3] %v327
  %330 = vst [vmem:[#allocation2 + $0x8] sm:$0x3] %v328
  %v331 = vld [vmem:[#allocation2] sm:$0xc]
  %v332 = vld [vmem:[#allocation2 + $0x8] sm:$0xc]
  %v335 = vrot.slane %v185, 6
  %v336 = vrot.slane %v187, 6
  %v339 = vadd.f32 %v331, %v335
  %v340 = vadd.f32 %v332, %v336
  %341 = vst [vmem:[#allocation2] sm:$0xc] %v339
  %342 = vst [vmem:[#allocation2 + $0x8] sm:$0xc] %v340
  %v343 = vld [vmem:[#allocation2] sm:$0x30]
  %v344 = vld [vmem:[#allocation2 + $0x8] sm:$0x30]
  %v347 = vrot.slane %v251, 4
  %v348 = vrot.slane %v253, 4
  %v351 = vadd.f32 %v343, %v347
  %v352 = vadd.f32 %v344, %v348
  %353 = vst [vmem:[#allocation2] sm:$0x30] %v351
  %354 = vst [vmem:[#allocation2 + $0x8] sm:$0x30] %v352
  %v355 = vld [vmem:[#allocation2] sm:$0xc0]
  %v356 = vld [vmem:[#allocation2 + $0x8] sm:$0xc0]
  %v359 = vrot.slane %v317, 2
  %v360 = vrot.slane %v319, 2
  %v363 = vadd.f32 %v355, %v359
  %v364 = vadd.f32 %v356, %v360
  %365 = vst [vmem:[#allocation2] sm:$0xc0] %v363
  %366 = vst [vmem:[#allocation2 + $0x8] sm:$0xc0] %v364
  %v367 = vld [vmem:[#allocation2] sm:$0xff]
  %v368 = vld [vmem:[#allocation2 + $0x8] sm:$0xff]
  %v369 = vrot.slane %v367, 4
  %v370 = vadd.f32 %v367, %v369
  %v371 = vrot.slane %v370, 2
  %v372 = vadd.f32 %v370, %v371
  %v373 = vrot.slane %v372, 1
  %v374 = vadd.f32 %v372, %v373
  %v375 = vrot.slane %v368, 4
  %v376 = vadd.f32 %v368, %v375
  %v377 = vrot.slane %v376, 2
  %v378 = vadd.f32 %v376, %v377
  %v379 = vrot.slane %v378, 1
  %v380 = vadd.f32 %v378, %v379
  %v381 = vmul.f32 %v374, 0.125
  %v382 = vmul.f32 %v380, 0.125
  %v383 = vsub.f32 %v367, %v381
  %v384 = vsub.f32 %v368, %v382
  %v385 = vmul.f32 %v383, %v383
  %v386 = vmul.f32 %v384, %v384
  %v387 = vrot.slane %v385, 4
  %v388 = vadd.f32 %v385, %v387
  %v389 = vrot.slane %v388, 2
  %v390 = vadd.f32 %v388, %v389
  %v391 = vrot.slane %v390, 1
  %v392 = vadd.f32 %v390, %v391
  %v393 = vrot.slane %v386, 4
  %v394 = vadd.f32 %v386, %v393
  %v395 = vrot.slane %v394, 2
  %v396 = vadd.f32 %v394, %v395
  %v397 = vrot.slane %v396, 1
  %v398 = vadd.f32 %v396, %v397
  %v399 = vmul.f32 %v392, 0.125
  %v400 = vmul.f32 %v398, 0.125
  %v401 = vld [vmem:[%s2] sm:$0x3]
  %v402 = vadd.f32 %v399, 1e-05
  %v403 = vadd.f32 %v400, 1e-05
  %v404 = vrsqrt.pop %v402
  %v405 = vrsqrt.pop %v403
  %v408 = vcombine.low %v404, %v405
  %v410 = vunpack.c.l.s4 1966171168
  %v411 = vunpack.c.0.s8 %v410
  %v412 = vlaneseq
  %v413 = vshrl.u32 %v412, 7
  %v414 = vsub.s32 %v411, %v413
  %v415 = vrot.slane %v408, %v414
  %v417 = vunpack.c.l.s4 1966171168
  %v418 = vunpack.c.0.s8 %v417
  %v419 = vlaneseq
  %v420 = vshrl.u32 %v419, 7
  %v421 = vsub.s32 %v418, %v420
  %v422 = vrot.slane %v415, %v421
  %v424 = vmul.f32 %v401, %v422
  %v425 = vld [vmem:[%s3] sm:$0x3]
  %v427 = vlaneseq
  %v428 = vshrl.u32 %v427, 7
  %v429 = vsub.s32 0, %v428
  %v430 = vrot.slane %v424, %v429
  %v431 = vlaneseq
  %v432 = vshrl.u32 %v431, 7
  %v433 = vsub.s32 1, %v432
  %v434 = vrot.slane %v424, %v433
  %v437 = vmul.f32 %v381, %v430
  %v438 = vmul.f32 %v382, %v434
  %v441 = vcombine.low %v437, %v438
  %v443 = vunpack.c.l.s4 1966171168
  %v444 = vunpack.c.0.s8 %v443
  %v445 = vlaneseq
  %v446 = vshrl.u32 %v445, 7
  %v447 = vsub.s32 %v444, %v446
  %v448 = vrot.slane %v441, %v447
  %v450 = vunpack.c.l.s4 1966171168
  %v451 = vunpack.c.0.s8 %v450
  %v452 = vlaneseq
  %v453 = vshrl.u32 %v452, 7
  %v454 = vsub.s32 %v451, %v453
  %v455 = vrot.slane %v448, %v454
  %v457 = vsub.f32 %v425, %v455
  %v458 = vmul.f32 %v367, %v430
  %v459 = vmul.f32 %v368, %v434
  %v461 = vlaneseq
  %v462 = vshrl.u32 %v461, 7
  %v463 = vsub.s32 0, %v462
  %v464 = vrot.slane %v457, %v463
  %v465 = vlaneseq
  %v466 = vshrl.u32 %v465, 7
  %v467 = vsub.s32 1, %v466
  %v468 = vrot.slane %v457, %v467
  %v471 = vadd.f32 %v458, %v464
  %v472 = vadd.f32 %v459, %v468
  %v473 = vmax.f32 %v471, 0.0
  %v474 = vmax.f32 %v472, 0.0
  %v475 = vpack.c.bf16 %v473, %v473
  %v476 = vpack.c.bf16 %v474, %v474
  %v477 = vld [vmem:[%s4] sm:$0xf]
  %v478 = vld [vmem:[%s4 + $0x4] sm:$0xf]
  %v479 = vld [vmem:[%s4 + $0x8] sm:$0xf]
  %v480 = vld [vmem:[%s4 + $0xc] sm:$0xf]
  %v481 = vld [vmem:[%s4 + $0x10] sm:$0xf]
  %v482 = vld [vmem:[%s4 + $0x14] sm:$0xf]
  %v483 = vld [vmem:[%s4 + $0x18] sm:$0xf]
  %v484 = vld [vmem:[%s4 + $0x1c] sm:$0xf]
  %v485 = vld [vmem:[%s4 + $0x20] sm:$0xf]
  %v486 = vld [vmem:[%s4 + $0x24] sm:$0xf]
  %v487 = vld [vmem:[%s4 + $0x28] sm:$0xf]
  %v488 = vld [vmem:[%s4 + $0x2c] sm:$0xf]
  %v489 = vld [vmem:[%s4 + $0x30] sm:$0xf]
  %v490 = vld [vmem:[%s4 + $0x34] sm:$0xf]
  %v491 = vld [vmem:[%s4 + $0x38] sm:$0xf]
  %v492 = vld [vmem:[%s4 + $0x3c] sm:$0xf]
  %v493 = vld [vmem:[%s4 + $0x40] sm:$0xf]
  %v494 = vld [vmem:[%s4 + $0x44] sm:$0xf]
  %v495 = vld [vmem:[%s4 + $0x48] sm:$0xf]
  %v496 = vld [vmem:[%s4 + $0x4c] sm:$0xf]
  %v497 = vld [vmem:[%s4 + $0x50] sm:$0xf]
  %v498 = vld [vmem:[%s4 + $0x54] sm:$0xf]
  %v499 = vld [vmem:[%s4 + $0x58] sm:$0xf]
  %v500 = vld [vmem:[%s4 + $0x5c] sm:$0xf]
  %v501 = vld [vmem:[%s4 + $0x60] sm:$0xf]
  %v502 = vld [vmem:[%s4 + $0x64] sm:$0xf]
  %v503 = vld [vmem:[%s4 + $0x68] sm:$0xf]
  %v504 = vld [vmem:[%s4 + $0x6c] sm:$0xf]
  %v505 = vld [vmem:[%s4 + $0x70] sm:$0xf]
  %v506 = vld [vmem:[%s4 + $0x74] sm:$0xf]
  %v507 = vld [vmem:[%s4 + $0x78] sm:$0xf]
  %v508 = vld [vmem:[%s4 + $0x7c] sm:$0xf]
  %v541 = vunpack.c.l.b16 %v477
  %v542 = vunpack.c.l.b16 %v478
  %v543 = vunpack.c.l.b16 %v479
  %v544 = vunpack.c.l.b16 %v480
  %v545 = vunpack.c.l.b16 %v481
  %v546 = vunpack.c.l.b16 %v482
  %v547 = vunpack.c.l.b16 %v483
  %v548 = vunpack.c.l.b16 %v484
  %v549 = vunpack.c.l.b16 %v485
  %v550 = vunpack.c.l.b16 %v486
  %v551 = vunpack.c.l.b16 %v487
  %v552 = vunpack.c.l.b16 %v488
  %v553 = vunpack.c.l.b16 %v489
  %v554 = vunpack.c.l.b16 %v490
  %v555 = vunpack.c.l.b16 %v491
  %v556 = vunpack.c.l.b16 %v492
  %v557 = vunpack.c.l.b16 %v493
  %v558 = vunpack.c.l.b16 %v494
  %v559 = vunpack.c.l.b16 %v495
  %v560 = vunpack.c.l.b16 %v496
  %v561 = vunpack.c.l.b16 %v497
  %v562 = vunpack.c.l.b16 %v498
  %v563 = vunpack.c.l.b16 %v499
  %v564 = vunpack.c.l.b16 %v500
  %v565 = vunpack.c.l.b16 %v501
  %v566 = vunpack.c.l.b16 %v502
  %v567 = vunpack.c.l.b16 %v503
  %v568 = vunpack.c.l.b16 %v504
  %v569 = vunpack.c.l.b16 %v505
  %v570 = vunpack.c.l.b16 %v506
  %v571 = vunpack.c.l.b16 %v507
  %v572 = vunpack.c.l.b16 %v508
  %v573 = vpack.c.b16 %v542, %v541
  %v574 = vpack.c.b16 %v544, %v543
  %v575 = vpack.c.b16 %v546, %v545
  %v576 = vpack.c.b16 %v548, %v547
  %v577 = vpack.c.b16 %v550, %v549
  %v578 = vpack.c.b16 %v552, %v551
  %v579 = vpack.c.b16 %v554, %v553
  %v580 = vpack.c.b16 %v556, %v555
  %v581 = vpack.c.b16 %v558, %v557
  %v582 = vpack.c.b16 %v560, %v559
  %v583 = vpack.c.b16 %v562, %v561
  %v584 = vpack.c.b16 %v564, %v563
  %v585 = vpack.c.b16 %v566, %v565
  %v586 = vpack.c.b16 %v568, %v567
  %v587 = vpack.c.b16 %v570, %v569
  %v588 = vpack.c.b16 %v572, %v571
  %605 = vmatprep.subr.bf16.mxu0 0
  %606 = vmatpush1.bf16.msra.mxu0 %v573
  %607 = vmatprep.subr.bf16.mxu0 0
  %608 = vmatpush1.bf16.msra.mxu0 %v574
  %609 = vmatprep.subr.bf16.mxu0 0
  %610 = vmatpush1.bf16.msra.mxu0 %v575
  %611 = vmatprep.subr.bf16.mxu0 0
  %612 = vmatpush1.bf16.msra.mxu0 %v576
  %613 = vmatprep.subr.bf16.mxu0 0
  %614 = vmatpush1.bf16.msra.mxu0 %v577
  %615 = vmatprep.subr.bf16.mxu0 0
  %616 = vmatpush1.bf16.msra.mxu0 %v578
  %617 = vmatprep.subr.bf16.mxu0 0
  %618 = vmatpush1.bf16.msra.mxu0 %v579
  %619 = vmatprep.subr.bf16.mxu0 0
  %620 = vmatpush1.bf16.msra.mxu0 %v580
  %621 = vmatprep.subr.bf16.mxu0 0
  %622 = vmatpush1.bf16.msra.mxu0 %v581
  %623 = vmatprep.subr.bf16.mxu0 0
  %624 = vmatpush1.bf16.msra.mxu0 %v582
  %625 = vmatprep.subr.bf16.mxu0 0
  %626 = vmatpush1.bf16.msra.mxu0 %v583
  %627 = vmatprep.subr.bf16.mxu0 0
  %628 = vmatpush1.bf16.msra.mxu0 %v584
  %629 = vmatprep.subr.bf16.mxu0 0
  %630 = vmatpush1.bf16.msra.mxu0 %v585
  %631 = vmatprep.subr.bf16.mxu0 0
  %632 = vmatpush1.bf16.msra.mxu0 %v586
  %633 = vmatprep.subr.bf16.mxu0 0
  %634 = vmatpush1.bf16.msra.mxu0 %v587
  %635 = vmatprep.subr.bf16.mxu0 0
  %636 = vmatpush1.bf16.msra.mxu0 %v588
  %637 = vmatprep.mubr.bf16.mxu0 %v476
  %638 = vmatmul.mubr.bf16.gmra.mrb[0].mxu0 %v475
  %v639 = vpop.f32.mrb[0].mxu0
  %v640 = vadd.f32 0.0, %v639
  %v641 = vpop.f32.mrb[0].mxu0
  %v642 = vpop.f32.mrb[0].mxu0
  %v643 = vpop.f32.mrb[0].mxu0
  %644 = vdwg.mxu0
  %s645 = scalar_lea.vmem %s4, 128
  %v646 = vld [vmem:[%s645] sm:$0xf]
  %v647 = vld [vmem:[%s645 + $0x4] sm:$0xf]
  %v648 = vld [vmem:[%s645 + $0x8] sm:$0xf]
  %v649 = vld [vmem:[%s645 + $0xc] sm:$0xf]
  %v650 = vld [vmem:[%s645 + $0x10] sm:$0xf]
  %v651 = vld [vmem:[%s645 + $0x14] sm:$0xf]
  %v652 = vld [vmem:[%s645 + $0x18] sm:$0xf]
  %v653 = vld [vmem:[%s645 + $0x1c] sm:$0xf]
  %v654 = vld [vmem:[%s645 + $0x20] sm:$0xf]
  %v655 = vld [vmem:[%s645 + $0x24] sm:$0xf]
  %v656 = vld [vmem:[%s645 + $0x28] sm:$0xf]
  %v657 = vld [vmem:[%s645 + $0x2c] sm:$0xf]
  %v658 = vld [vmem:[%s645 + $0x30] sm:$0xf]
  %v659 = vld [vmem:[%s645 + $0x34] sm:$0xf]
  %v660 = vld [vmem:[%s645 + $0x38] sm:$0xf]
  %v661 = vld [vmem:[%s645 + $0x3c] sm:$0xf]
  %v662 = vld [vmem:[%s645 + $0x40] sm:$0xf]
  %v663 = vld [vmem:[%s645 + $0x44] sm:$0xf]
  %v664 = vld [vmem:[%s645 + $0x48] sm:$0xf]
  %v665 = vld [vmem:[%s645 + $0x4c] sm:$0xf]
  %v666 = vld [vmem:[%s645 + $0x50] sm:$0xf]
  %v667 = vld [vmem:[%s645 + $0x54] sm:$0xf]
  %v668 = vld [vmem:[%s645 + $0x58] sm:$0xf]
  %v669 = vld [vmem:[%s645 + $0x5c] sm:$0xf]
  %v670 = vld [vmem:[%s645 + $0x60] sm:$0xf]
  %v671 = vld [vmem:[%s645 + $0x64] sm:$0xf]
  %v672 = vld [vmem:[%s645 + $0x68] sm:$0xf]
  %v673 = vld [vmem:[%s645 + $0x6c] sm:$0xf]
  %v674 = vld [vmem:[%s645 + $0x70] sm:$0xf]
  %v675 = vld [vmem:[%s645 + $0x74] sm:$0xf]
  %v676 = vld [vmem:[%s645 + $0x78] sm:$0xf]
  %v677 = vld [vmem:[%s645 + $0x7c] sm:$0xf]
  %v710 = vunpack.c.l.b16 %v646
  %v711 = vunpack.c.l.b16 %v647
  %v712 = vunpack.c.l.b16 %v648
  %v713 = vunpack.c.l.b16 %v649
  %v714 = vunpack.c.l.b16 %v650
  %v715 = vunpack.c.l.b16 %v651
  %v716 = vunpack.c.l.b16 %v652
  %v717 = vunpack.c.l.b16 %v653
  %v718 = vunpack.c.l.b16 %v654
  %v719 = vunpack.c.l.b16 %v655
  %v720 = vunpack.c.l.b16 %v656
  %v721 = vunpack.c.l.b16 %v657
  %v722 = vunpack.c.l.b16 %v658
  %v723 = vunpack.c.l.b16 %v659
  %v724 = vunpack.c.l.b16 %v660
  %v725 = vunpack.c.l.b16 %v661
  %v726 = vunpack.c.l.b16 %v662
  %v727 = vunpack.c.l.b16 %v663
  %v728 = vunpack.c.l.b16 %v664
  %v729 = vunpack.c.l.b16 %v665
  %v730 = vunpack.c.l.b16 %v666
  %v731 = vunpack.c.l.b16 %v667
  %v732 = vunpack.c.l.b16 %v668
  %v733 = vunpack.c.l.b16 %v669
  %v734 = vunpack.c.l.b16 %v670
  %v735 = vunpack.c.l.b16 %v671
  %v736 = vunpack.c.l.b16 %v672
  %v737 = vunpack.c.l.b16 %v673
  %v738 = vunpack.c.l.b16 %v674
  %v739 = vunpack.c.l.b16 %v675
  %v740 = vunpack.c.l.b16 %v676
  %v741 = vunpack.c.l.b16 %v677
  %v742 = vpack.c.b16 %v711, %v710
  %v743 = vpack.c.b16 %v713, %v712
  %v744 = vpack.c.b16 %v715, %v714
  %v745 = vpack.c.b16 %v717, %v716
  %v746 = vpack.c.b16 %v719, %v718
  %v747 = vpack.c.b16 %v721, %v720
  %v748 = vpack.c.b16 %v723, %v722
  %v749 = vpack.c.b16 %v725, %v724
  %v750 = vpack.c.b16 %v727, %v726
  %v751 = vpack.c.b16 %v729, %v728
  %v752 = vpack.c.b16 %v731, %v730
  %v753 = vpack.c.b16 %v733, %v732
  %v754 = vpack.c.b16 %v735, %v734
  %v755 = vpack.c.b16 %v737, %v736
  %v756 = vpack.c.b16 %v739, %v738
  %v757 = vpack.c.b16 %v741, %v740
  %774 = vmatprep.subr.bf16.mxu0 0
  %775 = vmatpush1.bf16.msra.mxu0 %v742
  %776 = vmatprep.subr.bf16.mxu0 0
  %777 = vmatpush1.bf16.msra.mxu0 %v743
  %778 = vmatprep.subr.bf16.mxu0 0
  %779 = vmatpush1.bf16.msra.mxu0 %v744
  %780 = vmatprep.subr.bf16.mxu0 0
  %781 = vmatpush1.bf16.msra.mxu0 %v745
  %782 = vmatprep.subr.bf16.mxu0 0
  %783 = vmatpush1.bf16.msra.mxu0 %v746
  %784 = vmatprep.subr.bf16.mxu0 0
  %785 = vmatpush1.bf16.msra.mxu0 %v747
  %786 = vmatprep.subr.bf16.mxu0 0
  %787 = vmatpush1.bf16.msra.mxu0 %v748
  %788 = vmatprep.subr.bf16.mxu0 0
  %789 = vmatpush1.bf16.msra.mxu0 %v749
  %790 = vmatprep.subr.bf16.mxu0 0
  %791 = vmatpush1.bf16.msra.mxu0 %v750
  %792 = vmatprep.subr.bf16.mxu0 0
  %793 = vmatpush1.bf16.msra.mxu0 %v751
  %794 = vmatprep.subr.bf16.mxu0 0
  %795 = vmatpush1.bf16.msra.mxu0 %v752
  %796 = vmatprep.subr.bf16.mxu0 0
  %797 = vmatpush1.bf16.msra.mxu0 %v753
  %798 = vmatprep.subr.bf16.mxu0 0
  %799 = vmatpush1.bf16.msra.mxu0 %v754
  %800 = vmatprep.subr.bf16.mxu0 0
  %801 = vmatpush1.bf16.msra.mxu0 %v755
  %802 = vmatprep.subr.bf16.mxu0 0
  %803 = vmatpush1.bf16.msra.mxu0 %v756
  %804 = vmatprep.subr.bf16.mxu0 0
  %805 = vmatpush1.bf16.msra.mxu0 %v757
  %806 = vmatprep.mubr.bf16.mxu0 %v476
  %807 = vmatmul.mubr.bf16.gmra.mrb[0].mxu0 %v475
  %v808 = vpop.f32.mrb[0].mxu0
  %v809 = vadd.f32 0.0, %v808
  %v810 = vpop.f32.mrb[0].mxu0
  %v811 = vpop.f32.mrb[0].mxu0
  %v812 = vpop.f32.mrb[0].mxu0
  %813 = vdwg.mxu0
  %s814 = scalar_lea.vmem %s4, 256
  %v815 = vld [vmem:[%s814] sm:$0xf]
  %v816 = vld [vmem:[%s814 + $0x4] sm:$0xf]
  %v817 = vld [vmem:[%s814 + $0x8] sm:$0xf]
  %v818 = vld [vmem:[%s814 + $0xc] sm:$0xf]
  %v819 = vld [vmem:[%s814 + $0x10] sm:$0xf]
  %v820 = vld [vmem:[%s814 + $0x14] sm:$0xf]
  %v821 = vld [vmem:[%s814 + $0x18] sm:$0xf]
  %v822 = vld [vmem:[%s814 + $0x1c] sm:$0xf]
  %v823 = vld [vmem:[%s814 + $0x20] sm:$0xf]
  %v824 = vld [vmem:[%s814 + $0x24] sm:$0xf]
  %v825 = vld [vmem:[%s814 + $0x28] sm:$0xf]
  %v826 = vld [vmem:[%s814 + $0x2c] sm:$0xf]
  %v827 = vld [vmem:[%s814 + $0x30] sm:$0xf]
  %v828 = vld [vmem:[%s814 + $0x34] sm:$0xf]
  %v829 = vld [vmem:[%s814 + $0x38] sm:$0xf]
  %v830 = vld [vmem:[%s814 + $0x3c] sm:$0xf]
  %v831 = vld [vmem:[%s814 + $0x40] sm:$0xf]
  %v832 = vld [vmem:[%s814 + $0x44] sm:$0xf]
  %v833 = vld [vmem:[%s814 + $0x48] sm:$0xf]
  %v834 = vld [vmem:[%s814 + $0x4c] sm:$0xf]
  %v835 = vld [vmem:[%s814 + $0x50] sm:$0xf]
  %v836 = vld [vmem:[%s814 + $0x54] sm:$0xf]
  %v837 = vld [vmem:[%s814 + $0x58] sm:$0xf]
  %v838 = vld [vmem:[%s814 + $0x5c] sm:$0xf]
  %v839 = vld [vmem:[%s814 + $0x60] sm:$0xf]
  %v840 = vld [vmem:[%s814 + $0x64] sm:$0xf]
  %v841 = vld [vmem:[%s814 + $0x68] sm:$0xf]
  %v842 = vld [vmem:[%s814 + $0x6c] sm:$0xf]
  %v843 = vld [vmem:[%s814 + $0x70] sm:$0xf]
  %v844 = vld [vmem:[%s814 + $0x74] sm:$0xf]
  %v845 = vld [vmem:[%s814 + $0x78] sm:$0xf]
  %v846 = vld [vmem:[%s814 + $0x7c] sm:$0xf]
  %v879 = vunpack.c.l.b16 %v815
  %v880 = vunpack.c.l.b16 %v816
  %v881 = vunpack.c.l.b16 %v817
  %v882 = vunpack.c.l.b16 %v818
  %v883 = vunpack.c.l.b16 %v819
  %v884 = vunpack.c.l.b16 %v820
  %v885 = vunpack.c.l.b16 %v821
  %v886 = vunpack.c.l.b16 %v822
  %v887 = vunpack.c.l.b16 %v823
  %v888 = vunpack.c.l.b16 %v824
  %v889 = vunpack.c.l.b16 %v825
  %v890 = vunpack.c.l.b16 %v826
  %v891 = vunpack.c.l.b16 %v827
  %v892 = vunpack.c.l.b16 %v828
  %v893 = vunpack.c.l.b16 %v829
  %v894 = vunpack.c.l.b16 %v830
  %v895 = vunpack.c.l.b16 %v831
  %v896 = vunpack.c.l.b16 %v832
  %v897 = vunpack.c.l.b16 %v833
  %v898 = vunpack.c.l.b16 %v834
  %v899 = vunpack.c.l.b16 %v835
  %v900 = vunpack.c.l.b16 %v836
  %v901 = vunpack.c.l.b16 %v837
  %v902 = vunpack.c.l.b16 %v838
  %v903 = vunpack.c.l.b16 %v839
  %v904 = vunpack.c.l.b16 %v840
  %v905 = vunpack.c.l.b16 %v841
  %v906 = vunpack.c.l.b16 %v842
  %v907 = vunpack.c.l.b16 %v843
  %v908 = vunpack.c.l.b16 %v844
  %v909 = vunpack.c.l.b16 %v845
  %v910 = vunpack.c.l.b16 %v846
  %v911 = vpack.c.b16 %v880, %v879
  %v912 = vpack.c.b16 %v882, %v881
  %v913 = vpack.c.b16 %v884, %v883
  %v914 = vpack.c.b16 %v886, %v885
  %v915 = vpack.c.b16 %v888, %v887
  %v916 = vpack.c.b16 %v890, %v889
  %v917 = vpack.c.b16 %v892, %v891
  %v918 = vpack.c.b16 %v894, %v893
  %v919 = vpack.c.b16 %v896, %v895
  %v920 = vpack.c.b16 %v898, %v897
  %v921 = vpack.c.b16 %v900, %v899
  %v922 = vpack.c.b16 %v902, %v901
  %v923 = vpack.c.b16 %v904, %v903
  %v924 = vpack.c.b16 %v906, %v905
  %v925 = vpack.c.b16 %v908, %v907
  %v926 = vpack.c.b16 %v910, %v909
  %943 = vmatprep.subr.bf16.mxu0 0
  %944 = vmatpush1.bf16.msra.mxu0 %v911
  %945 = vmatprep.subr.bf16.mxu0 0
  %946 = vmatpush1.bf16.msra.mxu0 %v912
  %947 = vmatprep.subr.bf16.mxu0 0
  %948 = vmatpush1.bf16.msra.mxu0 %v913
  %949 = vmatprep.subr.bf16.mxu0 0
  %950 = vmatpush1.bf16.msra.mxu0 %v914
  %951 = vmatprep.subr.bf16.mxu0 0
  %952 = vmatpush1.bf16.msra.mxu0 %v915
  %953 = vmatprep.subr.bf16.mxu0 0
  %954 = vmatpush1.bf16.msra.mxu0 %v916
  %955 = vmatprep.subr.bf16.mxu0 0
  %956 = vmatpush1.bf16.msra.mxu0 %v917
  %957 = vmatprep.subr.bf16.mxu0 0
  %958 = vmatpush1.bf16.msra.mxu0 %v918
  %959 = vmatprep.subr.bf16.mxu0 0
  %960 = vmatpush1.bf16.msra.mxu0 %v919
  %961 = vmatprep.subr.bf16.mxu0 0
  %962 = vmatpush1.bf16.msra.mxu0 %v920
  %963 = vmatprep.subr.bf16.mxu0 0
  %964 = vmatpush1.bf16.msra.mxu0 %v921
  %965 = vmatprep.subr.bf16.mxu0 0
  %966 = vmatpush1.bf16.msra.mxu0 %v922
  %967 = vmatprep.subr.bf16.mxu0 0
  %968 = vmatpush1.bf16.msra.mxu0 %v923
  %969 = vmatprep.subr.bf16.mxu0 0
  %970 = vmatpush1.bf16.msra.mxu0 %v924
  %971 = vmatprep.subr.bf16.mxu0 0
  %972 = vmatpush1.bf16.msra.mxu0 %v925
  %973 = vmatprep.subr.bf16.mxu0 0
  %974 = vmatpush1.bf16.msra.mxu0 %v926
  %975 = vmatprep.mubr.bf16.mxu0 %v476
  %976 = vmatmul.mubr.bf16.gmra.mrb[0].mxu0 %v475
  %v977 = vpop.f32.mrb[0].mxu0
  %v978 = vadd.f32 0.0, %v977
  %v979 = vpop.f32.mrb[0].mxu0
  %v980 = vpop.f32.mrb[0].mxu0
  %v981 = vpop.f32.mrb[0].mxu0
  %982 = vdwg.mxu0
  %s983 = scalar_lea.vmem %s4, 384
  %v984 = vld [vmem:[%s983] sm:$0xf]
  %v985 = vld [vmem:[%s983 + $0x4] sm:$0xf]
  %v986 = vld [vmem:[%s983 + $0x8] sm:$0xf]
  %v987 = vld [vmem:[%s983 + $0xc] sm:$0xf]
  %v988 = vld [vmem:[%s983 + $0x10] sm:$0xf]
  %v989 = vld [vmem:[%s983 + $0x14] sm:$0xf]
  %v990 = vld [vmem:[%s983 + $0x18] sm:$0xf]
  %v991 = vld [vmem:[%s983 + $0x1c] sm:$0xf]
  %v992 = vld [vmem:[%s983 + $0x20] sm:$0xf]
  %v993 = vld [vmem:[%s983 + $0x24] sm:$0xf]
  %v994 = vld [vmem:[%s983 + $0x28] sm:$0xf]
  %v995 = vld [vmem:[%s983 + $0x2c] sm:$0xf]
  %v996 = vld [vmem:[%s983 + $0x30] sm:$0xf]
  %v997 = vld [vmem:[%s983 + $0x34] sm:$0xf]
  %v998 = vld [vmem:[%s983 + $0x38] sm:$0xf]
  %v999 = vld [vmem:[%s983 + $0x3c] sm:$0xf]
  %v1000 = vld [vmem:[%s983 + $0x40] sm:$0xf]
  %v1001 = vld [vmem:[%s983 + $0x44] sm:$0xf]
  %v1002 = vld [vmem:[%s983 + $0x48] sm:$0xf]
  %v1003 = vld [vmem:[%s983 + $0x4c] sm:$0xf]
  %v1004 = vld [vmem:[%s983 + $0x50] sm:$0xf]
  %v1005 = vld [vmem:[%s983 + $0x54] sm:$0xf]
  %v1006 = vld [vmem:[%s983 + $0x58] sm:$0xf]
  %v1007 = vld [vmem:[%s983 + $0x5c] sm:$0xf]
  %v1008 = vld [vmem:[%s983 + $0x60] sm:$0xf]
  %v1009 = vld [vmem:[%s983 + $0x64] sm:$0xf]
  %v1010 = vld [vmem:[%s983 + $0x68] sm:$0xf]
  %v1011 = vld [vmem:[%s983 + $0x6c] sm:$0xf]
  %v1012 = vld [vmem:[%s983 + $0x70] sm:$0xf]
  %v1013 = vld [vmem:[%s983 + $0x74] sm:$0xf]
  %v1014 = vld [vmem:[%s983 + $0x78] sm:$0xf]
  %v1015 = vld [vmem:[%s983 + $0x7c] sm:$0xf]
  %v1048 = vunpack.c.l.b16 %v984
  %v1049 = vunpack.c.l.b16 %v985
  %v1050 = vunpack.c.l.b16 %v986
  %v1051 = vunpack.c.l.b16 %v987
  %v1052 = vunpack.c.l.b16 %v988
  %v1053 = vunpack.c.l.b16 %v989
  %v1054 = vunpack.c.l.b16 %v990
  %v1055 = vunpack.c.l.b16 %v991
  %v1056 = vunpack.c.l.b16 %v992
  %v1057 = vunpack.c.l.b16 %v993
  %v1058 = vunpack.c.l.b16 %v994
  %v1059 = vunpack.c.l.b16 %v995
  %v1060 = vunpack.c.l.b16 %v996
  %v1061 = vunpack.c.l.b16 %v997
  %v1062 = vunpack.c.l.b16 %v998
  %v1063 = vunpack.c.l.b16 %v999
  %v1064 = vunpack.c.l.b16 %v1000
  %v1065 = vunpack.c.l.b16 %v1001
  %v1066 = vunpack.c.l.b16 %v1002
  %v1067 = vunpack.c.l.b16 %v1003
  %v1068 = vunpack.c.l.b16 %v1004
  %v1069 = vunpack.c.l.b16 %v1005
  %v1070 = vunpack.c.l.b16 %v1006
  %v1071 = vunpack.c.l.b16 %v1007
  %v1072 = vunpack.c.l.b16 %v1008
  %v1073 = vunpack.c.l.b16 %v1009
  %v1074 = vunpack.c.l.b16 %v1010
  %v1075 = vunpack.c.l.b16 %v1011
  %v1076 = vunpack.c.l.b16 %v1012
  %v1077 = vunpack.c.l.b16 %v1013
  %v1078 = vunpack.c.l.b16 %v1014
  %v1079 = vunpack.c.l.b16 %v1015
  %v1080 = vpack.c.b16 %v1049, %v1048
  %v1081 = vpack.c.b16 %v1051, %v1050
  %v1082 = vpack.c.b16 %v1053, %v1052
  %v1083 = vpack.c.b16 %v1055, %v1054
  %v1084 = vpack.c.b16 %v1057, %v1056
  %v1085 = vpack.c.b16 %v1059, %v1058
  %v1086 = vpack.c.b16 %v1061, %v1060
  %v1087 = vpack.c.b16 %v1063, %v1062
  %v1088 = vpack.c.b16 %v1065, %v1064
  %v1089 = vpack.c.b16 %v1067, %v1066
  %v1090 = vpack.c.b16 %v1069, %v1068
  %v1091 = vpack.c.b16 %v1071, %v1070
  %v1092 = vpack.c.b16 %v1073, %v1072
  %v1093 = vpack.c.b16 %v1075, %v1074
  %v1094 = vpack.c.b16 %v1077, %v1076
  %v1095 = vpack.c.b16 %v1079, %v1078
  %1112 = vmatprep.subr.bf16.mxu0 0
  %1113 = vmatpush1.bf16.msra.mxu0 %v1080
  %1114 = vmatprep.subr.bf16.mxu0 0
  %1115 = vmatpush1.bf16.msra.mxu0 %v1081
  %1116 = vmatprep.subr.bf16.mxu0 0
  %1117 = vmatpush1.bf16.msra.mxu0 %v1082
  %1118 = vmatprep.subr.bf16.mxu0 0
  %1119 = vmatpush1.bf16.msra.mxu0 %v1083
  %1120 = vmatprep.subr.bf16.mxu0 0
  %1121 = vmatpush1.bf16.msra.mxu0 %v1084
  %1122 = vmatprep.subr.bf16.mxu0 0
  %1123 = vmatpush1.bf16.msra.mxu0 %v1085
  %1124 = vmatprep.subr.bf16.mxu0 0
  %1125 = vmatpush1.bf16.msra.mxu0 %v1086
  %1126 = vmatprep.subr.bf16.mxu0 0
  %1127 = vmatpush1.bf16.msra.mxu0 %v1087
  %1128 = vmatprep.subr.bf16.mxu0 0
  %1129 = vmatpush1.bf16.msra.mxu0 %v1088
  %1130 = vmatprep.subr.bf16.mxu0 0
  %1131 = vmatpush1.bf16.msra.mxu0 %v1089
  %1132 = vmatprep.subr.bf16.mxu0 0
  %1133 = vmatpush1.bf16.msra.mxu0 %v1090
  %1134 = vmatprep.subr.bf16.mxu0 0
  %1135 = vmatpush1.bf16.msra.mxu0 %v1091
  %1136 = vmatprep.subr.bf16.mxu0 0
  %1137 = vmatpush1.bf16.msra.mxu0 %v1092
  %1138 = vmatprep.subr.bf16.mxu0 0
  %1139 = vmatpush1.bf16.msra.mxu0 %v1093
  %1140 = vmatprep.subr.bf16.mxu0 0
  %1141 = vmatpush1.bf16.msra.mxu0 %v1094
  %1142 = vmatprep.subr.bf16.mxu0 0
  %1143 = vmatpush1.bf16.msra.mxu0 %v1095
  %1144 = vmatprep.mubr.bf16.mxu0 %v476
  %1145 = vmatmul.mubr.bf16.gmra.mrb[0].mxu0 %v475
  %v1146 = vpop.f32.mrb[0].mxu0
  %v1147 = vadd.f32 0.0, %v1146
  %v1148 = vpop.f32.mrb[0].mxu0
  %v1149 = vpop.f32.mrb[0].mxu0
  %v1150 = vpop.f32.mrb[0].mxu0
  %1151 = vdwg.mxu0
  %1152 = vst [vmem:[#allocation3] sm:$0x3] %v809
  %v1154 = vrot.slane %v978, 6
  %v1156 = vadd.f32 %v640, %v1154
  %1157 = vst [vmem:[#allocation3] sm:$0xc] %v1156
  %v1159 = vrot.slane %v1147, 6
  %v1161 = vadd.f32 %v809, %v1159
  %1162 = vst [vmem:[#allocation3 + $0x2] sm:$0xc] %v1161
  %1163 = vst [vmem:[#allocation3 + $0x2] sm:$0x30] %v1156
  %1164 = vst [vmem:[#allocation3 + $0x4] sm:$0x30] %v1161
  %1165 = vst [vmem:[#allocation3 + $0x4] sm:$0xc0] %v1156
  %1166 = vst [vmem:[#allocation3 + $0x6] sm:$0xc0] %v1161
  %1167 = vst [vmem:[#allocation3 + $0x8] sm:$0xc0] %v978
  %v1168 = vld [vmem:[#allocation3] sm:$0xff]
  %v1169 = vld [vmem:[#allocation3 + $0x8] sm:$0xff]
  %v1170 = vadd.f32 %v1168, %v1169
  %v1171 = vrot.slane %v1170, 4
  %v1172 = vadd.f32 %v1170, %v1171
  %v1173 = vrot.slane %v1172, 2
  %v1174 = vadd.f32 %v1172, %v1173
  %v1175 = vrot.slane %v1174, 1
  %v1176 = vadd.f32 %v1174, %v1175
  %v1177 = vmul.f32 %v1176, 0.0625
  %v1178 = vsub.f32 %v1168, %v1177
  %v1179 = vsub.f32 %v1169, %v1177
  %v1180 = vmul.f32 %v1178, %v1178
  %v1181 = vmul.f32 %v1179, %v1179
  %v1182 = vadd.f32 %v1180, %v1181
  %v1183 = vrot.slane %v1182, 4
  %v1184 = vadd.f32 %v1182, %v1183
  %v1185 = vrot.slane %v1184, 2
  %v1186 = vadd.f32 %v1184, %v1185
  %v1187 = vrot.slane %v1186, 1
  %v1188 = vadd.f32 %v1186, %v1187
  %v1189 = vmul.f32 %v1188, 0.0625
  %v1190 = vld [vmem:[%s5] sm:$0x1]
  %v1191 = vadd.f32 %v1189, 1e-05
  %v1192 = vrsqrt.pop %v1191
  %v1193 = vmul.f32 %v1190, %v1192
  %v1194 = vld [vmem:[%s6] sm:$0x1]
  %v1195 = vmul.f32 %v1177, %v1193
  %v1196 = vsub.f32 %v1194, %v1195
  %v1198 = vlaneseq
  %v1199 = vshrl.u32 %v1198, 7
  %v1200 = vsub.s32 0, %v1199
  %v1201 = vrot.slane %v1193, %v1200
  %v1203 = vmul.f32 %v1168, %v1201
  %v1204 = vmul.f32 %v1169, %v1201
  %v1206 = vlaneseq
  %v1207 = vshrl.u32 %v1206, 7
  %v1208 = vsub.s32 0, %v1207
  %v1209 = vrot.slane %v1196, %v1208
  %v1211 = vadd.f32 %v1203, %v1209
  %v1212 = vadd.f32 %v1204, %v1209
  %v1213 = vmax.f32 %v1211, 0.0
  %v1214 = vmax.f32 %v1212, 0.0
  %v1215 = vpack.c.bf16 %v1214, %v1213
  %v1216 = vld [vmem:[%s7] sm:$0xf]
  %v1217 = vld [vmem:[%s7 + $0x4] sm:$0xf]
  %v1218 = vld [vmem:[%s7 + $0x8] sm:$0xf]
  %v1219 = vld [vmem:[%s7 + $0xc] sm:$0xf]
  %v1220 = vld [vmem:[%s7 + $0x10] sm:$0xf]
  %v1221 = vld [vmem:[%s7 + $0x14] sm:$0xf]
  %v1222 = vld [vmem:[%s7 + $0x18] sm:$0xf]
  %v1223 = vld [vmem:[%s7 + $0x1c] sm:$0xf]
  %v1224 = vld [vmem:[%s7 + $0x20] sm:$0xf]
  %v1225 = vld [vmem:[%s7 + $0x24] sm:$0xf]
  %v1226 = vld [vmem:[%s7 + $0x28] sm:$0xf]
  %v1227 = vld [vmem:[%s7 + $0x2c] sm:$0xf]
  %v1228 = vld [vmem:[%s7 + $0x30] sm:$0xf]
  %v1229 = vld [vmem:[%s7 + $0x34] sm:$0xf]
  %v1230 = vld [vmem:[%s7 + $0x38] sm:$0xf]
  %v1231 = vld [vmem:[%s7 + $0x3c] sm:$0xf]
  %v1248 = vunpack.c.l.b16 %v1216
  %v1249 = vunpack.c.l.b16 %v1217
  %v1250 = vunpack.c.l.b16 %v1218
  %v1251 = vunpack.c.l.b16 %v1219
  %v1252 = vunpack.c.l.b16 %v1220
  %v1253 = vunpack.c.l.b16 %v1221
  %v1254 = vunpack.c.l.b16 %v1222
  %v1255 = vunpack.c.l.b16 %v1223
  %v1256 = vunpack.c.l.b16 %v1224
  %v1257 = vunpack.c.l.b16 %v1225
  %v1258 = vunpack.c.l.b16 %v1226
  %v1259 = vunpack.c.l.b16 %v1227
  %v1260 = vunpack.c.l.b16 %v1228
  %v1261 = vunpack.c.l.b16 %v1229
  %v1262 = vunpack.c.l.b16 %v1230
  %v1263 = vunpack.c.l.b16 %v1231
  %v1264 = vpack.c.b16 %v1249, %v1248
  %v1265 = vpack.c.b16 %v1251, %v1250
  %v1266 = vpack.c.b16 %v1253, %v1252
  %v1267 = vpack.c.b16 %v1255, %v1254
  %v1268 = vpack.c.b16 %v1257, %v1256
  %v1269 = vpack.c.b16 %v1259, %v1258
  %v1270 = vpack.c.b16 %v1261, %v1260
  %v1271 = vpack.c.b16 %v1263, %v1262
  %1280 = vmatprep.subr.bf16.mxu0 0
  %1281 = vmatpush1.bf16.msra.mxu0 %v1264
  %1282 = vmatprep.subr.bf16.mxu0 0
  %1283 = vmatpush1.bf16.msra.mxu0 %v1265
  %1284 = vmatprep.subr.bf16.mxu0 0
  %1285 = vmatpush1.bf16.msra.mxu0 %v1266
  %1286 = vmatprep.subr.bf16.mxu0 0
  %1287 = vmatpush1.bf16.msra.mxu0 %v1267
  %1288 = vmatprep.subr.bf16.mxu0 0
  %1289 = vmatpush1.bf16.msra.mxu0 %v1268
  %1290 = vmatprep.subr.bf16.mxu0 0
  %1291 = vmatpush1.bf16.msra.mxu0 %v1269
  %1292 = vmatprep.subr.bf16.mxu0 0
  %1293 = vmatpush1.bf16.msra.mxu0 %v1270
  %1294 = vmatprep.subr.bf16.mxu0 0
  %1295 = vmatpush1.bf16.msra.mxu0 %v1271
  %1296 = vmatprep.subr.bf16.mxu0 0
  %1297 = vmatpush1.bf16.msra.mxu0 0
  %1298 = vmatprep.subr.bf16.mxu0 0
  %1299 = vmatpush1.bf16.msra.mxu0 0
  %1300 = vmatprep.subr.bf16.mxu0 0
  %1301 = vmatpush1.bf16.msra.mxu0 0
  %1302 = vmatprep.subr.bf16.mxu0 0
  %1303 = vmatpush1.bf16.msra.mxu0 0
  %1304 = vmatprep.subr.bf16.mxu0 0
  %1305 = vmatpush1.bf16.msra.mxu0 0
  %1306 = vmatprep.subr.bf16.mxu0 0
  %1307 = vmatpush1.bf16.msra.mxu0 0
  %1308 = vmatprep.subr.bf16.mxu0 0
  %1309 = vmatpush1.bf16.msra.mxu0 0
  %1310 = vmatprep.subr.bf16.mxu0 0
  %1311 = vmatpush1.bf16.msra.mxu0 0
  %1312 = vmatprep.mubr.bf16.mxu0 0
  %1313 = vmatmul.mubr.bf16.gmra.mrb[0].mxu0 %v1215
  %v1314 = vpop.f32.mrb[0].mxu0
  %v1315 = vadd.f32 0.0, %v1314
  %v1316 = vpop.f32.mrb[0].mxu0
  %v1317 = vpop.f32.mrb[0].mxu0
  %v1318 = vadd.f32 0.0, %v1317
  %v1319 = vpop.f32.mrb[0].mxu0
  %1320 = vdwg.mxu0
  %s1321 = scalar_lea.vmem %s7, 64
  %v1322 = vld [vmem:[%s1321] sm:$0xf]
  %v1323 = vld [vmem:[%s1321 + $0x4] sm:$0xf]
  %v1324 = vld [vmem:[%s1321 + $0x8] sm:$0xf]
  %v1325 = vld [vmem:[%s1321 + $0xc] sm:$0xf]
  %v1326 = vld [vmem:[%s1321 + $0x10] sm:$0xf]
  %v1327 = vld [vmem:[%s1321 + $0x14] sm:$0xf]
  %v1328 = vld [vmem:[%s1321 + $0x18] sm:$0xf]
  %v1329 = vld [vmem:[%s1321 + $0x1c] sm:$0xf]
  %v1330 = vld [vmem:[%s1321 + $0x20] sm:$0xf]
  %v1331 = vld [vmem:[%s1321 + $0x24] sm:$0xf]
  %v1332 = vld [vmem:[%s1321 + $0x28] sm:$0xf]
  %v1333 = vld [vmem:[%s1321 + $0x2c] sm:$0xf]
  %v1334 = vld [vmem:[%s1321 + $0x30] sm:$0xf]
  %v1335 = vld [vmem:[%s1321 + $0x34] sm:$0xf]
  %v1336 = vld [vmem:[%s1321 + $0x38] sm:$0xf]
  %v1337 = vld [vmem:[%s1321 + $0x3c] sm:$0xf]
  %v1354 = vunpack.c.l.b16 %v1322
  %v1355 = vunpack.c.l.b16 %v1323
  %v1356 = vunpack.c.l.b16 %v1324
  %v1357 = vunpack.c.l.b16 %v1325
  %v1358 = vunpack.c.l.b16 %v1326
  %v1359 = vunpack.c.l.b16 %v1327
  %v1360 = vunpack.c.l.b16 %v1328
  %v1361 = vunpack.c.l.b16 %v1329
  %v1362 = vunpack.c.l.b16 %v1330
  %v1363 = vunpack.c.l.b16 %v1331
  %v1364 = vunpack.c.l.b16 %v1332
  %v1365 = vunpack.c.l.b16 %v1333
  %v1366 = vunpack.c.l.b16 %v1334
  %v1367 = vunpack.c.l.b16 %v1335
  %v1368 = vunpack.c.l.b16 %v1336
  %v1369 = vunpack.c.l.b16 %v1337
  %v1370 = vpack.c.b16 %v1355, %v1354
  %v1371 = vpack.c.b16 %v1357, %v1356
  %v1372 = vpack.c.b16 %v1359, %v1358
  %v1373 = vpack.c.b16 %v1361, %v1360
  %v1374 = vpack.c.b16 %v1363, %v1362
  %v1375 = vpack.c.b16 %v1365, %v1364
  %v1376 = vpack.c.b16 %v1367, %v1366
  %v1377 = vpack.c.b16 %v1369, %v1368
  %1386 = vmatprep.subr.bf16.mxu0 0
  %1387 = vmatpush1.bf16.msra.mxu0 %v1370
  %1388 = vmatprep.subr.bf16.mxu0 0
  %1389 = vmatpush1.bf16.msra.mxu0 %v1371
  %1390 = vmatprep.subr.bf16.mxu0 0
  %1391 = vmatpush1.bf16.msra.mxu0 %v1372
  %1392 = vmatprep.subr.bf16.mxu0 0
  %1393 = vmatpush1.bf16.msra.mxu0 %v1373
  %1394 = vmatprep.subr.bf16.mxu0 0
  %1395 = vmatpush1.bf16.msra.mxu0 %v1374
  %1396 = vmatprep.subr.bf16.mxu0 0
  %1397 = vmatpush1.bf16.msra.mxu0 %v1375
  %1398 = vmatprep.subr.bf16.mxu0 0
  %1399 = vmatpush1.bf16.msra.mxu0 %v1376
  %1400 = vmatprep.subr.bf16.mxu0 0
  %1401 = vmatpush1.bf16.msra.mxu0 %v1377
  %1402 = vmatprep.subr.bf16.mxu0 0
  %1403 = vmatpush1.bf16.msra.mxu0 0
  %1404 = vmatprep.subr.bf16.mxu0 0
  %1405 = vmatpush1.bf16.msra.mxu0 0
  %1406 = vmatprep.subr.bf16.mxu0 0
  %1407 = vmatpush1.bf16.msra.mxu0 0
  %1408 = vmatprep.subr.bf16.mxu0 0
  %1409 = vmatpush1.bf16.msra.mxu0 0
  %1410 = vmatprep.subr.bf16.mxu0 0
  %1411 = vmatpush1.bf16.msra.mxu0 0
  %1412 = vmatprep.subr.bf16.mxu0 0
  %1413 = vmatpush1.bf16.msra.mxu0 0
  %1414 = vmatprep.subr.bf16.mxu0 0
  %1415 = vmatpush1.bf16.msra.mxu0 0
  %1416 = vmatprep.subr.bf16.mxu0 0
  %1417 = vmatpush1.bf16.msra.mxu0 0
  %1418 = vmatprep.mubr.bf16.mxu0 0
  %1419 = vmatmul.mubr.bf16.gmra.mrb[0].mxu0 %v1215
  %v1420 = vpop.f32.mrb[0].mxu0
  %v1421 = vadd.f32 0.0, %v1420
  %v1422 = vpop.f32.mrb[0].mxu0
  %v1423 = vpop.f32.mrb[0].mxu0
  %v1424 = vadd.f32 0.0, %v1423
  %v1425 = vpop.f32.mrb[0].mxu0
  %1426 = vdwg.mxu0
  %s1427 = scalar_lea.vmem %s7, 128
  %v1428 = vld [vmem:[%s1427] sm:$0xf]
  %v1429 = vld [vmem:[%s1427 + $0x4] sm:$0xf]
  %v1430 = vld [vmem:[%s1427 + $0x8] sm:$0xf]
  %v1431 = vld [vmem:[%s1427 + $0xc] sm:$0xf]
  %v1432 = vld [vmem:[%s1427 + $0x10] sm:$0xf]
  %v1433 = vld [vmem:[%s1427 + $0x14] sm:$0xf]
  %v1434 = vld [vmem:[%s1427 + $0x18] sm:$0xf]
  %v1435 = vld [vmem:[%s1427 + $0x1c] sm:$0xf]
  %v1436 = vld [vmem:[%s1427 + $0x20] sm:$0xf]
  %v1437 = vld [vmem:[%s1427 + $0x24] sm:$0xf]
  %v1438 = vld [vmem:[%s1427 + $0x28] sm:$0xf]
  %v1439 = vld [vmem:[%s1427 + $0x2c] sm:$0xf]
  %v1440 = vld [vmem:[%s1427 + $0x30] sm:$0xf]
  %v1441 = vld [vmem:[%s1427 + $0x34] sm:$0xf]
  %v1442 = vld [vmem:[%s1427 + $0x38] sm:$0xf]
  %v1443 = vld [vmem:[%s1427 + $0x3c] sm:$0xf]
  %v1460 = vunpack.c.l.b16 %v1428
  %v1461 = vunpack.c.l.b16 %v1429
  %v1462 = vunpack.c.l.b16 %v1430
  %v1463 = vunpack.c.l.b16 %v1431
  %v1464 = vunpack.c.l.b16 %v1432
  %v1465 = vunpack.c.l.b16 %v1433
  %v1466 = vunpack.c.l.b16 %v1434
  %v1467 = vunpack.c.l.b16 %v1435
  %v1468 = vunpack.c.l.b16 %v1436
  %v1469 = vunpack.c.l.b16 %v1437
  %v1470 = vunpack.c.l.b16 %v1438
  %v1471 = vunpack.c.l.b16 %v1439
  %v1472 = vunpack.c.l.b16 %v1440
  %v1473 = vunpack.c.l.b16 %v1441
  %v1474 = vunpack.c.l.b16 %v1442
  %v1475 = vunpack.c.l.b16 %v1443
  %v1476 = vpack.c.b16 %v1461, %v1460
  %v1477 = vpack.c.b16 %v1463, %v1462
  %v1478 = vpack.c.b16 %v1465, %v1464
  %v1479 = vpack.c.b16 %v1467, %v1466
  %v1480 = vpack.c.b16 %v1469, %v1468
  %v1481 = vpack.c.b16 %v1471, %v1470
  %v1482 = vpack.c.b16 %v1473, %v1472
  %v1483 = vpack.c.b16 %v1475, %v1474
  %1492 = vmatprep.subr.bf16.mxu0 0
  %1493 = vmatpush1.bf16.msra.mxu0 %v1476
  %1494 = vmatprep.subr.bf16.mxu0 0
  %1495 = vmatpush1.bf16.msra.mxu0 %v1477
  %1496 = vmatprep.subr.bf16.mxu0 0
  %1497 = vmatpush1.bf16.msra.mxu0 %v1478
  %1498 = vmatprep.subr.bf16.mxu0 0
  %1499 = vmatpush1.bf16.msra.mxu0 %v1479
  %1500 = vmatprep.subr.bf16.mxu0 0
  %1501 = vmatpush1.bf16.msra.mxu0 %v1480
  %1502 = vmatprep.subr.bf16.mxu0 0
  %1503 = vmatpush1.bf16.msra.mxu0 %v1481
  %1504 = vmatprep.subr.bf16.mxu0 0
  %1505 = vmatpush1.bf16.msra.mxu0 %v1482
  %1506 = vmatprep.subr.bf16.mxu0 0
  %1507 = vmatpush1.bf16.msra.mxu0 %v1483
  %1508 = vmatprep.subr.bf16.mxu0 0
  %1509 = vmatpush1.bf16.msra.mxu0 0
  %1510 = vmatprep.subr.bf16.mxu0 0
  %1511 = vmatpush1.bf16.msra.mxu0 0
  %1512 = vmatprep.subr.bf16.mxu0 0
  %1513 = vmatpush1.bf16.msra.mxu0 0
  %1514 = vmatprep.subr.bf16.mxu0 0
  %1515 = vmatpush1.bf16.msra.mxu0 0
  %1516 = vmatprep.subr.bf16.mxu0 0
  %1517 = vmatpush1.bf16.msra.mxu0 0
  %1518 = vmatprep.subr.bf16.mxu0 0
  %1519 = vmatpush1.bf16.msra.mxu0 0
  %1520 = vmatprep.subr.bf16.mxu0 0
  %1521 = vmatpush1.bf16.msra.mxu0 0
  %1522 = vmatprep.subr.bf16.mxu0 0
  %1523 = vmatpush1.bf16.msra.mxu0 0
  %1524 = vmatprep.mubr.bf16.mxu0 0
  %1525 = vmatmul.mubr.bf16.gmra.mrb[0].mxu0 %v1215
  %v1526 = vpop.f32.mrb[0].mxu0
  %v1527 = vadd.f32 0.0, %v1526
  %v1528 = vpop.f32.mrb[0].mxu0
  %v1529 = vpop.f32.mrb[0].mxu0
  %v1530 = vadd.f32 0.0, %v1529
  %v1531 = vpop.f32.mrb[0].mxu0
  %1532 = vdwg.mxu0
  %s1533 = scalar_lea.vmem %s7, 192
  %v1534 = vld [vmem:[%s1533] sm:$0xf]
  %v1535 = vld [vmem:[%s1533 + $0x4] sm:$0xf]
  %v1536 = vld [vmem:[%s1533 + $0x8] sm:$0xf]
  %v1537 = vld [vmem:[%s1533 + $0xc] sm:$0xf]
  %v1538 = vld [vmem:[%s1533 + $0x10] sm:$0xf]
  %v1539 = vld [vmem:[%s1533 + $0x14] sm:$0xf]
  %v1540 = vld [vmem:[%s1533 + $0x18] sm:$0xf]
  %v1541 = vld [vmem:[%s1533 + $0x1c] sm:$0xf]
  %v1542 = vld [vmem:[%s1533 + $0x20] sm:$0xf]
  %v1543 = vld [vmem:[%s1533 + $0x24] sm:$0xf]
  %v1544 = vld [vmem:[%s1533 + $0x28] sm:$0xf]
  %v1545 = vld [vmem:[%s1533 + $0x2c] sm:$0xf]
  %v1546 = vld [vmem:[%s1533 + $0x30] sm:$0xf]
  %v1547 = vld [vmem:[%s1533 + $0x34] sm:$0xf]
  %v1548 = vld [vmem:[%s1533 + $0x38] sm:$0xf]
  %v1549 = vld [vmem:[%s1533 + $0x3c] sm:$0xf]
  %v1566 = vunpack.c.l.b16 %v1534
  %v1567 = vunpack.c.l.b16 %v1535
  %v1568 = vunpack.c.l.b16 %v1536
  %v1569 = vunpack.c.l.b16 %v1537
  %v1570 = vunpack.c.l.b16 %v1538
  %v1571 = vunpack.c.l.b16 %v1539
  %v1572 = vunpack.c.l.b16 %v1540
  %v1573 = vunpack.c.l.b16 %v1541
  %v1574 = vunpack.c.l.b16 %v1542
  %v1575 = vunpack.c.l.b16 %v1543
  %v1576 = vunpack.c.l.b16 %v1544
  %v1577 = vunpack.c.l.b16 %v1545
  %v1578 = vunpack.c.l.b16 %v1546
  %v1579 = vunpack.c.l.b16 %v1547
  %v1580 = vunpack.c.l.b16 %v1548
  %v1581 = vunpack.c.l.b16 %v1549
  %v1582 = vpack.c.b16 %v1567, %v1566
  %v1583 = vpack.c.b16 %v1569, %v1568
  %v1584 = vpack.c.b16 %v1571, %v1570
  %v1585 = vpack.c.b16 %v1573, %v1572
  %v1586 = vpack.c.b16 %v1575, %v1574
  %v1587 = vpack.c.b16 %v1577, %v1576
  %v1588 = vpack.c.b16 %v1579, %v1578
  %v1589 = vpack.c.b16 %v1581, %v1580
  %1598 = vmatprep.subr.bf16.mxu0 0
  %1599 = vmatpush1.bf16.msra.mxu0 %v1582
  %1600 = vmatprep.subr.bf16.mxu0 0
  %1601 = vmatpush1.bf16.msra.mxu0 %v1583
  %1602 = vmatprep.subr.bf16.mxu0 0
  %1603 = vmatpush1.bf16.msra.mxu0 %v1584
  %1604 = vmatprep.subr.bf16.mxu0 0
  %1605 = vmatpush1.bf16.msra.mxu0 %v1585
  %1606 = vmatprep.subr.bf16.mxu0 0
  %1607 = vmatpush1.bf16.msra.mxu0 %v1586
  %1608 = vmatprep.subr.bf16.mxu0 0
  %1609 = vmatpush1.bf16.msra.mxu0 %v1587
  %1610 = vmatprep.subr.bf16.mxu0 0
  %1611 = vmatpush1.bf16.msra.mxu0 %v1588
  %1612 = vmatprep.subr.bf16.mxu0 0
  %1613 = vmatpush1.bf16.msra.mxu0 %v1589
  %1614 = vmatprep.subr.bf16.mxu0 0
  %1615 = vmatpush1.bf16.msra.mxu0 0
  %1616 = vmatprep.subr.bf16.mxu0 0
  %1617 = vmatpush1.bf16.msra.mxu0 0
  %1618 = vmatprep.subr.bf16.mxu0 0
  %1619 = vmatpush1.bf16.msra.mxu0 0
  %1620 = vmatprep.subr.bf16.mxu0 0
  %1621 = vmatpush1.bf16.msra.mxu0 0
  %1622 = vmatprep.subr.bf16.mxu0 0
  %1623 = vmatpush1.bf16.msra.mxu0 0
  %1624 = vmatprep.subr.bf16.mxu0 0
  %1625 = vmatpush1.bf16.msra.mxu0 0
  %1626 = vmatprep.subr.bf16.mxu0 0
  %1627 = vmatpush1.bf16.msra.mxu0 0
  %1628 = vmatprep.subr.bf16.mxu0 0
  %1629 = vmatpush1.bf16.msra.mxu0 0
  %1630 = vmatprep.mubr.bf16.mxu0 0
  %1631 = vmatmul.mubr.bf16.gmra.mrb[0].mxu0 %v1215
  %v1632 = vpop.f32.mrb[0].mxu0
  %v1633 = vadd.f32 0.0, %v1632
  %v1634 = vpop.f32.mrb[0].mxu0
  %v1635 = vpop.f32.mrb[0].mxu0
  %v1636 = vadd.f32 0.0, %v1635
  %v1637 = vpop.f32.mrb[0].mxu0
  %1638 = vdwg.mxu0
  %vm1639 = vcmask 517120
  %1640 = vst.msk [vmem:[#allocation4] sm:$0x3] %vm1639, %v1421
  %v1642 = vrot.slane %v1527, 6
  %v1644 = vadd.f32 %v1315, %v1642
  %vm1645 = vcmask 519170
  %1646 = vst.msk [vmem:[#allocation4] sm:$0xc] %vm1645, %v1644
  %v1648 = vrot.slane %v1633, 6
  %v1650 = vadd.f32 %v1421, %v1648
  %1651 = vst.msk [vmem:[#allocation4 + $0x2] sm:$0xc] %vm1645, %v1650
  %vm1652 = vcmask 521220
  %1653 = vst.msk [vmem:[#allocation4 + $0x2] sm:$0x30] %vm1652, %v1644
  %1654 = vst.msk [vmem:[#allocation4 + $0x4] sm:$0x30] %vm1652, %v1650
  %vm1655 = vcmask 523270
  %1656 = vst.msk [vmem:[#allocation4 + $0x4] sm:$0xc0] %vm1655, %v1644
  %1657 = vst.msk [vmem:[#allocation4 + $0x6] sm:$0xc0] %vm1655, %v1650
  %v1658 = vadd.f32 %v1318, %v1642
  %1659 = vst.msk [vmem:[#allocation4 + $0xe] sm:$0x3] %vm1639, %v1658
  %v1660 = vadd.f32 %v1424, %v1648
  %1661 = vst.msk [vmem:[#allocation4 + $0x10] sm:$0x3] %vm1639, %v1660
  %v1663 = vrot.slane %v1530, 6
  %v1665 = vadd.f32 %v1318, %v1663
  %1666 = vst.msk [vmem:[#allocation4 + $0x10] sm:$0xc] %vm1645, %v1665
  %v1668 = vrot.slane %v1636, 6
  %v1670 = vadd.f32 %v1424, %v1668
  %1671 = vst.msk [vmem:[#allocation4 + $0x12] sm:$0xc] %vm1645, %v1670
  %1672 = vst.msk [vmem:[#allocation4 + $0x12] sm:$0x30] %vm1652, %v1665
  %1673 = vst.msk [vmem:[#allocation4 + $0x14] sm:$0x30] %vm1652, %v1670
  %1674 = vst.msk [vmem:[#allocation4 + $0x14] sm:$0xc0] %vm1655, %v1665
  %1675 = vst.msk [vmem:[#allocation4 + $0x16] sm:$0xc0] %vm1655, %v1670
  %1676 = vst.msk [vmem:[#allocation4 + $0x18] sm:$0xc0] %vm1655, %v1530
  %v1677 = vld [vmem:[#allocation4] sm:$0xff]
  %v1678 = vld [vmem:[#allocation4 + $0x8] sm:$0xff]
  %v1679 = vld [vmem:[#allocation4 + $0x10] sm:$0xff]
  %v1680 = vld [vmem:[#allocation4 + $0x18] sm:$0xff]
  %vm1681 = vcmask 523264
  %v1682 = vsel %vm1681, %v1677, 0.0
  %v1683 = vsel %vm1681, %v1678, 0.0
  %v1684 = vadd.f32 %v1682, %v1683
  %v1685 = vsel %vm1681, %v1679, 0.0
  %v1686 = vadd.f32 %v1684, %v1685
  %v1687 = vsel %vm1681, %v1680, 0.0
  %v1688 = vadd.f32 %v1686, %v1687
  %v1689 = vrot.slane %v1688, 4
  %v1690 = vadd.f32 %v1688, %v1689
  %v1691 = vrot.slane %v1690, 2
  %v1692 = vadd.f32 %v1690, %v1691
  %v1693 = vrot.slane %v1692, 1
  %v1694 = vadd.f32 %v1692, %v1693
  %v1695 = vmul.f32 %v1694, 0.03125
  %v1696 = vsub.f32 %v1677, %v1695
  %v1697 = vsub.f32 %v1678, %v1695
  %v1698 = vsub.f32 %v1679, %v1695
  %v1699 = vsub.f32 %v1680, %v1695
  %v1700 = vmul.f32 %v1696, %v1696
  %v1701 = vmul.f32 %v1697, %v1697
  %v1702 = vmul.f32 %v1698, %v1698
  %v1703 = vmul.f32 %v1699, %v1699
  %v1704 = vsel %vm1681, %v1700, 0.0
  %v1705 = vsel %vm1681, %v1701, 0.0
  %v1706 = vadd.f32 %v1704, %v1705
  %v1707 = vsel %vm1681, %v1702, 0.0
  %v1708 = vadd.f32 %v1706, %v1707
  %v1709 = vsel %vm1681, %v1703, 0.0
  %v1710 = vadd.f32 %v1708, %v1709
  %v1711 = vrot.slane %v1710, 4
  %v1712 = vadd.f32 %v1710, %v1711
  %v1713 = vrot.slane %v1712, 2
  %v1714 = vadd.f32 %v1712, %v1713
  %v1715 = vrot.slane %v1714, 1
  %v1716 = vadd.f32 %v1714, %v1715
  %v1717 = vmul.f32 %v1716, 0.03125
  %v1718 = vld [vmem:[%s8] sm:$0x1]
  %v1719 = vadd.f32 %v1717, 1e-05
  %v1720 = vrsqrt.pop %v1719
  %v1721 = vmul.f32 %v1718, %v1720
  %v1722 = vld [vmem:[%s9] sm:$0x1]
  %v1723 = vmul.f32 %v1695, %v1721
  %v1724 = vsub.f32 %v1722, %v1723
  %v1726 = vlaneseq
  %v1727 = vshrl.u32 %v1726, 7
  %v1728 = vsub.s32 0, %v1727
  %v1729 = vrot.slane %v1721, %v1728
  %v1731 = vmul.f32 %v1677, %v1729
  %v1732 = vmul.f32 %v1678, %v1729
  %v1733 = vmul.f32 %v1679, %v1729
  %v1734 = vmul.f32 %v1680, %v1729
  %v1736 = vlaneseq
  %v1737 = vshrl.u32 %v1736, 7
  %v1738 = vsub.s32 0, %v1737
  %v1739 = vrot.slane %v1724, %v1738
  %v1741 = vadd.f32 %v1731, %v1739
  %v1742 = vadd.f32 %v1732, %v1739
  %v1743 = vadd.f32 %v1733, %v1739
  %v1744 = vadd.f32 %v1734, %v1739
  %v1745 = vmax.f32 %v1741, 0.0
  %v1746 = vmax.f32 %v1742, 0.0
  %v1747 = vmax.f32 %v1743, 0.0
  %v1748 = vmax.f32 %v1744, 0.0
  %v1749 = vpack.c.bf16 %v1746, %v1745
  %v1750 = vpack.c.bf16 %v1748, %v1747
  %v1751 = vld [vmem:[%s10] sm:$0xf]
  %v1752 = vld [vmem:[%s10 + $0x4] sm:$0xf]
  %v1753 = vld [vmem:[%s10 + $0x8] sm:$0xf]
  %v1754 = vld [vmem:[%s10 + $0xc] sm:$0xf]
  %v1755 = vld [vmem:[%s10 + $0x10] sm:$0xf]
  %v1756 = vld [vmem:[%s10 + $0x14] sm:$0xf]
  %v1757 = vld [vmem:[%s10 + $0x18] sm:$0xf]
  %v1758 = vld [vmem:[%s10 + $0x1c] sm:$0xf]
  %v1767 = vunpack.c.l.b16 %v1751
  %v1768 = vunpack.c.l.b16 %v1752
  %v1769 = vunpack.c.l.b16 %v1753
  %v1770 = vunpack.c.l.b16 %v1754
  %v1771 = vunpack.c.l.b16 %v1755
  %v1772 = vunpack.c.l.b16 %v1756
  %v1773 = vunpack.c.l.b16 %v1757
  %v1774 = vunpack.c.l.b16 %v1758
  %v1775 = vpack.c.b16 %v1768, %v1767
  %v1776 = vpack.c.b16 %v1770, %v1769
  %v1777 = vpack.c.b16 %v1772, %v1771
  %v1778 = vpack.c.b16 %v1774, %v1773
  %v1784 = vsel %vm1681, %v1749, 0
  %v1787 = vsel %vm1681, %v1750, 0
  %1789 = vmatprep.subr.bf16.mxu0 0
  %1790 = vmatpush1.bf16.msra.mxu0 %v1775
  %1791 = vmatprep.subr.bf16.mxu0 0
  %1792 = vmatpush1.bf16.msra.mxu0 %v1776
  %1793 = vmatprep.subr.bf16.mxu0 0
  %1794 = vmatpush1.bf16.msra.mxu0 %v1777
  %1795 = vmatprep.subr.bf16.mxu0 0
  %1796 = vmatpush1.bf16.msra.mxu0 %v1778
  %1797 = vmatprep.subr.bf16.mxu0 0
  %1798 = vmatpush1.bf16.msra.mxu0 0
  %1799 = vmatprep.subr.bf16.mxu0 0
  %1800 = vmatpush1.bf16.msra.mxu0 0
  %1801 = vmatprep.subr.bf16.mxu0 0
  %1802 = vmatpush1.bf16.msra.mxu0 0
  %1803 = vmatprep.subr.bf16.mxu0 0
  %1804 = vmatpush1.bf16.msra.mxu0 0
  %1805 = vmatprep.subr.bf16.mxu0 0
  %1806 = vmatpush1.bf16.msra.mxu0 0
  %1807 = vmatprep.subr.bf16.mxu0 0
  %1808 = vmatpush1.bf16.msra.mxu0 0
  %1809 = vmatprep.subr.bf16.mxu0 0
  %1810 = vmatpush1.bf16.msra.mxu0 0
  %1811 = vmatprep.subr.bf16.mxu0 0
  %1812 = vmatpush1.bf16.msra.mxu0 0
  %1813 = vmatprep.subr.bf16.mxu0 0
  %1814 = vmatpush1.bf16.msra.mxu0 0
  %1815 = vmatprep.subr.bf16.mxu0 0
  %1816 = vmatpush1.bf16.msra.mxu0 0
  %1817 = vmatprep.subr.bf16.mxu0 0
  %1818 = vmatpush1.bf16.msra.mxu0 0
  %1819 = vmatprep.subr.bf16.mxu0 0
  %1820 = vmatpush1.bf16.msra.mxu0 0
  %1821 = vmatprep.mubr.bf16.mxu0 0
  %1822 = vmatmul.mubr.bf16.gmra.mrb[0].mxu0 %v1784
  %v1823 = vpop.f32.mrb[0].mxu0
  %v1824 = vadd.f32 0.0, %v1823
  %v1825 = vpop.f32.mrb[0].mxu0
  %v1826 = vpop.f32.mrb[0].mxu0
  %v1827 = vadd.f32 0.0, %v1826
  %v1828 = vpop.f32.mrb[0].mxu0
  %1829 = vmatprep.mubr.bf16.mxu0 0
  %1830 = vmatmul.mubr.bf16.gmra.mrb[0].mxu0 %v1787
  %v1831 = vpop.f32.mrb[0].mxu0
  %v1832 = vadd.f32 0.0, %v1831
  %v1833 = vpop.f32.mrb[0].mxu0
  %v1834 = vpop.f32.mrb[0].mxu0
  %v1835 = vadd.f32 0.0, %v1834
  %v1836 = vpop.f32.mrb[0].mxu0
  %1837 = vdwg.mxu0
  %s1838 = scalar_lea.vmem %s10, 32
  %v1839 = vld [vmem:[%s1838] sm:$0xf]
  %v1840 = vld [vmem:[%s1838 + $0x4] sm:$0xf]
  %v1841 = vld [vmem:[%s1838 + $0x8] sm:$0xf]
  %v1842 = vld [vmem:[%s1838 + $0xc] sm:$0xf]
  %v1843 = vld [vmem:[%s1838 + $0x10] sm:$0xf]
  %v1844 = vld [vmem:[%s1838 + $0x14] sm:$0xf]
  %v1845 = vld [vmem:[%s1838 + $0x18] sm:$0xf]
  %v1846 = vld [vmem:[%s1838 + $0x1c] sm:$0xf]
  %v1855 = vunpack.c.l.b16 %v1839
  %v1856 = vunpack.c.l.b16 %v1840
  %v1857 = vunpack.c.l.b16 %v1841
  %v1858 = vunpack.c.l.b16 %v1842
  %v1859 = vunpack.c.l.b16 %v1843
  %v1860 = vunpack.c.l.b16 %v1844
  %v1861 = vunpack.c.l.b16 %v1845
  %v1862 = vunpack.c.l.b16 %v1846
  %v1863 = vpack.c.b16 %v1856, %v1855
  %v1864 = vpack.c.b16 %v1858, %v1857
  %v1865 = vpack.c.b16 %v1860, %v1859
  %v1866 = vpack.c.b16 %v1862, %v1861
  %1871 = vmatprep.subr.bf16.mxu0 0
  %1872 = vmatpush1.bf16.msra.mxu0 %v1863
  %1873 = vmatprep.subr.bf16.mxu0 0
  %1874 = vmatpush1.bf16.msra.mxu0 %v1864
  %1875 = vmatprep.subr.bf16.mxu0 0
  %1876 = vmatpush1.bf16.msra.mxu0 %v1865
  %1877 = vmatprep.subr.bf16.mxu0 0
  %1878 = vmatpush1.bf16.msra.mxu0 %v1866
  %1879 = vmatprep.subr.bf16.mxu0 0
  %1880 = vmatpush1.bf16.msra.mxu0 0
  %1881 = vmatprep.subr.bf16.mxu0 0
  %1882 = vmatpush1.bf16.msra.mxu0 0
  %1883 = vmatprep.subr.bf16.mxu0 0
  %1884 = vmatpush1.bf16.msra.mxu0 0
  %1885 = vmatprep.subr.bf16.mxu0 0
  %1886 = vmatpush1.bf16.msra.mxu0 0
  %1887 = vmatprep.subr.bf16.mxu0 0
  %1888 = vmatpush1.bf16.msra.mxu0 0
  %1889 = vmatprep.subr.bf16.mxu0 0
  %1890 = vmatpush1.bf16.msra.mxu0 0
  %1891 = vmatprep.subr.bf16.mxu0 0
  %1892 = vmatpush1.bf16.msra.mxu0 0
  %1893 = vmatprep.subr.bf16.mxu0 0
  %1894 = vmatpush1.bf16.msra.mxu0 0
  %1895 = vmatprep.subr.bf16.mxu0 0
  %1896 = vmatpush1.bf16.msra.mxu0 0
  %1897 = vmatprep.subr.bf16.mxu0 0
  %1898 = vmatpush1.bf16.msra.mxu0 0
  %1899 = vmatprep.subr.bf16.mxu0 0
  %1900 = vmatpush1.bf16.msra.mxu0 0
  %1901 = vmatprep.subr.bf16.mxu0 0
  %1902 = vmatpush1.bf16.msra.mxu0 0
  %1903 = vmatprep.mubr.bf16.mxu0 0
  %1904 = vmatmul.mubr.bf16.gmra.mrb[0].mxu0 %v1784
  %v1905 = vpop.f32.mrb[0].mxu0
  %v1906 = vadd.f32 0.0, %v1905
  %v1907 = vpop.f32.mrb[0].mxu0
  %v1908 = vpop.f32.mrb[0].mxu0
  %v1909 = vadd.f32 0.0, %v1908
  %v1910 = vpop.f32.mrb[0].mxu0
  %1911 = vmatprep.mubr.bf16.mxu0 0
  %1912 = vmatmul.mubr.bf16.gmra.mrb[0].mxu0 %v1787
  %v1913 = vpop.f32.mrb[0].mxu0
  %v1914 = vadd.f32 0.0, %v1913
  %v1915 = vpop.f32.mrb[0].mxu0
  %v1916 = vpop.f32.mrb[0].mxu0
  %v1917 = vadd.f32 0.0, %v1916
  %v1918 = vpop.f32.mrb[0].mxu0
  %1919 = vdwg.mxu0
  %s1920 = scalar_lea.vmem %s10, 64
  %v1921 = vld [vmem:[%s1920] sm:$0xf]
  %v1922 = vld [vmem:[%s1920 + $0x4] sm:$0xf]
  %v1923 = vld [vmem:[%s1920 + $0x8] sm:$0xf]
  %v1924 = vld [vmem:[%s1920 + $0xc] sm:$0xf]
  %v1925 = vld [vmem:[%s1920 + $0x10] sm:$0xf]
  %v1926 = vld [vmem:[%s1920 + $0x14] sm:$0xf]
  %v1927 = vld [vmem:[%s1920 + $0x18] sm:$0xf]
  %v1928 = vld [vmem:[%s1920 + $0x1c] sm:$0xf]
  %v1937 = vunpack.c.l.b16 %v1921
  %v1938 = vunpack.c.l.b16 %v1922
  %v1939 = vunpack.c.l.b16 %v1923
  %v1940 = vunpack.c.l.b16 %v1924
  %v1941 = vunpack.c.l.b16 %v1925
  %v1942 = vunpack.c.l.b16 %v1926
  %v1943 = vunpack.c.l.b16 %v1927
  %v1944 = vunpack.c.l.b16 %v1928
  %v1945 = vpack.c.b16 %v1938, %v1937
  %v1946 = vpack.c.b16 %v1940, %v1939
  %v1947 = vpack.c.b16 %v1942, %v1941
  %v1948 = vpack.c.b16 %v1944, %v1943
  %1953 = vmatprep.subr.bf16.mxu0 0
  %1954 = vmatpush1.bf16.msra.mxu0 %v1945
  %1955 = vmatprep.subr.bf16.mxu0 0
  %1956 = vmatpush1.bf16.msra.mxu0 %v1946
  %1957 = vmatprep.subr.bf16.mxu0 0
  %1958 = vmatpush1.bf16.msra.mxu0 %v1947
  %1959 = vmatprep.subr.bf16.mxu0 0
  %1960 = vmatpush1.bf16.msra.mxu0 %v1948
  %1961 = vmatprep.subr.bf16.mxu0 0
  %1962 = vmatpush1.bf16.msra.mxu0 0
  %1963 = vmatprep.subr.bf16.mxu0 0
  %1964 = vmatpush1.bf16.msra.mxu0 0
  %1965 = vmatprep.subr.bf16.mxu0 0
  %1966 = vmatpush1.bf16.msra.mxu0 0
  %1967 = vmatprep.subr.bf16.mxu0 0
  %1968 = vmatpush1.bf16.msra.mxu0 0
  %1969 = vmatprep.subr.bf16.mxu0 0
  %1970 = vmatpush1.bf16.msra.mxu0 0
  %1971 = vmatprep.subr.bf16.mxu0 0
  %1972 = vmatpush1.bf16.msra.mxu0 0
  %1973 = vmatprep.subr.bf16.mxu0 0
  %1974 = vmatpush1.bf16.msra.mxu0 0
  %1975 = vmatprep.subr.bf16.mxu0 0
  %1976 = vmatpush1.bf16.msra.mxu0 0
  %1977 = vmatprep.subr.bf16.mxu0 0
  %1978 = vmatpush1.bf16.msra.mxu0 0
  %1979 = vmatprep.subr.bf16.mxu0 0
  %1980 = vmatpush1.bf16.msra.mxu0 0
  %1981 = vmatprep.subr.bf16.mxu0 0
  %1982 = vmatpush1.bf16.msra.mxu0 0
  %1983 = vmatprep.subr.bf16.mxu0 0
  %1984 = vmatpush1.bf16.msra.mxu0 0
  %1985 = vmatprep.mubr.bf16.mxu0 0
  %1986 = vmatmul.mubr.bf16.gmra.mrb[0].mxu0 %v1784
  %v1987 = vpop.f32.mrb[0].mxu0
  %v1988 = vadd.f32 0.0, %v1987
  %v1989 = vpop.f32.mrb[0].mxu0
  %v1990 = vpop.f32.mrb[0].mxu0
  %v1991 = vadd.f32 0.0, %v1990
  %v1992 = vpop.f32.mrb[0].mxu0
  %1993 = vmatprep.mubr.bf16.mxu0 0
  %1994 = vmatmul.mubr.bf16.gmra.mrb[0].mxu0 %v1787
  %v1995 = vpop.f32.mrb[0].mxu0
  %v1996 = vadd.f32 0.0, %v1995
  %v1997 = vpop.f32.mrb[0].mxu0
  %v1998 = vpop.f32.mrb[0].mxu0
  %v1999 = vadd.f32 0.0, %v1998
  %v2000 = vpop.f32.mrb[0].mxu0
  %2001 = vdwg.mxu0
  %vm2002 = vcmask 261120
  %2003 = vst.msk [vmem:[#allocation5] sm:$0xff] %vm2002, 0.0
  %2004 = vst.msk [vmem:[#allocation5 + $0x8] sm:$0xff] %vm2002, 0.0
  %2005 = vst.msk [vmem:[#allocation5 + $0x10] sm:$0xff] %vm2002, 0.0
  %vm2006 = vcmask 257024
  %2007 = vst.msk [vmem:[#allocation5 + $0x18] sm:$0xf] %vm2006, 0.0
  %v2008 = vld [vmem:[#allocation5] sm:$0xff]
  %v2009 = vld [vmem:[#allocation5 + $0x8] sm:$0xff]
  %v2010 = vld [vmem:[#allocation5 + $0x10] sm:$0xff]
  %v2011 = vld [vmem:[#allocation5 + $0x18] sm:$0xf]
  %vm2016 = vcmask 1043456
  %v2017 = vrot.slane %v1824, 4
  %v2018 = vrot.slane %v1827, 4
  %v2019 = vsel %vm2016, %v2017, %v2018
  %v2020 = vrot.slane %v1832, 4
  %v2021 = vsel %vm2016, %v2018, %v2020
  %v2022 = vrot.slane %v1835, 4
  %v2023 = vsel %vm2016, %v2020, %v2022
  %v2028 = vadd.f32 %v2008, %v2019
  %v2029 = vadd.f32 %v2009, %v2021
  %v2030 = vadd.f32 %v2010, %v2023
  %v2031 = vadd.f32 %v2011, %v2022
  %2032 = vst.msk [vmem:[#allocation5] sm:$0xff] %vm2002, %v2028
  %2033 = vst.msk [vmem:[#allocation5 + $0x8] sm:$0xff] %vm2002, %v2029
  %2034 = vst.msk [vmem:[#allocation5 + $0x10] sm:$0xff] %vm2002, %v2030
  %2035 = vst.msk [vmem:[#allocation5 + $0x18] sm:$0xf] %vm2006, %v2031
  %v2036 = vld [vmem:[#allocation5] sm:$0xff]
  %v2037 = vld [vmem:[#allocation5 + $0x8] sm:$0xff]
  %v2038 = vld [vmem:[#allocation5 + $0x10] sm:$0xff]
  %v2039 = vld [vmem:[#allocation5 + $0x18] sm:$0xf]
  %vm2044 = vcmask 1045504
  %v2045 = vrot.slane %v1906, 2
  %v2046 = vrot.slane %v1909, 2
  %v2047 = vsel %vm2044, %v2045, %v2046
  %v2048 = vrot.slane %v1914, 2
  %v2049 = vsel %vm2044, %v2046, %v2048
  %v2050 = vrot.slane %v1917, 2
  %v2051 = vsel %vm2044, %v2048, %v2050
  %v2056 = vadd.f32 %v2036, %v2047
  %v2057 = vadd.f32 %v2037, %v2049
  %v2058 = vadd.f32 %v2038, %v2051
  %v2059 = vadd.f32 %v2039, %v2050
  %2060 = vst.msk [vmem:[#allocation5] sm:$0xff] %vm2002, %v2056
  %2061 = vst.msk [vmem:[#allocation5 + $0x8] sm:$0xff] %vm2002, %v2057
  %2062 = vst.msk [vmem:[#allocation5 + $0x10] sm:$0xff] %vm2002, %v2058
  %2063 = vst.msk [vmem:[#allocation5 + $0x18] sm:$0xf] %vm2006, %v2059
  %v2064 = vld [vmem:[#allocation5] sm:$0xff]
  %v2065 = vld [vmem:[#allocation5 + $0x8] sm:$0xff]
  %v2066 = vld [vmem:[#allocation5 + $0x10] sm:$0xff]
  %v2067 = vld [vmem:[#allocation5 + $0x18] sm:$0xf]
  %v2068 = vadd.f32 %v2064, %v1988
  %v2069 = vadd.f32 %v2065, %v1991
  %v2070 = vadd.f32 %v2066, %v1996
  %v2071 = vadd.f32 %v2067, %v1999
  %2072 = vst.msk [vmem:[#allocation5] sm:$0xff] %vm2002, %v2068
  %2073 = vst.msk [vmem:[#allocation5 + $0x8] sm:$0xff] %vm2002, %v2069
  %2074 = vst.msk [vmem:[#allocation5 + $0x10] sm:$0xff] %vm2002, %v2070
  %2075 = vst.msk [vmem:[#allocation5 + $0x18] sm:$0xf] %vm2006, %v2071
  %v2076 = vld [vmem:[#allocation5] sm:$0xff]
  %v2077 = vld [vmem:[#allocation5 + $0x8] sm:$0xff]
  %v2078 = vld [vmem:[#allocation5 + $0x10] sm:$0xff]
  %v2079 = vld [vmem:[#allocation5 + $0x18] sm:$0xf]
  %v2080 = vsel %vm2002, %v2076, 0.0
  %v2081 = vsel %vm2002, %v2077, 0.0
  %v2082 = vadd.f32 %v2080, %v2081
  %v2083 = vsel %vm2002, %v2078, 0.0
  %v2084 = vadd.f32 %v2082, %v2083
  %v2085 = vsel %vm2006, %v2079, 0.0
  %v2086 = vadd.f32 %v2084, %v2085
  %v2087 = vrot.slane %v2086, 4
  %v2088 = vadd.f32 %v2086, %v2087
  %v2089 = vrot.slane %v2088, 2
  %v2090 = vadd.f32 %v2088, %v2089
  %v2091 = vrot.slane %v2090, 1
  %v2092 = vadd.f32 %v2090, %v2091
  %v2093 = vmul.f32 %v2092, 0.035714287
  %v2094 = vsub.f32 %v2076, %v2093
  %v2095 = vsub.f32 %v2077, %v2093
  %v2096 = vsub.f32 %v2078, %v2093
  %v2097 = vsub.f32 %v2079, %v2093
  %v2098 = vmul.f32 %v2094, %v2094
  %v2099 = vmul.f32 %v2095, %v2095
  %v2100 = vmul.f32 %v2096, %v2096
  %v2101 = vmul.f32 %v2097, %v2097
  %v2102 = vsel %vm2002, %v2098, 0.0
  %v2103 = vsel %vm2002, %v2099, 0.0
  %v2104 = vadd.f32 %v2102, %v2103
  %v2105 = vsel %vm2002, %v2100, 0.0
  %v2106 = vadd.f32 %v2104, %v2105
  %v2107 = vsel %vm2006, %v2101, 0.0
  %v2108 = vadd.f32 %v2106, %v2107
  %v2109 = vrot.slane %v2108, 4
  %v2110 = vadd.f32 %v2108, %v2109
  %v2111 = vrot.slane %v2110, 2
  %v2112 = vadd.f32 %v2110, %v2111
  %v2113 = vrot.slane %v2112, 1
  %v2114 = vadd.f32 %v2112, %v2113
  %v2115 = vmul.f32 %v2114, 0.035714287
  %v2116 = vld [vmem:[%s11] sm:$0x1]
  %v2117 = vadd.f32 %v2115, 1e-05
  %v2118 = vrsqrt.pop %v2117
  %v2119 = vmul.f32 %v2116, %v2118
  %v2120 = vld [vmem:[%s12] sm:$0x1]
  %v2121 = vmul.f32 %v2093, %v2119
  %v2122 = vsub.f32 %v2120, %v2121
  %v2124 = vlaneseq
  %v2125 = vshrl.u32 %v2124, 7
  %v2126 = vsub.s32 0, %v2125
  %v2127 = vrot.slane %v2119, %v2126
  %v2129 = vmul.f32 %v2076, %v2127
  %v2130 = vmul.f32 %v2077, %v2127
  %v2131 = vmul.f32 %v2078, %v2127
  %v2132 = vmul.f32 %v2079, %v2127
  %v2134 = vlaneseq
  %v2135 = vshrl.u32 %v2134, 7
  %v2136 = vsub.s32 0, %v2135
  %v2137 = vrot.slane %v2122, %v2136
  %v2139 = vadd.f32 %v2129, %v2137
  %v2140 = vadd.f32 %v2130, %v2137
  %v2141 = vadd.f32 %v2131, %v2137
  %v2142 = vadd.f32 %v2132, %v2137
  %v2143 = vmax.f32 %v2139, 0.0
  %v2144 = vmax.f32 %v2140, 0.0
  %v2145 = vmax.f32 %v2141, 0.0
  %v2146 = vmax.f32 %v2142, 0.0
  %v2147 = vpack.c.bf16 %v2144, %v2143
  %v2148 = vpack.c.bf16 %v2146, %v2145
  %v2149 = vld [vmem:[%s13] sm:$0xf]
  %v2150 = vld [vmem:[%s13 + $0x4] sm:$0xf]
  %v2151 = vld [vmem:[%s13 + $0x8] sm:$0xf]
  %v2152 = vld [vmem:[%s13 + $0xc] sm:$0xf]
  %v2157 = vunpack.c.l.b16 %v2149
  %v2158 = vunpack.c.l.b16 %v2150
  %v2159 = vunpack.c.l.b16 %v2151
  %v2160 = vunpack.c.l.b16 %v2152
  %v2161 = vpack.c.b16 %v2158, %v2157
  %v2162 = vpack.c.b16 %v2160, %v2159
  %v2166 = vsel %vm2002, %v2147, 0
  %v2169 = vsel %vm2002, %v2148, 0
  %2171 = vmatprep.subr.bf16.mxu0 0
  %2172 = vmatpush1.bf16.msra.mxu0 %v2161
  %2173 = vmatprep.subr.bf16.mxu0 0
  %2174 = vmatpush1.bf16.msra.mxu0 %v2162
  %2175 = vmatprep.subr.bf16.mxu0 0
  %2176 = vmatpush1.bf16.msra.mxu0 0
  %2177 = vmatprep.subr.bf16.mxu0 0
  %2178 = vmatpush1.bf16.msra.mxu0 0
  %2179 = vmatprep.subr.bf16.mxu0 0
  %2180 = vmatpush1.bf16.msra.mxu0 0
  %2181 = vmatprep.subr.bf16.mxu0 0
  %2182 = vmatpush1.bf16.msra.mxu0 0
  %2183 = vmatprep.subr.bf16.mxu0 0
  %2184 = vmatpush1.bf16.msra.mxu0 0
  %2185 = vmatprep.subr.bf16.mxu0 0
  %2186 = vmatpush1.bf16.msra.mxu0 0
  %2187 = vmatprep.subr.bf16.mxu0 0
  %2188 = vmatpush1.bf16.msra.mxu0 0
  %2189 = vmatprep.subr.bf16.mxu0 0
  %2190 = vmatpush1.bf16.msra.mxu0 0
  %2191 = vmatprep.subr.bf16.mxu0 0
  %2192 = vmatpush1.bf16.msra.mxu0 0
  %2193 = vmatprep.subr.bf16.mxu0 0
  %2194 = vmatpush1.bf16.msra.mxu0 0
  %2195 = vmatprep.subr.bf16.mxu0 0
  %2196 = vmatpush1.bf16.msra.mxu0 0
  %2197 = vmatprep.subr.bf16.mxu0 0
  %2198 = vmatpush1.bf16.msra.mxu0 0
  %2199 = vmatprep.subr.bf16.mxu0 0
  %2200 = vmatpush1.bf16.msra.mxu0 0
  %2201 = vmatprep.subr.bf16.mxu0 0
  %2202 = vmatpush1.bf16.msra.mxu0 0
  %2203 = vmatprep.mubr.bf16.mxu0 0
  %2204 = vmatmul.mubr.bf16.gmra.mrb[0].mxu0 %v2166
  %v2205 = vpop.f32.mrb[0].mxu0
  %v2206 = vadd.f32 0.0, %v2205
  %v2207 = vpop.f32.mrb[0].mxu0
  %v2208 = vpop.f32.mrb[0].mxu0
  %v2209 = vadd.f32 0.0, %v2208
  %v2210 = vpop.f32.mrb[0].mxu0
  %2211 = vmatprep.mubr.bf16.mxu0 0
  %2212 = vmatmul.mubr.bf16.gmra.mrb[0].mxu0 %v2169
  %v2213 = vpop.f32.mrb[0].mxu0
  %v2214 = vadd.f32 0.0, %v2213
  %v2215 = vpop.f32.mrb[0].mxu0
  %v2216 = vpop.f32.mrb[0].mxu0
  %v2217 = vadd.f32 0.0, %v2216
  %v2218 = vpop.f32.mrb[0].mxu0
  %2219 = vdwg.mxu0
  %s2220 = scalar_lea.vmem %s13, 16
  %v2221 = vld [vmem:[%s2220] sm:$0xf]
  %v2222 = vld [vmem:[%s2220 + $0x4] sm:$0xf]
  %v2223 = vld [vmem:[%s2220 + $0x8] sm:$0xf]
  %v2224 = vld [vmem:[%s2220 + $0xc] sm:$0xf]
  %v2229 = vunpack.c.l.b16 %v2221
  %v2230 = vunpack.c.l.b16 %v2222
  %v2231 = vunpack.c.l.b16 %v2223
  %v2232 = vunpack.c.l.b16 %v2224
  %v2233 = vpack.c.b16 %v2230, %v2229
  %v2234 = vpack.c.b16 %v2232, %v2231
  %2237 = vmatprep.subr.bf16.mxu0 0
  %2238 = vmatpush1.bf16.msra.mxu0 %v2233
  %2239 = vmatprep.subr.bf16.mxu0 0
  %2240 = vmatpush1.bf16.msra.mxu0 %v2234
  %2241 = vmatprep.subr.bf16.mxu0 0
  %2242 = vmatpush1.bf16.msra.mxu0 0
  %2243 = vmatprep.subr.bf16.mxu0 0
  %2244 = vmatpush1.bf16.msra.mxu0 0
  %2245 = vmatprep.subr.bf16.mxu0 0
  %2246 = vmatpush1.bf16.msra.mxu0 0
  %2247 = vmatprep.subr.bf16.mxu0 0
  %2248 = vmatpush1.bf16.msra.mxu0 0
  %2249 = vmatprep.subr.bf16.mxu0 0
  %2250 = vmatpush1.bf16.msra.mxu0 0
  %2251 = vmatprep.subr.bf16.mxu0 0
  %2252 = vmatpush1.bf16.msra.mxu0 0
  %2253 = vmatprep.subr.bf16.mxu0 0
  %2254 = vmatpush1.bf16.msra.mxu0 0
  %2255 = vmatprep.subr.bf16.mxu0 0
  %2256 = vmatpush1.bf16.msra.mxu0 0
  %2257 = vmatprep.subr.bf16.mxu0 0
  %2258 = vmatpush1.bf16.msra.mxu0 0
  %2259 = vmatprep.subr.bf16.mxu0 0
  %2260 = vmatpush1.bf16.msra.mxu0 0
  %2261 = vmatprep.subr.bf16.mxu0 0
  %2262 = vmatpush1.bf16.msra.mxu0 0
  %2263 = vmatprep.subr.bf16.mxu0 0
  %2264 = vmatpush1.bf16.msra.mxu0 0
  %2265 = vmatprep.subr.bf16.mxu0 0
  %2266 = vmatpush1.bf16.msra.mxu0 0
  %2267 = vmatprep.subr.bf16.mxu0 0
  %2268 = vmatpush1.bf16.msra.mxu0 0
  %2269 = vmatprep.mubr.bf16.mxu0 0
  %2270 = vmatmul.mubr.bf16.gmra.mrb[0].mxu0 %v2166
  %v2271 = vpop.f32.mrb[0].mxu0
  %v2272 = vadd.f32 0.0, %v2271
  %v2273 = vpop.f32.mrb[0].mxu0
  %v2274 = vpop.f32.mrb[0].mxu0
  %v2275 = vadd.f32 0.0, %v2274
  %v2276 = vpop.f32.mrb[0].mxu0
  %2277 = vmatprep.mubr.bf16.mxu0 0
  %2278 = vmatmul.mubr.bf16.gmra.mrb[0].mxu0 %v2169
  %v2279 = vpop.f32.mrb[0].mxu0
  %v2280 = vadd.f32 0.0, %v2279
  %v2281 = vpop.f32.mrb[0].mxu0
  %v2282 = vpop.f32.mrb[0].mxu0
  %v2283 = vadd.f32 0.0, %v2282
  %v2284 = vpop.f32.mrb[0].mxu0
  %2285 = vdwg.mxu0
  %s2286 = scalar_lea.vmem %s13, 32
  %v2287 = vld [vmem:[%s2286] sm:$0xf]
  %v2288 = vld [vmem:[%s2286 + $0x4] sm:$0xf]
  %v2289 = vld [vmem:[%s2286 + $0x8] sm:$0xf]
  %v2290 = vld [vmem:[%s2286 + $0xc] sm:$0xf]
  %v2295 = vunpack.c.l.b16 %v2287
  %v2296 = vunpack.c.l.b16 %v2288
  %v2297 = vunpack.c.l.b16 %v2289
  %v2298 = vunpack.c.l.b16 %v2290
  %v2299 = vpack.c.b16 %v2296, %v2295
  %v2300 = vpack.c.b16 %v2298, %v2297
  %2303 = vmatprep.subr.bf16.mxu0 0
  %2304 = vmatpush1.bf16.msra.mxu0 %v2299
  %2305 = vmatprep.subr.bf16.mxu0 0
  %2306 = vmatpush1.bf16.msra.mxu0 %v2300
  %2307 = vmatprep.subr.bf16.mxu0 0
  %2308 = vmatpush1.bf16.msra.mxu0 0
  %2309 = vmatprep.subr.bf16.mxu0 0
  %2310 = vmatpush1.bf16.msra.mxu0 0
  %2311 = vmatprep.subr.bf16.mxu0 0
  %2312 = vmatpush1.bf16.msra.mxu0 0
  %2313 = vmatprep.subr.bf16.mxu0 0
  %2314 = vmatpush1.bf16.msra.mxu0 0
  %2315 = vmatprep.subr.bf16.mxu0 0
  %2316 = vmatpush1.bf16.msra.mxu0 0
  %2317 = vmatprep.subr.bf16.mxu0 0
  %2318 = vmatpush1.bf16.msra.mxu0 0
  %2319 = vmatprep.subr.bf16.mxu0 0
  %2320 = vmatpush1.bf16.msra.mxu0 0
  %2321 = vmatprep.subr.bf16.mxu0 0
  %2322 = vmatpush1.bf16.msra.mxu0 0
  %2323 = vmatprep.subr.bf16.mxu0 0
  %2324 = vmatpush1.bf16.msra.mxu0 0
  %2325 = vmatprep.subr.bf16.mxu0 0
  %2326 = vmatpush1.bf16.msra.mxu0 0
  %2327 = vmatprep.subr.bf16.mxu0 0
  %2328 = vmatpush1.bf16.msra.mxu0 0
  %2329 = vmatprep.subr.bf16.mxu0 0
  %2330 = vmatpush1.bf16.msra.mxu0 0
  %2331 = vmatprep.subr.bf16.mxu0 0
  %2332 = vmatpush1.bf16.msra.mxu0 0
  %2333 = vmatprep.subr.bf16.mxu0 0
  %2334 = vmatpush1.bf16.msra.mxu0 0
  %2335 = vmatprep.mubr.bf16.mxu0 0
  %2336 = vmatmul.mubr.bf16.gmra.mrb[0].mxu0 %v2166
  %v2337 = vpop.f32.mrb[0].mxu0
  %v2338 = vadd.f32 0.0, %v2337
  %v2339 = vpop.f32.mrb[0].mxu0
  %v2340 = vpop.f32.mrb[0].mxu0
  %v2341 = vadd.f32 0.0, %v2340
  %v2342 = vpop.f32.mrb[0].mxu0
  %2343 = vmatprep.mubr.bf16.mxu0 0
  %2344 = vmatmul.mubr.bf16.gmra.mrb[0].mxu0 %v2169
  %v2345 = vpop.f32.mrb[0].mxu0
  %v2346 = vadd.f32 0.0, %v2345
  %v2347 = vpop.f32.mrb[0].mxu0
  %v2348 = vpop.f32.mrb[0].mxu0
  %v2349 = vadd.f32 0.0, %v2348
  %v2350 = vpop.f32.mrb[0].mxu0
  %2351 = vdwg.mxu0
  %s2352 = scalar_lea.vmem %s13, 48
  %v2353 = vld [vmem:[%s2352] sm:$0xf]
  %v2354 = vld [vmem:[%s2352 + $0x4] sm:$0xf]
  %v2355 = vld [vmem:[%s2352 + $0x8] sm:$0xf]
  %v2356 = vld [vmem:[%s2352 + $0xc] sm:$0xf]
  %v2361 = vunpack.c.l.b16 %v2353
  %v2362 = vunpack.c.l.b16 %v2354
  %v2363 = vunpack.c.l.b16 %v2355
  %v2364 = vunpack.c.l.b16 %v2356
  %v2365 = vpack.c.b16 %v2362, %v2361
  %v2366 = vpack.c.b16 %v2364, %v2363
  %2369 = vmatprep.subr.bf16.mxu0 0
  %2370 = vmatpush1.bf16.msra.mxu0 %v2365
  %2371 = vmatprep.subr.bf16.mxu0 0
  %2372 = vmatpush1.bf16.msra.mxu0 %v2366
  %2373 = vmatprep.subr.bf16.mxu0 0
  %2374 = vmatpush1.bf16.msra.mxu0 0
  %2375 = vmatprep.subr.bf16.mxu0 0
  %2376 = vmatpush1.bf16.msra.mxu0 0
  %2377 = vmatprep.subr.bf16.mxu0 0
  %2378 = vmatpush1.bf16.msra.mxu0 0
  %2379 = vmatprep.subr.bf16.mxu0 0
  %2380 = vmatpush1.bf16.msra.mxu0 0
  %2381 = vmatprep.subr.bf16.mxu0 0
  %2382 = vmatpush1.bf16.msra.mxu0 0
  %2383 = vmatprep.subr.bf16.mxu0 0
  %2384 = vmatpush1.bf16.msra.mxu0 0
  %2385 = vmatprep.subr.bf16.mxu0 0
  %2386 = vmatpush1.bf16.msra.mxu0 0
  %2387 = vmatprep.subr.bf16.mxu0 0
  %2388 = vmatpush1.bf16.msra.mxu0 0
  %2389 = vmatprep.subr.bf16.mxu0 0
  %2390 = vmatpush1.bf16.msra.mxu0 0
  %2391 = vmatprep.subr.bf16.mxu0 0
  %2392 = vmatpush1.bf16.msra.mxu0 0
  %2393 = vmatprep.subr.bf16.mxu0 0
  %2394 = vmatpush1.bf16.msra.mxu0 0
  %2395 = vmatprep.subr.bf16.mxu0 0
  %2396 = vmatpush1.bf16.msra.mxu0 0
  %2397 = vmatprep.subr.bf16.mxu0 0
  %2398 = vmatpush1.bf16.msra.mxu0 0
  %2399 = vmatprep.subr.bf16.mxu0 0
  %2400 = vmatpush1.bf16.msra.mxu0 0
  %2401 = vmatprep.mubr.bf16.mxu0 0
  %2402 = vmatmul.mubr.bf16.gmra.mrb[0].mxu0 %v2166
  %v2403 = vpop.f32.mrb[0].mxu0
  %v2404 = vadd.f32 0.0, %v2403
  %v2405 = vpop.f32.mrb[0].mxu0
  %v2406 = vpop.f32.mrb[0].mxu0
  %v2407 = vadd.f32 0.0, %v2406
  %v2408 = vpop.f32.mrb[0].mxu0
  %2409 = vmatprep.mubr.bf16.mxu0 0
  %2410 = vmatmul.mubr.bf16.gmra.mrb[0].mxu0 %v2169
  %v2411 = vpop.f32.mrb[0].mxu0
  %v2412 = vadd.f32 0.0, %v2411
  %v2413 = vpop.f32.mrb[0].mxu0
  %v2414 = vpop.f32.mrb[0].mxu0
  %v2415 = vadd.f32 0.0, %v2414
  %v2416 = vpop.f32.mrb[0].mxu0
  %2417 = vdwg.mxu0
  %vm2418 = vcmask 1024
  %2419 = vst.msk [vmem:[%s15] sm:$0x3] %vm2418, %v2272
  %v2421 = vrot.slane %v2338, 6
  %v2423 = vadd.f32 %v2206, %v2421
  %vm2424 = vcmask 3074
  %2425 = vst.msk [vmem:[%s15] sm:$0xc] %vm2424, %v2423
  %v2427 = vrot.slane %v2404, 6
  %v2429 = vadd.f32 %v2272, %v2427
  %2430 = vst.msk [vmem:[%s15 + $0x2] sm:$0xc] %vm2424, %v2429
  %vm2431 = vcmask 5124
  %2432 = vst.msk [vmem:[%s15 + $0x2] sm:$0x30] %vm2431, %v2423
  %2433 = vst.msk [vmem:[%s15 + $0x4] sm:$0x30] %vm2431, %v2429
  %vm2434 = vcmask 7174
  %2435 = vst.msk [vmem:[%s15 + $0x4] sm:$0xc0] %vm2434, %v2423
  %2436 = vst.msk [vmem:[%s15 + $0x6] sm:$0xc0] %vm2434, %v2429
  %v2437 = vadd.f32 %v2209, %v2421
  %2438 = vst.msk [vmem:[%s15 + $0xe] sm:$0x3] %vm2418, %v2437
  %v2439 = vadd.f32 %v2275, %v2427
  %2440 = vst.msk [vmem:[%s15 + $0x10] sm:$0x3] %vm2418, %v2439
  %v2442 = vrot.slane %v2341, 6
  %v2444 = vadd.f32 %v2209, %v2442
  %2445 = vst.msk [vmem:[%s15 + $0x10] sm:$0xc] %vm2424, %v2444
  %v2447 = vrot.slane %v2407, 6
  %v2449 = vadd.f32 %v2275, %v2447
  %2450 = vst.msk [vmem:[%s15 + $0x12] sm:$0xc] %vm2424, %v2449
  %2451 = vst.msk [vmem:[%s15 + $0x12] sm:$0x30] %vm2431, %v2444
  %2452 = vst.msk [vmem:[%s15 + $0x14] sm:$0x30] %vm2431, %v2449
  %2453 = vst.msk [vmem:[%s15 + $0x14] sm:$0xc0] %vm2434, %v2444
  %2454 = vst.msk [vmem:[%s15 + $0x16] sm:$0xc0] %vm2434, %v2449
  %v2455 = vadd.f32 %v2214, %v2442
  %2456 = vst.msk [vmem:[%s15 + $0x1e] sm:$0x3] %vm2418, %v2455
  %v2457 = vadd.f32 %v2280, %v2447
  %2458 = vst.msk [vmem:[%s15 + $0x20] sm:$0x3] %vm2418, %v2457
  %v2460 = vrot.slane %v2346, 6
  %v2462 = vadd.f32 %v2214, %v2460
  %2463 = vst.msk [vmem:[%s15 + $0x20] sm:$0xc] %vm2424, %v2462
  %v2465 = vrot.slane %v2412, 6
  %v2467 = vadd.f32 %v2280, %v2465
  %2468 = vst.msk [vmem:[%s15 + $0x22] sm:$0xc] %vm2424, %v2467
  %2469 = vst.msk [vmem:[%s15 + $0x22] sm:$0x30] %vm2431, %v2462
  %2470 = vst.msk [vmem:[%s15 + $0x24] sm:$0x30] %vm2431, %v2467
  %2471 = vst.msk [vmem:[%s15 + $0x24] sm:$0xc0] %vm2434, %v2462
  %2472 = vst.msk [vmem:[%s15 + $0x26] sm:$0xc0] %vm2434, %v2467
  %v2473 = vadd.f32 %v2217, %v2460
  %2474 = vst.msk [vmem:[%s15 + $0x2e] sm:$0x3] %vm2418, %v2473
  %v2475 = vadd.f32 %v2283, %v2465
  %2476 = vst.msk [vmem:[%s15 + $0x30] sm:$0x3] %vm2418, %v2475
  %v2478 = vrot.slane %v2349, 6
  %v2480 = vadd.f32 %v2217, %v2478
  %2481 = vst.msk [vmem:[%s15 + $0x30] sm:$0xc] %vm2424, %v2480
  %v2483 = vrot.slane %v2415, 6
  %v2485 = vadd.f32 %v2283, %v2483
  %2486 = vst.msk [vmem:[%s15 + $0x32] sm:$0xc] %vm2424, %v2485
  %2487 = vst.msk [vmem:[%s15 + $0x34] sm:$0xc] %vm2424, %v2349
  %v2488 = vld [vmem:[%s15] sm:$0xff]
  %v2489 = vld [vmem:[%s15 + $0x8] sm:$0xff]
  %v2490 = vld [vmem:[%s15 + $0x10] sm:$0xff]
  %v2491 = vld [vmem:[%s15 + $0x18] sm:$0xff]
  %v2492 = vld [vmem:[%s15 + $0x20] sm:$0xff]
  %v2493 = vld [vmem:[%s15 + $0x28] sm:$0xff]
  %v2494 = vld [vmem:[%s15 + $0x30] sm:$0xff]
  %v2495 = vld [vmem:[#allocation6] sm:$0x1]
  %v2497 = vlaneseq
  %v2498 = vshrl.u32 %v2497, 7
  %v2499 = vsub.s32 0, %v2498
  %v2500 = vrot.slane %v2495, %v2499
  %v2502 = vadd.f32 %v2488, %v2500
  %v2503 = vadd.f32 %v2489, %v2500
  %v2504 = vadd.f32 %v2490, %v2500
  %v2505 = vadd.f32 %v2491, %v2500
  %v2506 = vadd.f32 %v2492, %v2500
  %v2507 = vadd.f32 %v2493, %v2500
  %v2508 = vadd.f32 %v2494, %v2500
  %v2509 = vtanh.pop %v2502
  %v2510 = vtanh.pop %v2503
  %v2511 = vtanh.pop %v2504
  %v2512 = vtanh.pop %v2505
  %v2513 = vtanh.pop %v2506
  %v2514 = vtanh.pop %v2507
  %v2515 = vtanh.pop %v2508
  %vm2516 = vcmask 7168
  %2517 = vst.msk [vmem:[%s15] sm:$0xff] %vm2516, %v2509
  %2518 = vst.msk [vmem:[%s15 + $0x8] sm:$0xff] %vm2516, %v2510
  %2519 = vst.msk [vmem:[%s15 + $0x10] sm:$0xff] %vm2516, %v2511
  %2520 = vst.msk [vmem:[%s15 + $0x18] sm:$0xff] %vm2516, %v2512
  %2521 = vst.msk [vmem:[%s15 + $0x20] sm:$0xff] %vm2516, %v2513
  %2522 = vst.msk [vmem:[%s15 + $0x28] sm:$0xff] %vm2516, %v2514
  %2523 = vst.msk [vmem:[%s15 + $0x30] sm:$0xff] %vm2516, %v2515
  // Predicated region
  $region62: #{tpu_custom_call.1} parent=0 // pred_check
    _
  $region63: #{tpu_custom_call.1} parent=0 // pred_check_branch
    %2525 = sbr.rel (0) target = $region65
  $region64: #{tpu_custom_call.1} parent=0 // pred_region
    _
  $region65: #{tpu_custom_call.1} parent=0 // pred_fallthru
    _
  // Predicated region
  $region66: #{tpu_custom_call.1} parent=0 // pred_check
    _
  $region67: #{tpu_custom_call.1} parent=0 // pred_check_branch
    %2527 = sbr.rel (0) target = $region69
  $region68: #{tpu_custom_call.1} parent=0 // pred_region
    _
  $region69: #{tpu_custom_call.1} parent=0 // pred_fallthru
    _

</llo_original>
